<compile_context>
chip_gen: v7x
topology: tpu7x:2x2x1
jax: 0.10.0
libtpu: 0.0.40
codegen_flags: <defaults>
</compile_context>

<pallas_src>
import functools

import jax
import jax.numpy as jnp
from jax import lax
from jax.experimental import pallas as pl
from jax.experimental.pallas import tpu as pltpu

LANE = 128


def _round_up(x, m):
    return (x + m - 1) // m * m


def _res131_kernel(x_ref, *refs, H, W, dilation, stride, band, has_proj):
    if has_proj:
        (w0_ref, s0_ref, b0_ref, w1_ref, s1_ref, b1_ref,
         w2_ref, s2_ref, b2_ref, wp_ref, sp_ref, bp_ref, out_ref) = refs
    else:
        (w0_ref, s0_ref, b0_ref, w1_ref, s1_ref, b1_ref,
         w2_ref, s2_ref, b2_ref, out_ref) = refs
        wp_ref = sp_ref = bp_ref = None

    d, s = dilation, stride
    Wo = (W - 1) // s + 1
    BH = (band - 1) * s + 2 * d + 1          # haloed y0 rows needed by this band
    row_span = (band - 1) * s + 1
    col_span = (Wo - 1) * s + 1
    m = band * Wo

    Cin_p = x_ref.shape[-1]
    Cmid_p = w0_ref.shape[1]
    Cout_p = w2_ref.shape[1]
    W_pad = x_ref.shape[1]

    # Row offset (in spatially padded coordinates) of this band's halo window.
    rs = pl.program_id(1) * (band * s)

    # ---- load only the haloed row band of x (x image itself stays resident) ----
    xb = x_ref[pl.ds(rs, BH), :, :]                         # (BH, W_pad, Cin_p) bf16
    x2d = xb.reshape(BH * W_pad, Cin_p)

    # ---- conv0: 1x1 conv + BN + ReLU (lane-dense matmul over channels) ----
    y0 = jnp.dot(x2d, w0_ref[...], preferred_element_type=jnp.float32)
    y0 = jnp.maximum(y0 * s0_ref[...] + b0_ref[...], 0.0)
    y0 = y0.reshape(BH, W_pad, Cmid_p)

    # conv1's zero padding lives in y0-space.  x was zero-padded spatially in the
    # wrapper, but conv0's folded-BN bias makes those border positions relu(b0)
    # instead of 0, so mask them back to zero here (one fused select).
    row_ids = lax.broadcasted_iota(jnp.int32, (BH, W_pad, Cmid_p), 0) + rs
    col_ids = lax.broadcasted_iota(jnp.int32, (BH, W_pad, Cmid_p), 1)
    interior = ((row_ids >= d) & (row_ids < H + d) &
                (col_ids >= d) & (col_ids < W + d))
    # bf16 slab ONCE, before tap building (taps copy half the bytes of f32).
    y0b = jnp.where(interior, y0, 0.0).astype(jnp.bfloat16)

    # ---- conv1: 3x3 (stride, dilation) via im2col grouped by kernel row ----
    # Each tap is a direct (strided) slice of the padded bf16 band; each of the
    # 3 matmuls keeps K = 3*Cmid_p while the patch stays 3x smaller than 9-wide.
    def tap(ky, kx):
        t = y0b[ky * d: ky * d + row_span: s, kx * d: kx * d + col_span: s, :]
        return t.reshape(m, Cmid_p)

    y1 = None
    for ky in range(3):
        patch = jnp.concatenate([tap(ky, 0), tap(ky, 1), tap(ky, 2)], axis=-1)
        w_ky = w1_ref[ky * 3 * Cmid_p:(ky + 1) * 3 * Cmid_p, :]
        part = jnp.dot(patch, w_ky, preferred_element_type=jnp.float32)
        y1 = part if y1 is None else y1 + part
    y1 = jnp.maximum(y1 * s1_ref[...] + b1_ref[...], 0.0)   # (m, Cmid_p) f32

    # ---- conv2: 1x1 conv + BN (no activation) ----
    y2 = jnp.dot(y1.astype(jnp.bfloat16), w2_ref[...],
                 preferred_element_type=jnp.float32)
    y2 = y2 * s2_ref[...] + b2_ref[...]                      # (m, Cout_p)

    # ---- shortcut (strided slice of the same x band; interior offset d) ----
    xs = xb[d: d + row_span: s, d: d + col_span: s, :].reshape(m, Cin_p)
    if has_proj:
        sc = jnp.dot(xs, wp_ref[...], preferred_element_type=jnp.float32)
        sc = sc * sp_ref[...] + bp_ref[...]
    else:
        sc = xs.astype(jnp.float32)

    out = jnp.maximum(sc + y2, 0.0)
    out_ref[...] = out.reshape(band, Wo, Cout_p).astype(out_ref.dtype)


def res131_forward(x_nchw, w0, s0, b0, w1, s1, b1, w2, s2, b2,
                   wp=None, sp=None, bp=None,
                   *, dilation=1, stride=1, has_proj=True,
                   band_rows=8, out_dtype=jnp.float32):
    N, Cin, H, W = x_nchw.shape
    Cmid = w0.shape[1]
    Cout = w2.shape[1]
    if not has_proj:
        assert Cin == Cout, "identity shortcut requires in_nc == out_nc"
    d, s = dilation, stride
    Ho = (H - 1) // s + 1
    Wo = (W - 1) // s + 1

    band = max(1, min(band_rows, Ho))          # output rows per grid step
    n_bands = -(-Ho // band)
    Ho_pad = n_bands * band                    # ragged last band -> padded rows

    Cin_p = _round_up(Cin, LANE)
    Cmid_p = _round_up(Cmid, LANE)
    Cout_p = _round_up(Cout, LANE)

    # Spatial zero padding so every tap / shortcut read is a plain slice of the
    # band window (the kernel re-zeros the conv0-bias contamination on the pad).
    H_rows = max(H + 2 * d, (Ho_pad - 1) * s + 2 * d + 1)
    W_pad = W + 2 * d
    BH = (band - 1) * s + 2 * d + 1

    def pad_w(w, r, c):
        return jnp.pad(w, ((0, r - w.shape[0]), (0, c - w.shape[1]))).astype(jnp.bfloat16)

    def vec(v, c):
        v = v.reshape(1, -1)
        return jnp.pad(v, ((0, 0), (0, c - v.shape[-1]))).astype(jnp.float32)

    # NHWC, spatially padded by d, channel-padded to a lane multiple, bf16.
    x = jnp.transpose(x_nchw, (0, 2, 3, 1))
    x = jnp.pad(x, ((0, 0), (d, H_rows - H - d), (d, W_pad - W - d),
                    (0, Cin_p - Cin))).astype(jnp.bfloat16)

    w0p = pad_w(w0, Cin_p, Cmid_p)
    # HWIO 3x3 weight -> im2col layout (9*Cmid_p, Cmid_p); row = (ky*3+kx)*Cmid_p + ci.
    w1p = jnp.pad(w1, ((0, 0), (0, 0), (0, Cmid_p - Cmid), (0, Cmid_p - Cmid)))
    w1p = w1p.reshape(9 * Cmid_p, Cmid_p).astype(jnp.bfloat16)
    w2p = pad_w(w2, Cmid_p, Cout_p)

    ins = [x, w0p, vec(s0, Cmid_p), vec(b0, Cmid_p),
           w1p, vec(s1, Cmid_p), vec(b1, Cmid_p),
           w2p, vec(s2, Cout_p), vec(b2, Cout_p)]

    def const_spec(shape):
        return pl.BlockSpec(shape, lambda i, b: (0,) * len(shape))

    in_specs = [
        # whole (padded) image per batch element; invariant along the band axis
        # so it is only DMA'd when the batch index changes.
        pl.BlockSpec((None, H_rows, W_pad, Cin_p), lambda i, b: (i, 0, 0, 0)),
        const_spec((Cin_p, Cmid_p)), const_spec((1, Cmid_p)), const_spec((1, Cmid_p)),
        const_spec((9 * Cmid_p, Cmid_p)), const_spec((1, Cmid_p)), const_spec((1, Cmid_p)),
        const_spec((Cmid_p, Cout_p)), const_spec((1, Cout_p)), const_spec((1, Cout_p)),
    ]

    if has_proj:
        ins += [pad_w(wp, Cin_p, Cout_p), vec(sp, Cout_p), vec(bp, Cout_p)]
        in_specs += [const_spec((Cin_p, Cout_p)),
                     const_spec((1, Cout_p)), const_spec((1, Cout_p))]

    kernel = functools.partial(_res131_kernel, H=H, W=W, dilation=d, stride=s,
                               band=band, has_proj=has_proj)

    out_bytes = jnp.dtype(out_dtype).itemsize

    # Per-step VMEM footprint (rough) -> explicit scoped limit with headroom.
    est = 2 * H_rows * W_pad * Cin_p * 2                        # x image, 2 buffers
    est += 2 * band * Wo * Cout_p * out_bytes                   # output band, 2 buffers
    wbytes = 2 * (Cin_p * Cmid_p + 9 * Cmid_p * Cmid_p + Cmid_p * Cout_p
                  + (Cin_p * Cout_p if has_proj else 0))
    vbytes = 4 * (4 * Cmid_p + (4 if has_proj else 2) * Cout_p)
    est += 2 * (wbytes + vbytes)                                # weight/scale blocks
    est += BH * W_pad * Cmid_p * 6                              # y0 (f32 + bf16 slab)
    est += band * Wo * (3 * Cmid_p * 2 + (Cmid_p + 2 * Cout_p) * 4)  # patch + f32 temps
    vmem_limit = int(min(max(2 * est, 32 * 2 ** 20), 64 * 2 ** 20))

    flops = N * (2 * H * W * Cin_p * Cmid_p
                 + 2 * Ho * Wo * (9 * Cmid_p * Cmid_p + Cmid_p * Cout_p)
                 + (2 * Ho * Wo * Cin_p * Cout_p if has_proj else 0))
    bytes_accessed = sum(int(a.size) * a.dtype.itemsize for a in ins) \
        + N * Ho_pad * Wo * Cout_p * out_bytes

    out = pl.pallas_call(
        kernel,
        out_shape=jax.ShapeDtypeStruct((N, Ho_pad, Wo, Cout_p), out_dtype),
        grid=(N, n_bands),
        in_specs=in_specs,
        out_specs=pl.BlockSpec((None, band, Wo, Cout_p), lambda i, b: (i, b, 0, 0)),
        compiler_params=pltpu.CompilerParams(
            dimension_semantics=("parallel", "parallel"),
            vmem_limit_bytes=vmem_limit),
        cost_estimate=pl.CostEstimate(flops=flops, transcendentals=0,
                                      bytes_accessed=bytes_accessed),
    )(*ins)

    out = out[:, :Ho, :, :Cout]                 # drop band / channel padding
    return jnp.transpose(out, (0, 3, 1, 2))     # back to NCHW


def res131_reference(x_nchw, w0, s0, b0, w1, s1, b1, w2, s2, b2, wp, sp, bp,
                     *, dilation=1, stride=1, has_proj=True):
    x = jnp.transpose(x_nchw, (0, 2, 3, 1))

    def conv1x1(v, w, s=1):
        return lax.conv_general_dilated(
            v, w.reshape(1, 1, *w.shape), (s, s), [(0, 0), (0, 0)],
            dimension_numbers=('NHWC', 'HWIO', 'NHWC'))

    y = jnp.maximum(conv1x1(x, w0) * s0 + b0, 0.0)
    pad = dilation
    y = lax.conv_general_dilated(
        y, w1, (stride, stride), [(pad, pad), (pad, pad)],
        rhs_dilation=(dilation, dilation),
        dimension_numbers=('NHWC', 'HWIO', 'NHWC'))
    y = jnp.maximum(y * s1 + b1, 0.0)
    y = conv1x1(y, w2) * s2 + b2
    sc = (conv1x1(x, wp, stride) * sp + bp) if has_proj else x
    out = jnp.maximum(sc + y, 0.0)
    return jnp.transpose(out, (0, 3, 1, 2))


def _fold_bn(kg, kb, km, kv, c, eps=1e-5):
    gamma = 1.0 + 0.1 * jax.random.normal(kg, (c,), jnp.float32)
    beta = 0.1 * jax.random.normal(kb, (c,), jnp.float32)
    mean = 0.1 * jax.random.normal(km, (c,), jnp.float32)
    var = jnp.abs(jax.random.normal(kv, (c,), jnp.float32)) + 0.5
    scale = gamma / jnp.sqrt(var + eps)
    return scale, beta - mean * scale


if __name__ == "__main__":
    key = jax.random.PRNGKey(0)
    ks = jax.random.split(key, 72)

    def run_case(k_off, N, H, W, in_nc, mid_nc, out_nc, dilation, stride,
                 has_proj, band_rows):
        k = ks[k_off:]
        x = jax.random.normal(k[0], (N, in_nc, H, W), jnp.float32)
        w0 = 0.3 * jax.random.normal(k[1], (in_nc, mid_nc), jnp.float32)
        w1 = 0.1 * jax.random.normal(k[2], (3, 3, mid_nc, mid_nc), jnp.float32)  # HWIO
        w2 = 0.3 * jax.random.normal(k[3], (mid_nc, out_nc), jnp.float32)
        s0, b0 = _fold_bn(k[4], k[5], k[6], k[7], mid_nc)
        s1, b1 = _fold_bn(k[8], k[9], k[10], k[11], mid_nc)
        s2, b2 = _fold_bn(k[12], k[13], k[14], k[15], out_nc)
        if has_proj:
            wp = 0.3 * jax.random.normal(k[16], (in_nc, out_nc), jnp.float32)
            sp, bp = _fold_bn(k[17], k[18], k[19], k[20], out_nc)
        else:
            wp = sp = bp = None

        out = res131_forward(x, w0, s0, b0, w1, s1, b1, w2, s2, b2, wp, sp, bp,
                             dilation=dilation, stride=stride, has_proj=has_proj,
                             band_rows=band_rows)
        out = jax.block_until_ready(out)
        ref = res131_reference(x, w0, s0, b0, w1, s1, b1, w2, s2, b2, wp, sp, bp,
                               dilation=dilation, stride=stride, has_proj=has_proj)
        assert out.shape == ref.shape, (out.shape, ref.shape)
        err = jnp.max(jnp.abs(out - ref))
        # bf16 MXU matmuls (f32 accumulate) -> loosened tolerance vs. pure-f32 ref.
        assert jnp.allclose(out, ref, atol=5e-2, rtol=5e-2), f"max abs diff = {err}"

    # projection shortcut (in_nc != out_nc), dilation=1: two row bands of 8.
    run_case(0, N=2, H=16, W=16, in_nc=4, mid_nc=8, out_nc=8,
             dilation=1, stride=1, has_proj=True, band_rows=8)
    # identity shortcut (in_nc == out_nc), dilation=2: band=6 -> ragged last band
    # (Ho_pad > Ho) exercising the halo/mask logic; proj weights not passed/DMA'd.
    run_case(24, N=2, H=16, W=16, in_nc=8, mid_nc=8, out_nc=8,
             dilation=2, stride=1, has_proj=False, band_rows=6)

    print("KERNEL_OK")
</pallas_src>

<mosaic_0001>
module attributes {stable_mosaic.version = 11 : i64} {
  func.func @_res131_kernel(%arg0: i32, %arg1: i32, %arg2: memref<1x18x18x128xbf16, #tpu.memory_space<vmem>>, %arg3: memref<128x128xbf16, #tpu.memory_space<vmem>>, %arg4: memref<1x128xf32, #tpu.memory_space<vmem>>, %arg5: memref<1x128xf32, #tpu.memory_space<vmem>>, %arg6: memref<1152x128xbf16, #tpu.memory_space<vmem>>, %arg7: memref<1x128xf32, #tpu.memory_space<vmem>>, %arg8: memref<1x128xf32, #tpu.memory_space<vmem>>, %arg9: memref<128x128xbf16, #tpu.memory_space<vmem>>, %arg10: memref<1x128xf32, #tpu.memory_space<vmem>>, %arg11: memref<1x128xf32, #tpu.memory_space<vmem>>, %arg12: memref<128x128xbf16, #tpu.memory_space<vmem>>, %arg13: memref<1x128xf32, #tpu.memory_space<vmem>>, %arg14: memref<1x128xf32, #tpu.memory_space<vmem>>, %arg15: memref<1x8x16x128xf32, #tpu.memory_space<vmem>>) attributes {dimension_semantics = [#tpu.dimension_semantics<parallel>, #tpu.dimension_semantics<parallel>], iteration_bounds = array<i64: 2, 2>, scalar_prefetch = 0 : i64, scratch_operands = 0 : i64, tpu.core_type = #tpu.core_type<tc>, window_params = [{transform_indices = @transform_0, window_bounds = array<i64: 1, 18, 18, 128>}, {pipeline_mode = #tpu.pipeline_mode<synchronous>, transform_indices = @transform_1, window_bounds = array<i64: 128, 128>}, {pipeline_mode = #tpu.pipeline_mode<synchronous>, transform_indices = @transform_2, window_bounds = array<i64: 1, 128>}, {pipeline_mode = #tpu.pipeline_mode<synchronous>, transform_indices = @transform_3, window_bounds = array<i64: 1, 128>}, {pipeline_mode = #tpu.pipeline_mode<synchronous>, transform_indices = @transform_4, window_bounds = array<i64: 1152, 128>}, {pipeline_mode = #tpu.pipeline_mode<synchronous>, transform_indices = @transform_5, window_bounds = array<i64: 1, 128>}, {pipeline_mode = #tpu.pipeline_mode<synchronous>, transform_indices = @transform_6, window_bounds = array<i64: 1, 128>}, {pipeline_mode = #tpu.pipeline_mode<synchronous>, transform_indices = @transform_7, window_bounds = array<i64: 128, 128>}, {pipeline_mode = #tpu.pipeline_mode<synchronous>, transform_indices = @transform_8, window_bounds = array<i64: 1, 128>}, {pipeline_mode = #tpu.pipeline_mode<synchronous>, transform_indices = @transform_9, window_bounds = array<i64: 1, 128>}, {pipeline_mode = #tpu.pipeline_mode<synchronous>, transform_indices = @transform_10, window_bounds = array<i64: 128, 128>}, {pipeline_mode = #tpu.pipeline_mode<synchronous>, transform_indices = @transform_11, window_bounds = array<i64: 1, 128>}, {pipeline_mode = #tpu.pipeline_mode<synchronous>, transform_indices = @transform_12, window_bounds = array<i64: 1, 128>}, {transform_indices = @transform_13, window_bounds = array<i64: 1, 8, 16, 128>}]} {
    %c8_i32 = arith.constant 8 : i32
    %0 = arith.muli %arg1, %c8_i32 : i32
    %c0 = arith.constant 0 : index
    %1 = arith.index_cast %0 : i32 to index
    %c0_0 = arith.constant 0 : index
    %c0_1 = arith.constant 0 : index
    %2 = vector.load %arg2[%c0, %1, %c0_0, %c0_1] : memref<1x18x18x128xbf16, #tpu.memory_space<vmem>>, vector<1x10x18x128xbf16>
    %3 = vector.shape_cast %2 : vector<1x10x18x128xbf16> to vector<10x18x128xbf16>
    %4 = vector.shape_cast %3 : vector<10x18x128xbf16> to vector<180x128xbf16>
    %c0_2 = arith.constant 0 : index
    %c0_3 = arith.constant 0 : index
    %5 = vector.load %arg3[%c0_2, %c0_3] : memref<128x128xbf16, #tpu.memory_space<vmem>>, vector<128x128xbf16>
    %cst = arith.constant dense<0.000000e+00> : vector<180x128xf32>
    %6 = tpu.matmul %4, %5, %cst {dimension_numbers = #tpu.dot_dimension_numbers<[1], [0], [0], [1], [0, 0, 1, 1], [], []>} : vector<180x128xbf16>, vector<128x128xbf16>, vector<180x128xf32> -> vector<180x128xf32>
    %c0_4 = arith.constant 0 : index
    %c0_5 = arith.constant 0 : index
    %7 = vector.load %arg4[%c0_4, %c0_5] : memref<1x128xf32, #tpu.memory_space<vmem>>, vector<1x128xf32>
    %8 = vector.broadcast %7 : vector<1x128xf32> to vector<180x128xf32>
    %9 = arith.mulf %6, %8 : vector<180x128xf32>
    %c0_6 = arith.constant 0 : index
    %c0_7 = arith.constant 0 : index
    %10 = vector.load %arg5[%c0_6, %c0_7] : memref<1x128xf32, #tpu.memory_space<vmem>>, vector<1x128xf32>
    %11 = vector.broadcast %10 : vector<1x128xf32> to vector<180x128xf32>
    %12 = arith.addf %9, %11 : vector<180x128xf32>
    %cst_8 = arith.constant 0.000000e+00 : f32
    %13 = vector.broadcast %cst_8 : f32 to vector<180x128xf32>
    %14 = arith.maximumf %12, %13 : vector<180x128xf32>
    %15 = vector.shape_cast %14 : vector<180x128xf32> to vector<10x18x128xf32>
    %16 = tpu.iota {dimensions = array<i32: 0>} : vector<10x18x128xi32>
    %17 = vector.broadcast %0 : i32 to vector<10x18x128xi32>
    %18 = arith.addi %16, %17 : vector<10x18x128xi32>
    %19 = tpu.iota {dimensions = array<i32: 1>} : vector<10x18x128xi32>
    %c1_i32 = arith.constant 1 : i32
    %20 = vector.broadcast %c1_i32 : i32 to vector<10x18x128xi32>
    %21 = arith.cmpi sge, %18, %20 : vector<10x18x128xi32>
    %c17_i32 = arith.constant 17 : i32
    %22 = vector.broadcast %c17_i32 : i32 to vector<10x18x128xi32>
    %23 = arith.cmpi slt, %18, %22 : vector<10x18x128xi32>
    %24 = arith.andi %21, %23 : vector<10x18x128xi1>
    %c1_i32_9 = arith.constant 1 : i32
    %25 = vector.broadcast %c1_i32_9 : i32 to vector<10x18x128xi32>
    %26 = arith.cmpi sge, %19, %25 : vector<10x18x128xi32>
    %27 = arith.andi %24, %26 : vector<10x18x128xi1>
    %c17_i32_10 = arith.constant 17 : i32
    %28 = vector.broadcast %c17_i32_10 : i32 to vector<10x18x128xi32>
    %29 = arith.cmpi slt, %19, %28 : vector<10x18x128xi32>
    %30 = arith.andi %27, %29 : vector<10x18x128xi1>
    %cst_11 = arith.constant 0.000000e+00 : f32
    %31 = vector.broadcast %cst_11 : f32 to vector<10x18x128xf32>
    %32 = arith.select %30, %15, %31 : vector<10x18x128xi1>, vector<10x18x128xf32>
    %33 = arith.truncf %32 : vector<10x18x128xf32> to vector<10x18x128xbf16>
    %34 = vector.extract_strided_slice %33 {offsets = [0, 0, 0], sizes = [8, 16, 128], strides = [1, 1, 1]} : vector<10x18x128xbf16> to vector<8x16x128xbf16>
    %35 = vector.shape_cast %34 : vector<8x16x128xbf16> to vector<128x128xbf16>
    %36 = vector.extract_strided_slice %33 {offsets = [0, 1, 0], sizes = [8, 16, 128], strides = [1, 1, 1]} : vector<10x18x128xbf16> to vector<8x16x128xbf16>
    %37 = vector.shape_cast %36 : vector<8x16x128xbf16> to vector<128x128xbf16>
    %38 = vector.extract_strided_slice %33 {offsets = [0, 2, 0], sizes = [8, 16, 128], strides = [1, 1, 1]} : vector<10x18x128xbf16> to vector<8x16x128xbf16>
    %39 = vector.shape_cast %38 : vector<8x16x128xbf16> to vector<128x128xbf16>
    %40 = tpu.concatenate %35, %37, %39 in 1 : vector<128x128xbf16>, vector<128x128xbf16>, vector<128x128xbf16> -> vector<128x384xbf16>
    %c0_12 = arith.constant 0 : index
    %c0_13 = arith.constant 0 : index
    %41 = vector.load %arg6[%c0_12, %c0_13] : memref<1152x128xbf16, #tpu.memory_space<vmem>>, vector<384x128xbf16>
    %cst_14 = arith.constant dense<0.000000e+00> : vector<128x128xf32>
    %42 = tpu.matmul %40, %41, %cst_14 {dimension_numbers = #tpu.dot_dimension_numbers<[1], [0], [0], [1], [0, 0, 1, 1], [], []>} : vector<128x384xbf16>, vector<384x128xbf16>, vector<128x128xf32> -> vector<128x128xf32>
    %43 = vector.extract_strided_slice %33 {offsets = [1, 0, 0], sizes = [8, 16, 128], strides = [1, 1, 1]} : vector<10x18x128xbf16> to vector<8x16x128xbf16>
    %44 = vector.shape_cast %43 : vector<8x16x128xbf16> to vector<128x128xbf16>
    %45 = vector.extract_strided_slice %33 {offsets = [1, 1, 0], sizes = [8, 16, 128], strides = [1, 1, 1]} : vector<10x18x128xbf16> to vector<8x16x128xbf16>
    %46 = vector.shape_cast %45 : vector<8x16x128xbf16> to vector<128x128xbf16>
    %47 = vector.extract_strided_slice %33 {offsets = [1, 2, 0], sizes = [8, 16, 128], strides = [1, 1, 1]} : vector<10x18x128xbf16> to vector<8x16x128xbf16>
    %48 = vector.shape_cast %47 : vector<8x16x128xbf16> to vector<128x128xbf16>
    %49 = tpu.concatenate %44, %46, %48 in 1 : vector<128x128xbf16>, vector<128x128xbf16>, vector<128x128xbf16> -> vector<128x384xbf16>
    %c384 = arith.constant 384 : index
    %c0_15 = arith.constant 0 : index
    %50 = vector.load %arg6[%c384, %c0_15] : memref<1152x128xbf16, #tpu.memory_space<vmem>>, vector<384x128xbf16>
    %cst_16 = arith.constant dense<0.000000e+00> : vector<128x128xf32>
    %51 = tpu.matmul %49, %50, %cst_16 {dimension_numbers = #tpu.dot_dimension_numbers<[1], [0], [0], [1], [0, 0, 1, 1], [], []>} : vector<128x384xbf16>, vector<384x128xbf16>, vector<128x128xf32> -> vector<128x128xf32>
    %52 = arith.addf %42, %51 : vector<128x128xf32>
    %53 = vector.extract_strided_slice %33 {offsets = [2, 0, 0], sizes = [8, 16, 128], strides = [1, 1, 1]} : vector<10x18x128xbf16> to vector<8x16x128xbf16>
    %54 = vector.shape_cast %53 : vector<8x16x128xbf16> to vector<128x128xbf16>
    %55 = vector.extract_strided_slice %33 {offsets = [2, 1, 0], sizes = [8, 16, 128], strides = [1, 1, 1]} : vector<10x18x128xbf16> to vector<8x16x128xbf16>
    %56 = vector.shape_cast %55 : vector<8x16x128xbf16> to vector<128x128xbf16>
    %57 = vector.extract_strided_slice %33 {offsets = [2, 2, 0], sizes = [8, 16, 128], strides = [1, 1, 1]} : vector<10x18x128xbf16> to vector<8x16x128xbf16>
    %58 = vector.shape_cast %57 : vector<8x16x128xbf16> to vector<128x128xbf16>
    %59 = tpu.concatenate %54, %56, %58 in 1 : vector<128x128xbf16>, vector<128x128xbf16>, vector<128x128xbf16> -> vector<128x384xbf16>
    %c768 = arith.constant 768 : index
    %c0_17 = arith.constant 0 : index
    %60 = vector.load %arg6[%c768, %c0_17] : memref<1152x128xbf16, #tpu.memory_space<vmem>>, vector<384x128xbf16>
    %cst_18 = arith.constant dense<0.000000e+00> : vector<128x128xf32>
    %61 = tpu.matmul %59, %60, %cst_18 {dimension_numbers = #tpu.dot_dimension_numbers<[1], [0], [0], [1], [0, 0, 1, 1], [], []>} : vector<128x384xbf16>, vector<384x128xbf16>, vector<128x128xf32> -> vector<128x128xf32>
    %62 = arith.addf %52, %61 : vector<128x128xf32>
    %c0_19 = arith.constant 0 : index
    %c0_20 = arith.constant 0 : index
    %63 = vector.load %arg7[%c0_19, %c0_20] : memref<1x128xf32, #tpu.memory_space<vmem>>, vector<1x128xf32>
    %64 = vector.broadcast %63 : vector<1x128xf32> to vector<128x128xf32>
    %65 = arith.mulf %62, %64 : vector<128x128xf32>
    %c0_21 = arith.constant 0 : index
    %c0_22 = arith.constant 0 : index
    %66 = vector.load %arg8[%c0_21, %c0_22] : memref<1x128xf32, #tpu.memory_space<vmem>>, vector<1x128xf32>
    %67 = vector.broadcast %66 : vector<1x128xf32> to vector<128x128xf32>
    %68 = arith.addf %65, %67 : vector<128x128xf32>
    %cst_23 = arith.constant 0.000000e+00 : f32
    %69 = vector.broadcast %cst_23 : f32 to vector<128x128xf32>
    %70 = arith.maximumf %68, %69 : vector<128x128xf32>
    %71 = arith.truncf %70 : vector<128x128xf32> to vector<128x128xbf16>
    %c0_24 = arith.constant 0 : index
    %c0_25 = arith.constant 0 : index
    %72 = vector.load %arg9[%c0_24, %c0_25] : memref<128x128xbf16, #tpu.memory_space<vmem>>, vector<128x128xbf16>
    %cst_26 = arith.constant dense<0.000000e+00> : vector<128x128xf32>
    %73 = tpu.matmul %71, %72, %cst_26 {dimension_numbers = #tpu.dot_dimension_numbers<[1], [0], [0], [1], [0, 0, 1, 1], [], []>} : vector<128x128xbf16>, vector<128x128xbf16>, vector<128x128xf32> -> vector<128x128xf32>
    %c0_27 = arith.constant 0 : index
    %c0_28 = arith.constant 0 : index
    %74 = vector.load %arg10[%c0_27, %c0_28] : memref<1x128xf32, #tpu.memory_space<vmem>>, vector<1x128xf32>
    %75 = vector.broadcast %74 : vector<1x128xf32> to vector<128x128xf32>
    %76 = arith.mulf %73, %75 : vector<128x128xf32>
    %c0_29 = arith.constant 0 : index
    %c0_30 = arith.constant 0 : index
    %77 = vector.load %arg11[%c0_29, %c0_30] : memref<1x128xf32, #tpu.memory_space<vmem>>, vector<1x128xf32>
    %78 = vector.broadcast %77 : vector<1x128xf32> to vector<128x128xf32>
    %79 = arith.addf %76, %78 : vector<128x128xf32>
    %80 = vector.extract_strided_slice %3 {offsets = [1, 1, 0], sizes = [8, 16, 128], strides = [1, 1, 1]} : vector<10x18x128xbf16> to vector<8x16x128xbf16>
    %81 = vector.shape_cast %80 : vector<8x16x128xbf16> to vector<128x128xbf16>
    %c0_31 = arith.constant 0 : index
    %c0_32 = arith.constant 0 : index
    %82 = vector.load %arg12[%c0_31, %c0_32] : memref<128x128xbf16, #tpu.memory_space<vmem>>, vector<128x128xbf16>
    %cst_33 = arith.constant dense<0.000000e+00> : vector<128x128xf32>
    %83 = tpu.matmul %81, %82, %cst_33 {dimension_numbers = #tpu.dot_dimension_numbers<[1], [0], [0], [1], [0, 0, 1, 1], [], []>} : vector<128x128xbf16>, vector<128x128xbf16>, vector<128x128xf32> -> vector<128x128xf32>
    %c0_34 = arith.constant 0 : index
    %c0_35 = arith.constant 0 : index
    %84 = vector.load %arg13[%c0_34, %c0_35] : memref<1x128xf32, #tpu.memory_space<vmem>>, vector<1x128xf32>
    %85 = vector.broadcast %84 : vector<1x128xf32> to vector<128x128xf32>
    %86 = arith.mulf %83, %85 : vector<128x128xf32>
    %c0_36 = arith.constant 0 : index
    %c0_37 = arith.constant 0 : index
    %87 = vector.load %arg14[%c0_36, %c0_37] : memref<1x128xf32, #tpu.memory_space<vmem>>, vector<1x128xf32>
    %88 = vector.broadcast %87 : vector<1x128xf32> to vector<128x128xf32>
    %89 = arith.addf %86, %88 : vector<128x128xf32>
    %90 = arith.addf %89, %79 : vector<128x128xf32>
    %cst_38 = arith.constant 0.000000e+00 : f32
    %91 = vector.broadcast %cst_38 : f32 to vector<128x128xf32>
    %92 = arith.maximumf %90, %91 : vector<128x128xf32>
    %93 = vector.shape_cast %92 : vector<128x128xf32> to vector<8x16x128xf32>
    %c0_39 = arith.constant 0 : index
    %c0_40 = arith.constant 0 : index
    %c0_41 = arith.constant 0 : index
    %c0_42 = arith.constant 0 : index
    %94 = vector.load %arg15[%c0_39, %c0_40, %c0_41, %c0_42] : memref<1x8x16x128xf32, #tpu.memory_space<vmem>>, vector<1x8x16x128xf32>
    %95 = vector.shape_cast %94 : vector<1x8x16x128xf32> to vector<8x16x128xf32>
    %96 = vector.shape_cast %93 : vector<8x16x128xf32> to vector<1x8x16x128xf32>
    tpu.vector_store %arg15[%c0_39, %c0_40, %c0_41, %c0_42], %96 {strides = array<i32>} : memref<1x8x16x128xf32, #tpu.memory_space<vmem>>, vector<1x8x16x128xf32>,
    return
  }
  func.func @transform_0(%arg0: i32, %arg1: i32) -> (i32, i32, i32, i32) {
    %c0_i32 = arith.constant 0 : i32
    %c0_i32_0 = arith.constant 0 : i32
    %c0_i32_1 = arith.constant 0 : i32
    %c0_i32_2 = arith.constant 0 : i32
    return %arg0, %c0_i32, %c0_i32_0, %c0_i32_1 : i32, i32, i32, i32
  }
  func.func @transform_1(%arg0: i32, %arg1: i32) -> (i32, i32) {
    %c0_i32 = arith.constant 0 : i32
    %c0_i32_0 = arith.constant 0 : i32
    %c0_i32_1 = arith.constant 0 : i32
    return %c0_i32, %c0_i32_0 : i32, i32
  }
  func.func @transform_2(%arg0: i32, %arg1: i32) -> (i32, i32) {
    %c0_i32 = arith.constant 0 : i32
    %c0_i32_0 = arith.constant 0 : i32
    %c0_i32_1 = arith.constant 0 : i32
    return %c0_i32, %c0_i32_0 : i32, i32
  }
  func.func @transform_3(%arg0: i32, %arg1: i32) -> (i32, i32) {
    %c0_i32 = arith.constant 0 : i32
    %c0_i32_0 = arith.constant 0 : i32
    %c0_i32_1 = arith.constant 0 : i32
    return %c0_i32, %c0_i32_0 : i32, i32
  }
  func.func @transform_4(%arg0: i32, %arg1: i32) -> (i32, i32) {
    %c0_i32 = arith.constant 0 : i32
    %c0_i32_0 = arith.constant 0 : i32
    %c0_i32_1 = arith.constant 0 : i32
    return %c0_i32, %c0_i32_0 : i32, i32
  }
  func.func @transform_5(%arg0: i32, %arg1: i32) -> (i32, i32) {
    %c0_i32 = arith.constant 0 : i32
    %c0_i32_0 = arith.constant 0 : i32
    %c0_i32_1 = arith.constant 0 : i32
    return %c0_i32, %c0_i32_0 : i32, i32
  }
  func.func @transform_6(%arg0: i32, %arg1: i32) -> (i32, i32) {
    %c0_i32 = arith.constant 0 : i32
    %c0_i32_0 = arith.constant 0 : i32
    %c0_i32_1 = arith.constant 0 : i32
    return %c0_i32, %c0_i32_0 : i32, i32
  }
  func.func @transform_7(%arg0: i32, %arg1: i32) -> (i32, i32) {
    %c0_i32 = arith.constant 0 : i32
    %c0_i32_0 = arith.constant 0 : i32
    %c0_i32_1 = arith.constant 0 : i32
    return %c0_i32, %c0_i32_0 : i32, i32
  }
  func.func @transform_8(%arg0: i32, %arg1: i32) -> (i32, i32) {
    %c0_i32 = arith.constant 0 : i32
    %c0_i32_0 = arith.constant 0 : i32
    %c0_i32_1 = arith.constant 0 : i32
    return %c0_i32, %c0_i32_0 : i32, i32
  }
  func.func @transform_9(%arg0: i32, %arg1: i32) -> (i32, i32) {
    %c0_i32 = arith.constant 0 : i32
    %c0_i32_0 = arith.constant 0 : i32
    %c0_i32_1 = arith.constant 0 : i32
    return %c0_i32, %c0_i32_0 : i32, i32
  }
  func.func @transform_10(%arg0: i32, %arg1: i32) -> (i32, i32) {
    %c0_i32 = arith.constant 0 : i32
    %c0_i32_0 = arith.constant 0 : i32
    %c0_i32_1 = arith.constant 0 : i32
    return %c0_i32, %c0_i32_0 : i32, i32
  }
  func.func @transform_11(%arg0: i32, %arg1: i32) -> (i32, i32) {
    %c0_i32 = arith.constant 0 : i32
    %c0_i32_0 = arith.constant 0 : i32
    %c0_i32_1 = arith.constant 0 : i32
    return %c0_i32, %c0_i32_0 : i32, i32
  }
  func.func @transform_12(%arg0: i32, %arg1: i32) -> (i32, i32) {
    %c0_i32 = arith.constant 0 : i32
    %c0_i32_0 = arith.constant 0 : i32
    %c0_i32_1 = arith.constant 0 : i32
    return %c0_i32, %c0_i32_0 : i32, i32
  }
  func.func @transform_13(%arg0: i32, %arg1: i32) -> (i32, i32, i32, i32) {
    %c0_i32 = arith.constant 0 : i32
    %c0_i32_0 = arith.constant 0 : i32
    %c0_i32_1 = arith.constant 0 : i32
    return %arg0, %arg1, %c0_i32, %c0_i32_0 : i32, i32, i32, i32
  }
}

</mosaic_0001>

<llo_original>
// kernel: tpu_custom_call.1
$region0: #{tpu_custom_call.1}
  #allocation0 [shape = 'u32[]', space=smem, size = 0x4, offset = 0x4, fixed_abs, tag = 'smem constant byte address 0x4 - core index']
  #allocation1 [shape = 'u32[144,128]{1,0:T(1,128)}', space=vmem, size = 0x12000, scoped, tag = 'internal scratch']
  %s0 = inlined_call_operand.vmem [shape: bf16[2,18,18,128], index: 0, kind: input, shape index: {}]
  %s1 = inlined_call_operand.vmem [shape: bf16[128,128], index: 1, kind: input, shape index: {}]
  %s2 = inlined_call_operand.vmem [shape: f32[1,128], index: 2, kind: input, shape index: {}]
  %s3 = inlined_call_operand.vmem [shape: f32[1,128], index: 3, kind: input, shape index: {}]
  %s4 = inlined_call_operand.vmem [shape: bf16[1152,128], index: 4, kind: input, shape index: {}]
  %s5 = inlined_call_operand.vmem [shape: f32[1,128], index: 5, kind: input, shape index: {}]
  %s6 = inlined_call_operand.vmem [shape: f32[1,128], index: 6, kind: input, shape index: {}]
  %s7 = inlined_call_operand.vmem [shape: bf16[128,128], index: 7, kind: input, shape index: {}]
  %s8 = inlined_call_operand.vmem [shape: f32[1,128], index: 8, kind: input, shape index: {}]
  %s9 = inlined_call_operand.vmem [shape: f32[1,128], index: 9, kind: input, shape index: {}]
  %s10 = inlined_call_operand.vmem [shape: bf16[128,128], index: 10, kind: input, shape index: {}]
  %s11 = inlined_call_operand.vmem [shape: f32[1,128], index: 11, kind: input, shape index: {}]
  %s12 = inlined_call_operand.vmem [shape: f32[1,128], index: 12, kind: input, shape index: {}]
  %s13 = inlined_call_operand.hbm [shape: f32[2,16,16,128], index: 13, kind: output, shape index: {}]
  %s14 = sld [smem:[#allocation0]]
  $region85: #{tpu_custom_call.1} parent=0
    _
  %s16 = ssub.s32 1, %s14
  %s17 = scalar_select 0, %s16, %s14
  $region1: #{tpu_custom_call.1} parent=0
    #allocation2 [shape = 'u8[131072]{0}', space=vmem, size = 0x20000, scoped, tag = 'output window, operand 0']
    #allocation3 [shape = 's32[2]{0}', space=sflag, size = 0x8, scoped, tag = 'scoped memory for tpu_custom_call.1']
    %18 = vsyncpa [#allocation3], 0
    %s19 = scalar_lea.sflag [#allocation3], 1
    %20 = vsyncpa %s19, 0
    loop: start=0, step=1, limit=6
    $region2: #{tpu_custom_call.1} parent=1 // loop_pre_header
      _
    $region3: #{tpu_custom_call.1} parent=1 // loop_header
      %s22 = sphi 0, %s26
      %p23 = scmp.ge.s32.totalorder %s22, 6
      %s29 = sphi 0, %s41
      %s30 = sphi 0, %s37
      %s31 = sphi 0, %s29
      %s32 = sphi 0, %s30
      %s33 = sphi 0, %s31
      %s34 = sphi 0, %s32
      %s44 = sphi 0, %s46
      %s47 = sphi 0, %s44
      %s48 = sphi 0, %s47
      %s64 = sphi 0, %s48
      %s68 = sphi 0, %s68
      %s70 = sphi 0, %s68
      %s71 = sphi 0, %s70
      %s85 = sphi 0, %s71
      %s89 = sphi 0, %s89
      %s91 = sphi 0, %s89
      %s92 = sphi 0, %s91
      %s106 = sphi 0, %s92
      %s110 = sphi 0, %s110
      %s112 = sphi 0, %s110
      %s113 = sphi 0, %s112
      %s127 = sphi 0, %s113
      %s131 = sphi 0, %s131
      %s133 = sphi 0, %s131
      %s134 = sphi 0, %s133
      %s148 = sphi 0, %s134
      %s152 = sphi 0, %s152
      %s154 = sphi 0, %s152
      %s155 = sphi 0, %s154
      %s169 = sphi 0, %s155
      %s173 = sphi 0, %s173
      %s175 = sphi 0, %s173
      %s176 = sphi 0, %s175
      %s190 = sphi 0, %s176
      %s194 = sphi 0, %s194
      %s196 = sphi 0, %s194
      %s197 = sphi 0, %s196
      %s211 = sphi 0, %s197
      %s215 = sphi 0, %s215
      %s217 = sphi 0, %s215
      %s218 = sphi 0, %s217
      %s232 = sphi 0, %s218
      %s236 = sphi 0, %s236
      %s238 = sphi 0, %s236
      %s239 = sphi 0, %s238
      %s253 = sphi 0, %s239
      %s257 = sphi 0, %s257
      %s259 = sphi 0, %s257
      %s260 = sphi 0, %s259
      %s274 = sphi 0, %s260
      %s278 = sphi 0, %s278
      %s280 = sphi 0, %s278
      %s281 = sphi 0, %s280
      %s295 = sphi 0, %s281
      %s299 = sphi 0, %s299
      %s301 = sphi 0, %s299
      %s302 = sphi 0, %s301
      %s316 = sphi 0, %s302
      %s324 = sphi 0, %s326
      %s327 = sphi 0, %s324
      %s328 = sphi 0, %s327
      %s344 = sphi 0, %s328
    $region4: #{tpu_custom_call.1} parent=1 // loop_header_branch
      %25 = sbr.rel (%p23) target = $region8
    $region5: #{tpu_custom_call.1} parent=1 // loop_body
      %s27 = ssub.s32 %s22, 1
      %s28 = ssub.s32 %s22, 2
      %s35 = sadd.s32 1, %s30
      %p36 = scmp.ge.s32.totalorder %s35, 2
      %s37 = scalar_select %p36, 0, %s35
      %s38 = sadd.s32 1, %s29
      %s39 = scalar_select %p36, %s38, %s29
      %p40 = scmp.ge.s32.totalorder %s39, 2
      %s41 = scalar_select %p40, 0, %s39
      %s42 = ssub.s32 %s29, %s41
      %p43 = scmp.eq.s32.totalorder %s42, 0
      %s45 = sadd.s32 %s44, 1
      %s46 = scalar_select %p43, %s44, %s45
      %p49 = pneg %p43
      %p50 = scmp.eq.s32.totalorder %s22, 3
      %p51 = por %p49, %p50
      %p52 = scmp.ne.s32.totalorder %s44, %s47
      %p53 = scmp.eq.s32.totalorder %s22, 0
      %p54 = por %p52, %p53
      %p55 = scmp.ne.s32.totalorder %s44, %s47
      %p56 = scmp.eq.s32.totalorder %s27, 3
      %p57 = por %p55, %p56
      %p58 = scmp.ne.s32.totalorder %s47, %s48
      %p59 = scmp.eq.s32.totalorder %s27, 0
      %p60 = por %p58, %p59
      %p61 = scmp.ne.s32.totalorder %s47, %s48
      %p62 = scmp.eq.s32.totalorder %s28, 3
      %p63 = por %p61, %p62
      %p65 = scmp.ne.s32.totalorder %s48, %s64
      %p66 = scmp.eq.s32.totalorder %s28, 0
      %p67 = por %p65, %p66
      %s69 = sadd.s32 %s68, 1
      %p72 = scmp.eq.s32.totalorder %s22, 3
      %p73 = scmp.ne.s32.totalorder %s68, %s70
      %p74 = scmp.eq.s32.totalorder %s22, 0
      %p75 = por %p73, %p74
      %p76 = scmp.ne.s32.totalorder %s68, %s70
      %p77 = scmp.eq.s32.totalorder %s27, 3
      %p78 = por %p76, %p77
      %p79 = scmp.ne.s32.totalorder %s70, %s71
      %p80 = scmp.eq.s32.totalorder %s27, 0
      %p81 = por %p79, %p80
      %p82 = scmp.ne.s32.totalorder %s70, %s71
      %p83 = scmp.eq.s32.totalorder %s28, 3
      %p84 = por %p82, %p83
      %p86 = scmp.ne.s32.totalorder %s71, %s85
      %p87 = scmp.eq.s32.totalorder %s28, 0
      %p88 = por %p86, %p87
      %s90 = sadd.s32 %s89, 1
      %p93 = scmp.eq.s32.totalorder %s22, 3
      %p94 = scmp.ne.s32.totalorder %s89, %s91
      %p95 = scmp.eq.s32.totalorder %s22, 0
      %p96 = por %p94, %p95
      %p97 = scmp.ne.s32.totalorder %s89, %s91
      %p98 = scmp.eq.s32.totalorder %s27, 3
      %p99 = por %p97, %p98
      %p100 = scmp.ne.s32.totalorder %s91, %s92
      %p101 = scmp.eq.s32.totalorder %s27, 0
      %p102 = por %p100, %p101
      %p103 = scmp.ne.s32.totalorder %s91, %s92
      %p104 = scmp.eq.s32.totalorder %s28, 3
      %p105 = por %p103, %p104
      %p107 = scmp.ne.s32.totalorder %s92, %s106
      %p108 = scmp.eq.s32.totalorder %s28, 0
      %p109 = por %p107, %p108
      %s111 = sadd.s32 %s110, 1
      %p114 = scmp.eq.s32.totalorder %s22, 3
      %p115 = scmp.ne.s32.totalorder %s110, %s112
      %p116 = scmp.eq.s32.totalorder %s22, 0
      %p117 = por %p115, %p116
      %p118 = scmp.ne.s32.totalorder %s110, %s112
      %p119 = scmp.eq.s32.totalorder %s27, 3
      %p120 = por %p118, %p119
      %p121 = scmp.ne.s32.totalorder %s112, %s113
      %p122 = scmp.eq.s32.totalorder %s27, 0
      %p123 = por %p121, %p122
      %p124 = scmp.ne.s32.totalorder %s112, %s113
      %p125 = scmp.eq.s32.totalorder %s28, 3
      %p126 = por %p124, %p125
      %p128 = scmp.ne.s32.totalorder %s113, %s127
      %p129 = scmp.eq.s32.totalorder %s28, 0
      %p130 = por %p128, %p129
      %s132 = sadd.s32 %s131, 1
      %p135 = scmp.eq.s32.totalorder %s22, 3
      %p136 = scmp.ne.s32.totalorder %s131, %s133
      %p137 = scmp.eq.s32.totalorder %s22, 0
      %p138 = por %p136, %p137
      %p139 = scmp.ne.s32.totalorder %s131, %s133
      %p140 = scmp.eq.s32.totalorder %s27, 3
      %p141 = por %p139, %p140
      %p142 = scmp.ne.s32.totalorder %s133, %s134
      %p143 = scmp.eq.s32.totalorder %s27, 0
      %p144 = por %p142, %p143
      %p145 = scmp.ne.s32.totalorder %s133, %s134
      %p146 = scmp.eq.s32.totalorder %s28, 3
      %p147 = por %p145, %p146
      %p149 = scmp.ne.s32.totalorder %s134, %s148
      %p150 = scmp.eq.s32.totalorder %s28, 0
      %p151 = por %p149, %p150
      %s153 = sadd.s32 %s152, 1
      %p156 = scmp.eq.s32.totalorder %s22, 3
      %p157 = scmp.ne.s32.totalorder %s152, %s154
      %p158 = scmp.eq.s32.totalorder %s22, 0
      %p159 = por %p157, %p158
      %p160 = scmp.ne.s32.totalorder %s152, %s154
      %p161 = scmp.eq.s32.totalorder %s27, 3
      %p162 = por %p160, %p161
      %p163 = scmp.ne.s32.totalorder %s154, %s155
      %p164 = scmp.eq.s32.totalorder %s27, 0
      %p165 = por %p163, %p164
      %p166 = scmp.ne.s32.totalorder %s154, %s155
      %p167 = scmp.eq.s32.totalorder %s28, 3
      %p168 = por %p166, %p167
      %p170 = scmp.ne.s32.totalorder %s155, %s169
      %p171 = scmp.eq.s32.totalorder %s28, 0
      %p172 = por %p170, %p171
      %s174 = sadd.s32 %s173, 1
      %p177 = scmp.eq.s32.totalorder %s22, 3
      %p178 = scmp.ne.s32.totalorder %s173, %s175
      %p179 = scmp.eq.s32.totalorder %s22, 0
      %p180 = por %p178, %p179
      %p181 = scmp.ne.s32.totalorder %s173, %s175
      %p182 = scmp.eq.s32.totalorder %s27, 3
      %p183 = por %p181, %p182
      %p184 = scmp.ne.s32.totalorder %s175, %s176
      %p185 = scmp.eq.s32.totalorder %s27, 0
      %p186 = por %p184, %p185
      %p187 = scmp.ne.s32.totalorder %s175, %s176
      %p188 = scmp.eq.s32.totalorder %s28, 3
      %p189 = por %p187, %p188
      %p191 = scmp.ne.s32.totalorder %s176, %s190
      %p192 = scmp.eq.s32.totalorder %s28, 0
      %p193 = por %p191, %p192
      %s195 = sadd.s32 %s194, 1
      %p198 = scmp.eq.s32.totalorder %s22, 3
      %p199 = scmp.ne.s32.totalorder %s194, %s196
      %p200 = scmp.eq.s32.totalorder %s22, 0
      %p201 = por %p199, %p200
      %p202 = scmp.ne.s32.totalorder %s194, %s196
      %p203 = scmp.eq.s32.totalorder %s27, 3
      %p204 = por %p202, %p203
      %p205 = scmp.ne.s32.totalorder %s196, %s197
      %p206 = scmp.eq.s32.totalorder %s27, 0
      %p207 = por %p205, %p206
      %p208 = scmp.ne.s32.totalorder %s196, %s197
      %p209 = scmp.eq.s32.totalorder %s28, 3
      %p210 = por %p208, %p209
      %p212 = scmp.ne.s32.totalorder %s197, %s211
      %p213 = scmp.eq.s32.totalorder %s28, 0
      %p214 = por %p212, %p213
      %s216 = sadd.s32 %s215, 1
      %p219 = scmp.eq.s32.totalorder %s22, 3
      %p220 = scmp.ne.s32.totalorder %s215, %s217
      %p221 = scmp.eq.s32.totalorder %s22, 0
      %p222 = por %p220, %p221
      %p223 = scmp.ne.s32.totalorder %s215, %s217
      %p224 = scmp.eq.s32.totalorder %s27, 3
      %p225 = por %p223, %p224
      %p226 = scmp.ne.s32.totalorder %s217, %s218
      %p227 = scmp.eq.s32.totalorder %s27, 0
      %p228 = por %p226, %p227
      %p229 = scmp.ne.s32.totalorder %s217, %s218
      %p230 = scmp.eq.s32.totalorder %s28, 3
      %p231 = por %p229, %p230
      %p233 = scmp.ne.s32.totalorder %s218, %s232
      %p234 = scmp.eq.s32.totalorder %s28, 0
      %p235 = por %p233, %p234
      %s237 = sadd.s32 %s236, 1
      %p240 = scmp.eq.s32.totalorder %s22, 3
      %p241 = scmp.ne.s32.totalorder %s236, %s238
      %p242 = scmp.eq.s32.totalorder %s22, 0
      %p243 = por %p241, %p242
      %p244 = scmp.ne.s32.totalorder %s236, %s238
      %p245 = scmp.eq.s32.totalorder %s27, 3
      %p246 = por %p244, %p245
      %p247 = scmp.ne.s32.totalorder %s238, %s239
      %p248 = scmp.eq.s32.totalorder %s27, 0
      %p249 = por %p247, %p248
      %p250 = scmp.ne.s32.totalorder %s238, %s239
      %p251 = scmp.eq.s32.totalorder %s28, 3
      %p252 = por %p250, %p251
      %p254 = scmp.ne.s32.totalorder %s239, %s253
      %p255 = scmp.eq.s32.totalorder %s28, 0
      %p256 = por %p254, %p255
      %s258 = sadd.s32 %s257, 1
      %p261 = scmp.eq.s32.totalorder %s22, 3
      %p262 = scmp.ne.s32.totalorder %s257, %s259
      %p263 = scmp.eq.s32.totalorder %s22, 0
      %p264 = por %p262, %p263
      %p265 = scmp.ne.s32.totalorder %s257, %s259
      %p266 = scmp.eq.s32.totalorder %s27, 3
      %p267 = por %p265, %p266
      %p268 = scmp.ne.s32.totalorder %s259, %s260
      %p269 = scmp.eq.s32.totalorder %s27, 0
      %p270 = por %p268, %p269
      %p271 = scmp.ne.s32.totalorder %s259, %s260
      %p272 = scmp.eq.s32.totalorder %s28, 3
      %p273 = por %p271, %p272
      %p275 = scmp.ne.s32.totalorder %s260, %s274
      %p276 = scmp.eq.s32.totalorder %s28, 0
      %p277 = por %p275, %p276
      %s279 = sadd.s32 %s278, 1
      %p282 = scmp.eq.s32.totalorder %s22, 3
      %p283 = scmp.ne.s32.totalorder %s278, %s280
      %p284 = scmp.eq.s32.totalorder %s22, 0
      %p285 = por %p283, %p284
      %p286 = scmp.ne.s32.totalorder %s278, %s280
      %p287 = scmp.eq.s32.totalorder %s27, 3
      %p288 = por %p286, %p287
      %p289 = scmp.ne.s32.totalorder %s280, %s281
      %p290 = scmp.eq.s32.totalorder %s27, 0
      %p291 = por %p289, %p290
      %p292 = scmp.ne.s32.totalorder %s280, %s281
      %p293 = scmp.eq.s32.totalorder %s28, 3
      %p294 = por %p292, %p293
      %p296 = scmp.ne.s32.totalorder %s281, %s295
      %p297 = scmp.eq.s32.totalorder %s28, 0
      %p298 = por %p296, %p297
      %s300 = sadd.s32 %s299, 1
      %p303 = scmp.eq.s32.totalorder %s22, 3
      %p304 = scmp.ne.s32.totalorder %s299, %s301
      %p305 = scmp.eq.s32.totalorder %s22, 0
      %p306 = por %p304, %p305
      %p307 = scmp.ne.s32.totalorder %s299, %s301
      %p308 = scmp.eq.s32.totalorder %s27, 3
      %p309 = por %p307, %p308
      %p310 = scmp.ne.s32.totalorder %s301, %s302
      %p311 = scmp.eq.s32.totalorder %s27, 0
      %p312 = por %p310, %p311
      %p313 = scmp.ne.s32.totalorder %s301, %s302
      %p314 = scmp.eq.s32.totalorder %s28, 3
      %p315 = por %p313, %p314
      %p317 = scmp.ne.s32.totalorder %s302, %s316
      %p318 = scmp.eq.s32.totalorder %s28, 0
      %p319 = por %p317, %p318
      %s320 = ssub.s32 %s29, %s41
      %s321 = ssub.s32 %s30, %s37
      %s322 = sor.u32 %s320, %s321
      %p323 = scmp.eq.s32.totalorder %s322, 0
      %s325 = sadd.s32 %s324, 1
      %s326 = scalar_select %p323, %s324, %s325
      %p329 = pneg %p323
      %p330 = scmp.eq.s32.totalorder %s22, 3
      %p331 = por %p329, %p330
      %p332 = scmp.ne.s32.totalorder %s324, %s327
      %p333 = scmp.eq.s32.totalorder %s22, 0
      %p334 = por %p332, %p333
      %p335 = scmp.ne.s32.totalorder %s324, %s327
      %p336 = scmp.eq.s32.totalorder %s27, 3
      %p337 = por %p335, %p336
      %p338 = scmp.ne.s32.totalorder %s327, %s328
      %p339 = scmp.eq.s32.totalorder %s27, 0
      %p340 = por %p338, %p339
      %p341 = scmp.ne.s32.totalorder %s327, %s328
      %p342 = scmp.eq.s32.totalorder %s28, 3
      %p343 = por %p341, %p342
      %p345 = scmp.ne.s32.totalorder %s328, %s344
      %p346 = scmp.eq.s32.totalorder %s28, 0
      %p347 = por %p345, %p346
      %p348 = scmp.le.s32.totalorder 1, %s22
      %p349 = scmp.lt.s32.totalorder %s22, 5
      %p350 = pnand %p348, %p349
      %p351 = pneg %p350
      // Predicated region
      $region9: #{tpu_custom_call.1} parent=5 // pred_check
        _
      $region10: #{tpu_custom_call.1} parent=5 // pred_check_branch
        %353 = sbr.rel (%p350) target = $region12
      $region11: #{tpu_custom_call.1} parent=5 // pred_region
        %s354 = ssub.s32 %s22, 1
        // Predicated region
        $region13: #{tpu_custom_call.1} parent=11 // pred_check
          %p355 = pneg %p81
        $region14: #{tpu_custom_call.1} parent=11 // pred_check_branch
          %357 = sbr.rel (%p355) target = $region16
        $region15: #{tpu_custom_call.1} parent=11 // pred_region
          _
        $region16: #{tpu_custom_call.1} parent=11 // pred_fallthru
          _
        // Predicated region
        $region17: #{tpu_custom_call.1} parent=11 // pred_check
          %p358 = pneg %p102
        $region18: #{tpu_custom_call.1} parent=11 // pred_check_branch
          %360 = sbr.rel (%p358) target = $region20
        $region19: #{tpu_custom_call.1} parent=11 // pred_region
          _
        $region20: #{tpu_custom_call.1} parent=11 // pred_fallthru
          _
        // Predicated region
        $region21: #{tpu_custom_call.1} parent=11 // pred_check
          %p361 = pneg %p123
        $region22: #{tpu_custom_call.1} parent=11 // pred_check_branch
          %363 = sbr.rel (%p361) target = $region24
        $region23: #{tpu_custom_call.1} parent=11 // pred_region
          _
        $region24: #{tpu_custom_call.1} parent=11 // pred_fallthru
          _
        // Predicated region
        $region25: #{tpu_custom_call.1} parent=11 // pred_check
          %p364 = pneg %p144
        $region26: #{tpu_custom_call.1} parent=11 // pred_check_branch
          %366 = sbr.rel (%p364) target = $region28
        $region27: #{tpu_custom_call.1} parent=11 // pred_region
          _
        $region28: #{tpu_custom_call.1} parent=11 // pred_fallthru
          _
        // Predicated region
        $region29: #{tpu_custom_call.1} parent=11 // pred_check
          %p367 = pneg %p165
        $region30: #{tpu_custom_call.1} parent=11 // pred_check_branch
          %369 = sbr.rel (%p367) target = $region32
        $region31: #{tpu_custom_call.1} parent=11 // pred_region
          _
        $region32: #{tpu_custom_call.1} parent=11 // pred_fallthru
          _
        // Predicated region
        $region33: #{tpu_custom_call.1} parent=11 // pred_check
          %p370 = pneg %p186
        $region34: #{tpu_custom_call.1} parent=11 // pred_check_branch
          %372 = sbr.rel (%p370) target = $region36
        $region35: #{tpu_custom_call.1} parent=11 // pred_region
          _
        $region36: #{tpu_custom_call.1} parent=11 // pred_fallthru
          _
        // Predicated region
        $region37: #{tpu_custom_call.1} parent=11 // pred_check
          %p373 = pneg %p207
        $region38: #{tpu_custom_call.1} parent=11 // pred_check_branch
          %375 = sbr.rel (%p373) target = $region40
        $region39: #{tpu_custom_call.1} parent=11 // pred_region
          _
        $region40: #{tpu_custom_call.1} parent=11 // pred_fallthru
          _
        // Predicated region
        $region41: #{tpu_custom_call.1} parent=11 // pred_check
          %p376 = pneg %p228
        $region42: #{tpu_custom_call.1} parent=11 // pred_check_branch
          %378 = sbr.rel (%p376) target = $region44
        $region43: #{tpu_custom_call.1} parent=11 // pred_region
          _
        $region44: #{tpu_custom_call.1} parent=11 // pred_fallthru
          _
        // Predicated region
        $region45: #{tpu_custom_call.1} parent=11 // pred_check
          %p379 = pneg %p249
        $region46: #{tpu_custom_call.1} parent=11 // pred_check_branch
          %381 = sbr.rel (%p379) target = $region48
        $region47: #{tpu_custom_call.1} parent=11 // pred_region
          _
        $region48: #{tpu_custom_call.1} parent=11 // pred_fallthru
          _
        // Predicated region
        $region49: #{tpu_custom_call.1} parent=11 // pred_check
          %p382 = pneg %p270
        $region50: #{tpu_custom_call.1} parent=11 // pred_check_branch
          %384 = sbr.rel (%p382) target = $region52
        $region51: #{tpu_custom_call.1} parent=11 // pred_region
          _
        $region52: #{tpu_custom_call.1} parent=11 // pred_fallthru
          _
        // Predicated region
        $region53: #{tpu_custom_call.1} parent=11 // pred_check
          %p385 = pneg %p291
        $region54: #{tpu_custom_call.1} parent=11 // pred_check_branch
          %387 = sbr.rel (%p385) target = $region56
        $region55: #{tpu_custom_call.1} parent=11 // pred_region
          _
        $region56: #{tpu_custom_call.1} parent=11 // pred_fallthru
          _
        // Predicated region
        $region57: #{tpu_custom_call.1} parent=11 // pred_check
          %p388 = pneg %p312
        $region58: #{tpu_custom_call.1} parent=11 // pred_check_branch
          %390 = sbr.rel (%p388) target = $region60
        $region59: #{tpu_custom_call.1} parent=11 // pred_region
          _
        $region60: #{tpu_custom_call.1} parent=11 // pred_fallthru
          _
      $region12: #{tpu_custom_call.1} parent=5 // pred_fallthru
        _
      %p391 = scmp.lt.s32.totalorder %s22, 4
      // Predicated region
      $region61: #{tpu_custom_call.1} parent=5 // pred_check
        %p392 = pneg %p391
      $region62: #{tpu_custom_call.1} parent=5 // pred_check_branch
        %394 = sbr.rel (%p392) target = $region64
      $region63: #{tpu_custom_call.1} parent=5 // pred_region
        // Predicated region
        $region65: #{tpu_custom_call.1} parent=63 // pred_check
          %p395 = pneg %p54
        $region66: #{tpu_custom_call.1} parent=63 // pred_check_branch
          %397 = sbr.rel (%p395) target = $region68
        $region67: #{tpu_custom_call.1} parent=63 // pred_region
          %p398 = scmp.lt.s32.totalorder %s29, 1
          %s399 = scalar_select %p398, %s29, 1
          %s400 = smul.addr %s399, 54
          %s401 = smul.addr %s400, 4
          %s402 = scalar_lea.vmem %s0, %s401
        $region68: #{tpu_custom_call.1} parent=63 // pred_fallthru
          _
      $region64: #{tpu_custom_call.1} parent=5 // pred_fallthru
        _
      %p403 = scmp.le.s32.totalorder 1, %s22
      %p404 = scmp.lt.s32.totalorder %s22, 5
      %p405 = pnand %p403, %p404
      %p406 = pneg %p405
      // Predicated region
      $region69: #{tpu_custom_call.1} parent=5 // pred_check
        _
      $region70: #{tpu_custom_call.1} parent=5 // pred_check_branch
        %408 = sbr.rel (%p405) target = $region72
      $region71: #{tpu_custom_call.1} parent=5 // pred_region
        %s409 = ssub.s32 %s22, 1
        %p410 = scmp.lt.s32.totalorder %s31, 1
        %s411 = scalar_select %p410, %s31, 1
        %s412 = smul.addr %s411, 54
        %s413 = smul.addr %s412, 4
        %s414 = scalar_lea.vmem %s0, %s413
        %p415 = pneg %p60
        %p416 = pneg %p57
        %p417 = pneg %p81
        %p418 = pneg %p78
        %p419 = pneg %p102
        %p420 = pneg %p99
        %p421 = pneg %p123
        %p422 = pneg %p120
        %p423 = pneg %p144
        %p424 = pneg %p141
        %p425 = pneg %p165
        %p426 = pneg %p162
        %p427 = pneg %p186
        %p428 = pneg %p183
        %p429 = pneg %p207
        %p430 = pneg %p204
        %p431 = pneg %p228
        %p432 = pneg %p225
        %p433 = pneg %p249
        %p434 = pneg %p246
        %p435 = pneg %p270
        %p436 = pneg %p267
        %p437 = pneg %p291
        %p438 = pneg %p288
        %p439 = pneg %p312
        %p440 = pneg %p309
        %p441 = pneg %p340
        %p442 = pneg %p337
        %s443 = sand.u32 %s327, 1
        %s444 = scalar_lea.sflag [#allocation3], %s443
        %s445 = sand.u32 %s327, 1
        %s446 = smul.addr %s445, 128
        %s447 = scalar_lea.vmem [#allocation2], %s446
        %p448 = scmp.lt.s32.totalorder %s31, 1
        %s449 = scalar_select %p448, %s31, 1
        %s450 = smul.addr %s449, 54
        %s451 = smul.addr %s450, 4
        %s452 = scalar_lea.vmem %s0, %s451
        %s453 = smul.u32 8, %s32
        %s455 = smul.u32 %s32, 8
        %s456 = smul.u32 %s455, 3
        %s457 = smul.addr %s456, 4
        %s458 = scalar_lea.vmem %s452, %s457
        %v459 = vld [vmem:[%s458] sm:$0xf]
        %v460 = vld [vmem:[%s458 + $0x4] sm:$0xf]
        %v461 = vld [vmem:[%s458 + $0x8] sm:$0x1]
        %v462 = vld [vmem:[%s458 + $0xc] sm:$0xf]
        %v463 = vld [vmem:[%s458 + $0x10] sm:$0xf]
        %v464 = vld [vmem:[%s458 + $0x14] sm:$0x1]
        %v465 = vld [vmem:[%s458 + $0x18] sm:$0xf]
        %v466 = vld [vmem:[%s458 + $0x1c] sm:$0xf]
        %v467 = vld [vmem:[%s458 + $0x20] sm:$0x1]
        %v468 = vld [vmem:[%s458 + $0x24] sm:$0xf]
        %v469 = vld [vmem:[%s458 + $0x28] sm:$0xf]
        %v470 = vld [vmem:[%s458 + $0x2c] sm:$0x1]
        %v471 = vld [vmem:[%s458 + $0x30] sm:$0xf]
        %v472 = vld [vmem:[%s458 + $0x34] sm:$0xf]
        %v473 = vld [vmem:[%s458 + $0x38] sm:$0x1]
        %v474 = vld [vmem:[%s458 + $0x3c] sm:$0xf]
        %v475 = vld [vmem:[%s458 + $0x40] sm:$0xf]
        %v476 = vld [vmem:[%s458 + $0x44] sm:$0x1]
        %v477 = vld [vmem:[%s458 + $0x48] sm:$0xf]
        %v478 = vld [vmem:[%s458 + $0x4c] sm:$0xf]
        %v479 = vld [vmem:[%s458 + $0x50] sm:$0x1]
        %v480 = vld [vmem:[%s458 + $0x54] sm:$0xf]
        %v481 = vld [vmem:[%s458 + $0x58] sm:$0xf]
        %v482 = vld [vmem:[%s458 + $0x5c] sm:$0x1]
        %v483 = vld [vmem:[%s458 + $0x60] sm:$0xf]
        %v484 = vld [vmem:[%s458 + $0x64] sm:$0xf]
        %v485 = vld [vmem:[%s458 + $0x68] sm:$0x1]
        %v486 = vld [vmem:[%s458 + $0x6c] sm:$0xf]
        %v487 = vld [vmem:[%s458 + $0x70] sm:$0xf]
        %v488 = vld [vmem:[%s458 + $0x74] sm:$0x1]
        %v520 = vunpack.c.l.s4 1966171168
        %v521 = vunpack.c.0.s8 %v520
        %v522 = vlaneseq
        %v523 = vshrl.u32 %v522, 7
        %v524 = vsub.s32 %v521, %v523
        %v525 = vrot.slane %v459, %v524
        %v526 = vcombine.high %v525, %v525
        %v528 = vunpack.c.l.s4 1966171168
        %v529 = vunpack.c.0.s8 %v528
        %v530 = vlaneseq
        %v531 = vshrl.u32 %v530, 7
        %v532 = vsub.s32 %v529, %v531
        %v533 = vrot.slane %v525, %v532
        %v535 = vunpack.c.l.s4 1966171168
        %v536 = vunpack.c.0.s8 %v535
        %v537 = vlaneseq
        %v538 = vshrl.u32 %v537, 7
        %v539 = vsub.s32 %v536, %v538
        %v540 = vrot.slane %v526, %v539
        %v541 = vcombine.high %v533, %v533
        %v542 = vcombine.high %v540, %v540
        %v544 = vunpack.c.l.s4 1966171168
        %v545 = vunpack.c.0.s8 %v544
        %v546 = vlaneseq
        %v547 = vshrl.u32 %v546, 7
        %v548 = vsub.s32 %v545, %v547
        %v549 = vrot.slane %v460, %v548
        %v550 = vcombine.high %v549, %v549
        %v552 = vunpack.c.l.s4 1966171168
        %v553 = vunpack.c.0.s8 %v552
        %v554 = vlaneseq
        %v555 = vshrl.u32 %v554, 7
        %v556 = vsub.s32 %v553, %v555
        %v557 = vrot.slane %v549, %v556
        %v559 = vunpack.c.l.s4 1966171168
        %v560 = vunpack.c.0.s8 %v559
        %v561 = vlaneseq
        %v562 = vshrl.u32 %v561, 7
        %v563 = vsub.s32 %v560, %v562
        %v564 = vrot.slane %v550, %v563
        %v565 = vcombine.high %v557, %v557
        %v566 = vcombine.high %v564, %v564
        %v568 = vunpack.c.l.s4 1966171168
        %v569 = vunpack.c.0.s8 %v568
        %v570 = vlaneseq
        %v571 = vshrl.u32 %v570, 7
        %v572 = vsub.s32 %v569, %v571
        %v573 = vrot.slane %v461, %v572
        %v575 = vunpack.c.l.s4 1966171168
        %v576 = vunpack.c.0.s8 %v575
        %v577 = vlaneseq
        %v578 = vshrl.u32 %v577, 7
        %v579 = vsub.s32 %v576, %v578
        %v580 = vrot.slane %v573, %v579
        %v582 = vunpack.c.l.s4 1966171168
        %v583 = vunpack.c.0.s8 %v582
        %v584 = vlaneseq
        %v585 = vshrl.u32 %v584, 7
        %v586 = vsub.s32 %v583, %v585
        %v587 = vrot.slane %v462, %v586
        %v588 = vcombine.high %v587, %v587
        %v590 = vunpack.c.l.s4 1966171168
        %v591 = vunpack.c.0.s8 %v590
        %v592 = vlaneseq
        %v593 = vshrl.u32 %v592, 7
        %v594 = vsub.s32 %v591, %v593
        %v595 = vrot.slane %v587, %v594
        %v597 = vunpack.c.l.s4 1966171168
        %v598 = vunpack.c.0.s8 %v597
        %v599 = vlaneseq
        %v600 = vshrl.u32 %v599, 7
        %v601 = vsub.s32 %v598, %v600
        %v602 = vrot.slane %v588, %v601
        %v603 = vcombine.high %v595, %v595
        %v604 = vcombine.high %v602, %v602
        %v606 = vunpack.c.l.s4 1966171168
        %v607 = vunpack.c.0.s8 %v606
        %v608 = vlaneseq
        %v609 = vshrl.u32 %v608, 7
        %v610 = vsub.s32 %v607, %v609
        %v611 = vrot.slane %v463, %v610
        %v612 = vcombine.high %v611, %v611
        %v614 = vunpack.c.l.s4 1966171168
        %v615 = vunpack.c.0.s8 %v614
        %v616 = vlaneseq
        %v617 = vshrl.u32 %v616, 7
        %v618 = vsub.s32 %v615, %v617
        %v619 = vrot.slane %v611, %v618
        %v621 = vunpack.c.l.s4 1966171168
        %v622 = vunpack.c.0.s8 %v621
        %v623 = vlaneseq
        %v624 = vshrl.u32 %v623, 7
        %v625 = vsub.s32 %v622, %v624
        %v626 = vrot.slane %v612, %v625
        %v627 = vcombine.high %v619, %v619
        %v628 = vcombine.high %v626, %v626
        %v630 = vunpack.c.l.s4 1966171168
        %v631 = vunpack.c.0.s8 %v630
        %v632 = vlaneseq
        %v633 = vshrl.u32 %v632, 7
        %v634 = vsub.s32 %v631, %v633
        %v635 = vrot.slane %v464, %v634
        %v637 = vunpack.c.l.s4 1966171168
        %v638 = vunpack.c.0.s8 %v637
        %v639 = vlaneseq
        %v640 = vshrl.u32 %v639, 7
        %v641 = vsub.s32 %v638, %v640
        %v642 = vrot.slane %v635, %v641
        %v644 = vunpack.c.l.s4 1966171168
        %v645 = vunpack.c.0.s8 %v644
        %v646 = vlaneseq
        %v647 = vshrl.u32 %v646, 7
        %v648 = vsub.s32 %v645, %v647
        %v649 = vrot.slane %v465, %v648
        %v650 = vcombine.high %v649, %v649
        %v652 = vunpack.c.l.s4 1966171168
        %v653 = vunpack.c.0.s8 %v652
        %v654 = vlaneseq
        %v655 = vshrl.u32 %v654, 7
        %v656 = vsub.s32 %v653, %v655
        %v657 = vrot.slane %v649, %v656
        %v659 = vunpack.c.l.s4 1966171168
        %v660 = vunpack.c.0.s8 %v659
        %v661 = vlaneseq
        %v662 = vshrl.u32 %v661, 7
        %v663 = vsub.s32 %v660, %v662
        %v664 = vrot.slane %v650, %v663
        %v665 = vcombine.high %v657, %v657
        %v666 = vcombine.high %v664, %v664
        %v668 = vunpack.c.l.s4 1966171168
        %v669 = vunpack.c.0.s8 %v668
        %v670 = vlaneseq
        %v671 = vshrl.u32 %v670, 7
        %v672 = vsub.s32 %v669, %v671
        %v673 = vrot.slane %v466, %v672
        %v674 = vcombine.high %v673, %v673
        %v676 = vunpack.c.l.s4 1966171168
        %v677 = vunpack.c.0.s8 %v676
        %v678 = vlaneseq
        %v679 = vshrl.u32 %v678, 7
        %v680 = vsub.s32 %v677, %v679
        %v681 = vrot.slane %v673, %v680
        %v683 = vunpack.c.l.s4 1966171168
        %v684 = vunpack.c.0.s8 %v683
        %v685 = vlaneseq
        %v686 = vshrl.u32 %v685, 7
        %v687 = vsub.s32 %v684, %v686
        %v688 = vrot.slane %v674, %v687
        %v689 = vcombine.high %v681, %v681
        %v690 = vcombine.high %v688, %v688
        %v692 = vunpack.c.l.s4 1966171168
        %v693 = vunpack.c.0.s8 %v692
        %v694 = vlaneseq
        %v695 = vshrl.u32 %v694, 7
        %v696 = vsub.s32 %v693, %v695
        %v697 = vrot.slane %v467, %v696
        %v699 = vunpack.c.l.s4 1966171168
        %v700 = vunpack.c.0.s8 %v699
        %v701 = vlaneseq
        %v702 = vshrl.u32 %v701, 7
        %v703 = vsub.s32 %v700, %v702
        %v704 = vrot.slane %v697, %v703
        %v706 = vunpack.c.l.s4 1966171168
        %v707 = vunpack.c.0.s8 %v706
        %v708 = vlaneseq
        %v709 = vshrl.u32 %v708, 7
        %v710 = vsub.s32 %v707, %v709
        %v711 = vrot.slane %v468, %v710
        %v712 = vcombine.high %v711, %v711
        %v714 = vunpack.c.l.s4 1966171168
        %v715 = vunpack.c.0.s8 %v714
        %v716 = vlaneseq
        %v717 = vshrl.u32 %v716, 7
        %v718 = vsub.s32 %v715, %v717
        %v719 = vrot.slane %v711, %v718
        %v721 = vunpack.c.l.s4 1966171168
        %v722 = vunpack.c.0.s8 %v721
        %v723 = vlaneseq
        %v724 = vshrl.u32 %v723, 7
        %v725 = vsub.s32 %v722, %v724
        %v726 = vrot.slane %v712, %v725
        %v727 = vcombine.high %v719, %v719
        %v728 = vcombine.high %v726, %v726
        %v730 = vunpack.c.l.s4 1966171168
        %v731 = vunpack.c.0.s8 %v730
        %v732 = vlaneseq
        %v733 = vshrl.u32 %v732, 7
        %v734 = vsub.s32 %v731, %v733
        %v735 = vrot.slane %v469, %v734
        %v736 = vcombine.high %v735, %v735
        %v738 = vunpack.c.l.s4 1966171168
        %v739 = vunpack.c.0.s8 %v738
        %v740 = vlaneseq
        %v741 = vshrl.u32 %v740, 7
        %v742 = vsub.s32 %v739, %v741
        %v743 = vrot.slane %v735, %v742
        %v745 = vunpack.c.l.s4 1966171168
        %v746 = vunpack.c.0.s8 %v745
        %v747 = vlaneseq
        %v748 = vshrl.u32 %v747, 7
        %v749 = vsub.s32 %v746, %v748
        %v750 = vrot.slane %v736, %v749
        %v751 = vcombine.high %v743, %v743
        %v752 = vcombine.high %v750, %v750
        %v754 = vunpack.c.l.s4 1966171168
        %v755 = vunpack.c.0.s8 %v754
        %v756 = vlaneseq
        %v757 = vshrl.u32 %v756, 7
        %v758 = vsub.s32 %v755, %v757
        %v759 = vrot.slane %v470, %v758
        %v761 = vunpack.c.l.s4 1966171168
        %v762 = vunpack.c.0.s8 %v761
        %v763 = vlaneseq
        %v764 = vshrl.u32 %v763, 7
        %v765 = vsub.s32 %v762, %v764
        %v766 = vrot.slane %v759, %v765
        %v768 = vunpack.c.l.s4 1966171168
        %v769 = vunpack.c.0.s8 %v768
        %v770 = vlaneseq
        %v771 = vshrl.u32 %v770, 7
        %v772 = vsub.s32 %v769, %v771
        %v773 = vrot.slane %v471, %v772
        %v774 = vcombine.high %v773, %v773
        %v776 = vunpack.c.l.s4 1966171168
        %v777 = vunpack.c.0.s8 %v776
        %v778 = vlaneseq
        %v779 = vshrl.u32 %v778, 7
        %v780 = vsub.s32 %v777, %v779
        %v781 = vrot.slane %v773, %v780
        %v783 = vunpack.c.l.s4 1966171168
        %v784 = vunpack.c.0.s8 %v783
        %v785 = vlaneseq
        %v786 = vshrl.u32 %v785, 7
        %v787 = vsub.s32 %v784, %v786
        %v788 = vrot.slane %v774, %v787
        %v789 = vcombine.high %v781, %v781
        %v790 = vcombine.high %v788, %v788
        %v792 = vunpack.c.l.s4 1966171168
        %v793 = vunpack.c.0.s8 %v792
        %v794 = vlaneseq
        %v795 = vshrl.u32 %v794, 7
        %v796 = vsub.s32 %v793, %v795
        %v797 = vrot.slane %v472, %v796
        %v798 = vcombine.high %v797, %v797
        %v800 = vunpack.c.l.s4 1966171168
        %v801 = vunpack.c.0.s8 %v800
        %v802 = vlaneseq
        %v803 = vshrl.u32 %v802, 7
        %v804 = vsub.s32 %v801, %v803
        %v805 = vrot.slane %v797, %v804
        %v807 = vunpack.c.l.s4 1966171168
        %v808 = vunpack.c.0.s8 %v807
        %v809 = vlaneseq
        %v810 = vshrl.u32 %v809, 7
        %v811 = vsub.s32 %v808, %v810
        %v812 = vrot.slane %v798, %v811
        %v813 = vcombine.high %v805, %v805
        %v814 = vcombine.high %v812, %v812
        %v816 = vunpack.c.l.s4 1966171168
        %v817 = vunpack.c.0.s8 %v816
        %v818 = vlaneseq
        %v819 = vshrl.u32 %v818, 7
        %v820 = vsub.s32 %v817, %v819
        %v821 = vrot.slane %v473, %v820
        %v823 = vunpack.c.l.s4 1966171168
        %v824 = vunpack.c.0.s8 %v823
        %v825 = vlaneseq
        %v826 = vshrl.u32 %v825, 7
        %v827 = vsub.s32 %v824, %v826
        %v828 = vrot.slane %v821, %v827
        %v830 = vunpack.c.l.s4 1966171168
        %v831 = vunpack.c.0.s8 %v830
        %v832 = vlaneseq
        %v833 = vshrl.u32 %v832, 7
        %v834 = vsub.s32 %v831, %v833
        %v835 = vrot.slane %v474, %v834
        %v836 = vcombine.high %v835, %v835
        %v838 = vunpack.c.l.s4 1966171168
        %v839 = vunpack.c.0.s8 %v838
        %v840 = vlaneseq
        %v841 = vshrl.u32 %v840, 7
        %v842 = vsub.s32 %v839, %v841
        %v843 = vrot.slane %v835, %v842
        %v845 = vunpack.c.l.s4 1966171168
        %v846 = vunpack.c.0.s8 %v845
        %v847 = vlaneseq
        %v848 = vshrl.u32 %v847, 7
        %v849 = vsub.s32 %v846, %v848
        %v850 = vrot.slane %v836, %v849
        %v851 = vcombine.high %v843, %v843
        %v852 = vcombine.high %v850, %v850
        %v854 = vunpack.c.l.s4 1966171168
        %v855 = vunpack.c.0.s8 %v854
        %v856 = vlaneseq
        %v857 = vshrl.u32 %v856, 7
        %v858 = vsub.s32 %v855, %v857
        %v859 = vrot.slane %v475, %v858
        %v860 = vcombine.high %v859, %v859
        %v862 = vunpack.c.l.s4 1966171168
        %v863 = vunpack.c.0.s8 %v862
        %v864 = vlaneseq
        %v865 = vshrl.u32 %v864, 7
        %v866 = vsub.s32 %v863, %v865
        %v867 = vrot.slane %v859, %v866
        %v869 = vunpack.c.l.s4 1966171168
        %v870 = vunpack.c.0.s8 %v869
        %v871 = vlaneseq
        %v872 = vshrl.u32 %v871, 7
        %v873 = vsub.s32 %v870, %v872
        %v874 = vrot.slane %v860, %v873
        %v875 = vcombine.high %v867, %v867
        %v876 = vcombine.high %v874, %v874
        %v878 = vunpack.c.l.s4 1966171168
        %v879 = vunpack.c.0.s8 %v878
        %v880 = vlaneseq
        %v881 = vshrl.u32 %v880, 7
        %v882 = vsub.s32 %v879, %v881
        %v883 = vrot.slane %v476, %v882
        %v885 = vunpack.c.l.s4 1966171168
        %v886 = vunpack.c.0.s8 %v885
        %v887 = vlaneseq
        %v888 = vshrl.u32 %v887, 7
        %v889 = vsub.s32 %v886, %v888
        %v890 = vrot.slane %v883, %v889
        %v892 = vunpack.c.l.s4 1966171168
        %v893 = vunpack.c.0.s8 %v892
        %v894 = vlaneseq
        %v895 = vshrl.u32 %v894, 7
        %v896 = vsub.s32 %v893, %v895
        %v897 = vrot.slane %v477, %v896
        %v898 = vcombine.high %v897, %v897
        %v900 = vunpack.c.l.s4 1966171168
        %v901 = vunpack.c.0.s8 %v900
        %v902 = vlaneseq
        %v903 = vshrl.u32 %v902, 7
        %v904 = vsub.s32 %v901, %v903
        %v905 = vrot.slane %v897, %v904
        %v907 = vunpack.c.l.s4 1966171168
        %v908 = vunpack.c.0.s8 %v907
        %v909 = vlaneseq
        %v910 = vshrl.u32 %v909, 7
        %v911 = vsub.s32 %v908, %v910
        %v912 = vrot.slane %v898, %v911
        %v913 = vcombine.high %v905, %v905
        %v914 = vcombine.high %v912, %v912
        %v916 = vunpack.c.l.s4 1966171168
        %v917 = vunpack.c.0.s8 %v916
        %v918 = vlaneseq
        %v919 = vshrl.u32 %v918, 7
        %v920 = vsub.s32 %v917, %v919
        %v921 = vrot.slane %v478, %v920
        %v922 = vcombine.high %v921, %v921
        %v924 = vunpack.c.l.s4 1966171168
        %v925 = vunpack.c.0.s8 %v924
        %v926 = vlaneseq
        %v927 = vshrl.u32 %v926, 7
        %v928 = vsub.s32 %v925, %v927
        %v929 = vrot.slane %v921, %v928
        %v931 = vunpack.c.l.s4 1966171168
        %v932 = vunpack.c.0.s8 %v931
        %v933 = vlaneseq
        %v934 = vshrl.u32 %v933, 7
        %v935 = vsub.s32 %v932, %v934
        %v936 = vrot.slane %v922, %v935
        %v937 = vcombine.high %v929, %v929
        %v938 = vcombine.high %v936, %v936
        %v940 = vunpack.c.l.s4 1966171168
        %v941 = vunpack.c.0.s8 %v940
        %v942 = vlaneseq
        %v943 = vshrl.u32 %v942, 7
        %v944 = vsub.s32 %v941, %v943
        %v945 = vrot.slane %v479, %v944
        %v947 = vunpack.c.l.s4 1966171168
        %v948 = vunpack.c.0.s8 %v947
        %v949 = vlaneseq
        %v950 = vshrl.u32 %v949, 7
        %v951 = vsub.s32 %v948, %v950
        %v952 = vrot.slane %v945, %v951
        %v954 = vunpack.c.l.s4 1966171168
        %v955 = vunpack.c.0.s8 %v954
        %v956 = vlaneseq
        %v957 = vshrl.u32 %v956, 7
        %v958 = vsub.s32 %v955, %v957
        %v959 = vrot.slane %v480, %v958
        %v960 = vcombine.high %v959, %v959
        %v962 = vunpack.c.l.s4 1966171168
        %v963 = vunpack.c.0.s8 %v962
        %v964 = vlaneseq
        %v965 = vshrl.u32 %v964, 7
        %v966 = vsub.s32 %v963, %v965
        %v967 = vrot.slane %v959, %v966
        %v969 = vunpack.c.l.s4 1966171168
        %v970 = vunpack.c.0.s8 %v969
        %v971 = vlaneseq
        %v972 = vshrl.u32 %v971, 7
        %v973 = vsub.s32 %v970, %v972
        %v974 = vrot.slane %v960, %v973
        %v975 = vcombine.high %v967, %v967
        %v976 = vcombine.high %v974, %v974
        %v978 = vunpack.c.l.s4 1966171168
        %v979 = vunpack.c.0.s8 %v978
        %v980 = vlaneseq
        %v981 = vshrl.u32 %v980, 7
        %v982 = vsub.s32 %v979, %v981
        %v983 = vrot.slane %v481, %v982
        %v984 = vcombine.high %v983, %v983
        %v986 = vunpack.c.l.s4 1966171168
        %v987 = vunpack.c.0.s8 %v986
        %v988 = vlaneseq
        %v989 = vshrl.u32 %v988, 7
        %v990 = vsub.s32 %v987, %v989
        %v991 = vrot.slane %v983, %v990
        %v993 = vunpack.c.l.s4 1966171168
        %v994 = vunpack.c.0.s8 %v993
        %v995 = vlaneseq
        %v996 = vshrl.u32 %v995, 7
        %v997 = vsub.s32 %v994, %v996
        %v998 = vrot.slane %v984, %v997
        %v999 = vcombine.high %v991, %v991
        %v1000 = vcombine.high %v998, %v998
        %v1002 = vunpack.c.l.s4 1966171168
        %v1003 = vunpack.c.0.s8 %v1002
        %v1004 = vlaneseq
        %v1005 = vshrl.u32 %v1004, 7
        %v1006 = vsub.s32 %v1003, %v1005
        %v1007 = vrot.slane %v482, %v1006
        %v1009 = vunpack.c.l.s4 1966171168
        %v1010 = vunpack.c.0.s8 %v1009
        %v1011 = vlaneseq
        %v1012 = vshrl.u32 %v1011, 7
        %v1013 = vsub.s32 %v1010, %v1012
        %v1014 = vrot.slane %v1007, %v1013
        %v1016 = vunpack.c.l.s4 1966171168
        %v1017 = vunpack.c.0.s8 %v1016
        %v1018 = vlaneseq
        %v1019 = vshrl.u32 %v1018, 7
        %v1020 = vsub.s32 %v1017, %v1019
        %v1021 = vrot.slane %v483, %v1020
        %v1022 = vcombine.high %v1021, %v1021
        %v1024 = vunpack.c.l.s4 1966171168
        %v1025 = vunpack.c.0.s8 %v1024
        %v1026 = vlaneseq
        %v1027 = vshrl.u32 %v1026, 7
        %v1028 = vsub.s32 %v1025, %v1027
        %v1029 = vrot.slane %v1021, %v1028
        %v1031 = vunpack.c.l.s4 1966171168
        %v1032 = vunpack.c.0.s8 %v1031
        %v1033 = vlaneseq
        %v1034 = vshrl.u32 %v1033, 7
        %v1035 = vsub.s32 %v1032, %v1034
        %v1036 = vrot.slane %v1022, %v1035
        %v1037 = vcombine.high %v1029, %v1029
        %v1038 = vcombine.high %v1036, %v1036
        %v1040 = vunpack.c.l.s4 1966171168
        %v1041 = vunpack.c.0.s8 %v1040
        %v1042 = vlaneseq
        %v1043 = vshrl.u32 %v1042, 7
        %v1044 = vsub.s32 %v1041, %v1043
        %v1045 = vrot.slane %v484, %v1044
        %v1046 = vcombine.high %v1045, %v1045
        %v1048 = vunpack.c.l.s4 1966171168
        %v1049 = vunpack.c.0.s8 %v1048
        %v1050 = vlaneseq
        %v1051 = vshrl.u32 %v1050, 7
        %v1052 = vsub.s32 %v1049, %v1051
        %v1053 = vrot.slane %v1045, %v1052
        %v1055 = vunpack.c.l.s4 1966171168
        %v1056 = vunpack.c.0.s8 %v1055
        %v1057 = vlaneseq
        %v1058 = vshrl.u32 %v1057, 7
        %v1059 = vsub.s32 %v1056, %v1058
        %v1060 = vrot.slane %v1046, %v1059
        %v1061 = vcombine.high %v1053, %v1053
        %v1062 = vcombine.high %v1060, %v1060
        %v1064 = vunpack.c.l.s4 1966171168
        %v1065 = vunpack.c.0.s8 %v1064
        %v1066 = vlaneseq
        %v1067 = vshrl.u32 %v1066, 7
        %v1068 = vsub.s32 %v1065, %v1067
        %v1069 = vrot.slane %v485, %v1068
        %v1071 = vunpack.c.l.s4 1966171168
        %v1072 = vunpack.c.0.s8 %v1071
        %v1073 = vlaneseq
        %v1074 = vshrl.u32 %v1073, 7
        %v1075 = vsub.s32 %v1072, %v1074
        %v1076 = vrot.slane %v1069, %v1075
        %v1078 = vunpack.c.l.s4 1966171168
        %v1079 = vunpack.c.0.s8 %v1078
        %v1080 = vlaneseq
        %v1081 = vshrl.u32 %v1080, 7
        %v1082 = vsub.s32 %v1079, %v1081
        %v1083 = vrot.slane %v486, %v1082
        %v1084 = vcombine.high %v1083, %v1083
        %v1086 = vunpack.c.l.s4 1966171168
        %v1087 = vunpack.c.0.s8 %v1086
        %v1088 = vlaneseq
        %v1089 = vshrl.u32 %v1088, 7
        %v1090 = vsub.s32 %v1087, %v1089
        %v1091 = vrot.slane %v1083, %v1090
        %v1093 = vunpack.c.l.s4 1966171168
        %v1094 = vunpack.c.0.s8 %v1093
        %v1095 = vlaneseq
        %v1096 = vshrl.u32 %v1095, 7
        %v1097 = vsub.s32 %v1094, %v1096
        %v1098 = vrot.slane %v1084, %v1097
        %v1099 = vcombine.high %v1091, %v1091
        %v1100 = vcombine.high %v1098, %v1098
        %v1102 = vunpack.c.l.s4 1966171168
        %v1103 = vunpack.c.0.s8 %v1102
        %v1104 = vlaneseq
        %v1105 = vshrl.u32 %v1104, 7
        %v1106 = vsub.s32 %v1103, %v1105
        %v1107 = vrot.slane %v487, %v1106
        %v1108 = vcombine.high %v1107, %v1107
        %v1110 = vunpack.c.l.s4 1966171168
        %v1111 = vunpack.c.0.s8 %v1110
        %v1112 = vlaneseq
        %v1113 = vshrl.u32 %v1112, 7
        %v1114 = vsub.s32 %v1111, %v1113
        %v1115 = vrot.slane %v1107, %v1114
        %v1117 = vunpack.c.l.s4 1966171168
        %v1118 = vunpack.c.0.s8 %v1117
        %v1119 = vlaneseq
        %v1120 = vshrl.u32 %v1119, 7
        %v1121 = vsub.s32 %v1118, %v1120
        %v1122 = vrot.slane %v1108, %v1121
        %v1123 = vcombine.high %v1115, %v1115
        %v1124 = vcombine.high %v1122, %v1122
        %v1126 = vunpack.c.l.s4 1966171168
        %v1127 = vunpack.c.0.s8 %v1126
        %v1128 = vlaneseq
        %v1129 = vshrl.u32 %v1128, 7
        %v1130 = vsub.s32 %v1127, %v1129
        %v1131 = vrot.slane %v488, %v1130
        %v1133 = vunpack.c.l.s4 1966171168
        %v1134 = vunpack.c.0.s8 %v1133
        %v1135 = vlaneseq
        %v1136 = vshrl.u32 %v1135, 7
        %v1137 = vsub.s32 %v1134, %v1136
        %v1138 = vrot.slane %v1131, %v1137
        %v1139 = vld [vmem:[%s1] sm:$0xf]
        %v1140 = vld [vmem:[%s1 + $0x4] sm:$0xf]
        %v1141 = vld [vmem:[%s1 + $0x8] sm:$0xf]
        %v1142 = vld [vmem:[%s1 + $0xc] sm:$0xf]
        %v1143 = vld [vmem:[%s1 + $0x10] sm:$0xf]
        %v1144 = vld [vmem:[%s1 + $0x14] sm:$0xf]
        %v1145 = vld [vmem:[%s1 + $0x18] sm:$0xf]
        %v1146 = vld [vmem:[%s1 + $0x1c] sm:$0xf]
        %v1147 = vld [vmem:[%s1 + $0x20] sm:$0xf]
        %v1148 = vld [vmem:[%s1 + $0x24] sm:$0xf]
        %v1149 = vld [vmem:[%s1 + $0x28] sm:$0xf]
        %v1150 = vld [vmem:[%s1 + $0x2c] sm:$0xf]
        %v1151 = vld [vmem:[%s1 + $0x30] sm:$0xf]
        %v1152 = vld [vmem:[%s1 + $0x34] sm:$0xf]
        %v1153 = vld [vmem:[%s1 + $0x38] sm:$0xf]
        %v1154 = vld [vmem:[%s1 + $0x3c] sm:$0xf]
        %v1155 = vcombine.low %v533, %v540
        %v1156 = vcombine.low %v541, %v542
        %v1157 = vcombine.low %v557, %v564
        %v1158 = vcombine.low %v565, %v566
        %v1160 = vunpack.c.l.s4 1966171168
        %v1161 = vunpack.c.0.s8 %v1160
        %v1162 = vlaneseq
        %v1163 = vshrl.u32 %v1162, 7
        %v1164 = vsub.s32 %v1161, %v1163
        %v1165 = vrot.slane %v1155, %v1164
        %v1167 = vunpack.c.l.s4 1966171168
        %v1168 = vunpack.c.0.s8 %v1167
        %v1169 = vlaneseq
        %v1170 = vshrl.u32 %v1169, 7
        %v1171 = vsub.s32 %v1168, %v1170
        %v1172 = vrot.slane %v1156, %v1171
        %v1174 = vunpack.c.l.s4 1966171168
        %v1175 = vunpack.c.0.s8 %v1174
        %v1176 = vlaneseq
        %v1177 = vshrl.u32 %v1176, 7
        %v1178 = vsub.s32 %v1175, %v1177
        %v1179 = vrot.slane %v1157, %v1178
        %v1181 = vunpack.c.l.s4 1966171168
        %v1182 = vunpack.c.0.s8 %v1181
        %v1183 = vlaneseq
        %v1184 = vshrl.u32 %v1183, 7
        %v1185 = vsub.s32 %v1182, %v1184
        %v1186 = vrot.slane %v1158, %v1185
        %v1187 = vcombine.low %v1165, %v1172
        %v1188 = vcombine.low %v1179, %v1186
        %v1190 = vunpack.c.l.s4 1966171168
        %v1191 = vunpack.c.0.s8 %v1190
        %v1192 = vlaneseq
        %v1193 = vshrl.u32 %v1192, 7
        %v1194 = vsub.s32 %v1191, %v1193
        %v1195 = vrot.slane %v1187, %v1194
        %v1197 = vunpack.c.l.s4 1966171168
        %v1198 = vunpack.c.0.s8 %v1197
        %v1199 = vlaneseq
        %v1200 = vshrl.u32 %v1199, 7
        %v1201 = vsub.s32 %v1198, %v1200
        %v1202 = vrot.slane %v1188, %v1201
        %v1203 = vcombine.low %v1195, %v1202
        %v1204 = vcombine.low %v580, %v595
        %v1205 = vcombine.low %v602, %v603
        %v1206 = vcombine.low %v604, %v619
        %v1207 = vcombine.low %v626, %v627
        %v1209 = vunpack.c.l.s4 1966171168
        %v1210 = vunpack.c.0.s8 %v1209
        %v1211 = vlaneseq
        %v1212 = vshrl.u32 %v1211, 7
        %v1213 = vsub.s32 %v1210, %v1212
        %v1214 = vrot.slane %v1204, %v1213
        %v1216 = vunpack.c.l.s4 1966171168
        %v1217 = vunpack.c.0.s8 %v1216
        %v1218 = vlaneseq
        %v1219 = vshrl.u32 %v1218, 7
        %v1220 = vsub.s32 %v1217, %v1219
        %v1221 = vrot.slane %v1205, %v1220
        %v1223 = vunpack.c.l.s4 1966171168
        %v1224 = vunpack.c.0.s8 %v1223
        %v1225 = vlaneseq
        %v1226 = vshrl.u32 %v1225, 7
        %v1227 = vsub.s32 %v1224, %v1226
        %v1228 = vrot.slane %v1206, %v1227
        %v1230 = vunpack.c.l.s4 1966171168
        %v1231 = vunpack.c.0.s8 %v1230
        %v1232 = vlaneseq
        %v1233 = vshrl.u32 %v1232, 7
        %v1234 = vsub.s32 %v1231, %v1233
        %v1235 = vrot.slane %v1207, %v1234
        %v1236 = vcombine.low %v1214, %v1221
        %v1237 = vcombine.low %v1228, %v1235
        %v1239 = vunpack.c.l.s4 1966171168
        %v1240 = vunpack.c.0.s8 %v1239
        %v1241 = vlaneseq
        %v1242 = vshrl.u32 %v1241, 7
        %v1243 = vsub.s32 %v1240, %v1242
        %v1244 = vrot.slane %v1236, %v1243
        %v1246 = vunpack.c.l.s4 1966171168
        %v1247 = vunpack.c.0.s8 %v1246
        %v1248 = vlaneseq
        %v1249 = vshrl.u32 %v1248, 7
        %v1250 = vsub.s32 %v1247, %v1249
        %v1251 = vrot.slane %v1237, %v1250
        %v1252 = vcombine.low %v1244, %v1251
        %v1253 = vcombine.low %v628, %v642
        %v1254 = vcombine.low %v657, %v664
        %v1255 = vcombine.low %v665, %v666
        %v1256 = vcombine.low %v681, %v688
        %v1258 = vunpack.c.l.s4 1966171168
        %v1259 = vunpack.c.0.s8 %v1258
        %v1260 = vlaneseq
        %v1261 = vshrl.u32 %v1260, 7
        %v1262 = vsub.s32 %v1259, %v1261
        %v1263 = vrot.slane %v1253, %v1262
        %v1265 = vunpack.c.l.s4 1966171168
        %v1266 = vunpack.c.0.s8 %v1265
        %v1267 = vlaneseq
        %v1268 = vshrl.u32 %v1267, 7
        %v1269 = vsub.s32 %v1266, %v1268
        %v1270 = vrot.slane %v1254, %v1269
        %v1272 = vunpack.c.l.s4 1966171168
        %v1273 = vunpack.c.0.s8 %v1272
        %v1274 = vlaneseq
        %v1275 = vshrl.u32 %v1274, 7
        %v1276 = vsub.s32 %v1273, %v1275
        %v1277 = vrot.slane %v1255, %v1276
        %v1279 = vunpack.c.l.s4 1966171168
        %v1280 = vunpack.c.0.s8 %v1279
        %v1281 = vlaneseq
        %v1282 = vshrl.u32 %v1281, 7
        %v1283 = vsub.s32 %v1280, %v1282
        %v1284 = vrot.slane %v1256, %v1283
        %v1285 = vcombine.low %v1263, %v1270
        %v1286 = vcombine.low %v1277, %v1284
        %v1288 = vunpack.c.l.s4 1966171168
        %v1289 = vunpack.c.0.s8 %v1288
        %v1290 = vlaneseq
        %v1291 = vshrl.u32 %v1290, 7
        %v1292 = vsub.s32 %v1289, %v1291
        %v1293 = vrot.slane %v1285, %v1292
        %v1295 = vunpack.c.l.s4 1966171168
        %v1296 = vunpack.c.0.s8 %v1295
        %v1297 = vlaneseq
        %v1298 = vshrl.u32 %v1297, 7
        %v1299 = vsub.s32 %v1296, %v1298
        %v1300 = vrot.slane %v1286, %v1299
        %v1301 = vcombine.low %v1293, %v1300
        %v1302 = vcombine.low %v689, %v690
        %v1303 = vcombine.low %v704, %v719
        %v1304 = vcombine.low %v726, %v727
        %v1305 = vcombine.low %v728, %v743
        %v1307 = vunpack.c.l.s4 1966171168
        %v1308 = vunpack.c.0.s8 %v1307
        %v1309 = vlaneseq
        %v1310 = vshrl.u32 %v1309, 7
        %v1311 = vsub.s32 %v1308, %v1310
        %v1312 = vrot.slane %v1302, %v1311
        %v1314 = vunpack.c.l.s4 1966171168
        %v1315 = vunpack.c.0.s8 %v1314
        %v1316 = vlaneseq
        %v1317 = vshrl.u32 %v1316, 7
        %v1318 = vsub.s32 %v1315, %v1317
        %v1319 = vrot.slane %v1303, %v1318
        %v1321 = vunpack.c.l.s4 1966171168
        %v1322 = vunpack.c.0.s8 %v1321
        %v1323 = vlaneseq
        %v1324 = vshrl.u32 %v1323, 7
        %v1325 = vsub.s32 %v1322, %v1324
        %v1326 = vrot.slane %v1304, %v1325
        %v1328 = vunpack.c.l.s4 1966171168
        %v1329 = vunpack.c.0.s8 %v1328
        %v1330 = vlaneseq
        %v1331 = vshrl.u32 %v1330, 7
        %v1332 = vsub.s32 %v1329, %v1331
        %v1333 = vrot.slane %v1305, %v1332
        %v1334 = vcombine.low %v1312, %v1319
        %v1335 = vcombine.low %v1326, %v1333
        %v1337 = vunpack.c.l.s4 1966171168
        %v1338 = vunpack.c.0.s8 %v1337
        %v1339 = vlaneseq
        %v1340 = vshrl.u32 %v1339, 7
        %v1341 = vsub.s32 %v1338, %v1340
        %v1342 = vrot.slane %v1334, %v1341
        %v1344 = vunpack.c.l.s4 1966171168
        %v1345 = vunpack.c.0.s8 %v1344
        %v1346 = vlaneseq
        %v1347 = vshrl.u32 %v1346, 7
        %v1348 = vsub.s32 %v1345, %v1347
        %v1349 = vrot.slane %v1335, %v1348
        %v1350 = vcombine.low %v1342, %v1349
        %v1351 = vcombine.low %v750, %v751
        %v1352 = vcombine.low %v752, %v766
        %v1353 = vcombine.low %v781, %v788
        %v1354 = vcombine.low %v789, %v790
        %v1356 = vunpack.c.l.s4 1966171168
        %v1357 = vunpack.c.0.s8 %v1356
        %v1358 = vlaneseq
        %v1359 = vshrl.u32 %v1358, 7
        %v1360 = vsub.s32 %v1357, %v1359
        %v1361 = vrot.slane %v1351, %v1360
        %v1363 = vunpack.c.l.s4 1966171168
        %v1364 = vunpack.c.0.s8 %v1363
        %v1365 = vlaneseq
        %v1366 = vshrl.u32 %v1365, 7
        %v1367 = vsub.s32 %v1364, %v1366
        %v1368 = vrot.slane %v1352, %v1367
        %v1370 = vunpack.c.l.s4 1966171168
        %v1371 = vunpack.c.0.s8 %v1370
        %v1372 = vlaneseq
        %v1373 = vshrl.u32 %v1372, 7
        %v1374 = vsub.s32 %v1371, %v1373
        %v1375 = vrot.slane %v1353, %v1374
        %v1377 = vunpack.c.l.s4 1966171168
        %v1378 = vunpack.c.0.s8 %v1377
        %v1379 = vlaneseq
        %v1380 = vshrl.u32 %v1379, 7
        %v1381 = vsub.s32 %v1378, %v1380
        %v1382 = vrot.slane %v1354, %v1381
        %v1383 = vcombine.low %v1361, %v1368
        %v1384 = vcombine.low %v1375, %v1382
        %v1386 = vunpack.c.l.s4 1966171168
        %v1387 = vunpack.c.0.s8 %v1386
        %v1388 = vlaneseq
        %v1389 = vshrl.u32 %v1388, 7
        %v1390 = vsub.s32 %v1387, %v1389
        %v1391 = vrot.slane %v1383, %v1390
        %v1393 = vunpack.c.l.s4 1966171168
        %v1394 = vunpack.c.0.s8 %v1393
        %v1395 = vlaneseq
        %v1396 = vshrl.u32 %v1395, 7
        %v1397 = vsub.s32 %v1394, %v1396
        %v1398 = vrot.slane %v1384, %v1397
        %v1399 = vcombine.low %v1391, %v1398
        %v1400 = vcombine.low %v805, %v812
        %v1401 = vcombine.low %v813, %v814
        %v1402 = vcombine.low %v828, %v843
        %v1403 = vcombine.low %v850, %v851
        %v1405 = vunpack.c.l.s4 1966171168
        %v1406 = vunpack.c.0.s8 %v1405
        %v1407 = vlaneseq
        %v1408 = vshrl.u32 %v1407, 7
        %v1409 = vsub.s32 %v1406, %v1408
        %v1410 = vrot.slane %v1400, %v1409
        %v1412 = vunpack.c.l.s4 1966171168
        %v1413 = vunpack.c.0.s8 %v1412
        %v1414 = vlaneseq
        %v1415 = vshrl.u32 %v1414, 7
        %v1416 = vsub.s32 %v1413, %v1415
        %v1417 = vrot.slane %v1401, %v1416
        %v1419 = vunpack.c.l.s4 1966171168
        %v1420 = vunpack.c.0.s8 %v1419
        %v1421 = vlaneseq
        %v1422 = vshrl.u32 %v1421, 7
        %v1423 = vsub.s32 %v1420, %v1422
        %v1424 = vrot.slane %v1402, %v1423
        %v1426 = vunpack.c.l.s4 1966171168
        %v1427 = vunpack.c.0.s8 %v1426
        %v1428 = vlaneseq
        %v1429 = vshrl.u32 %v1428, 7
        %v1430 = vsub.s32 %v1427, %v1429
        %v1431 = vrot.slane %v1403, %v1430
        %v1432 = vcombine.low %v1410, %v1417
        %v1433 = vcombine.low %v1424, %v1431
        %v1435 = vunpack.c.l.s4 1966171168
        %v1436 = vunpack.c.0.s8 %v1435
        %v1437 = vlaneseq
        %v1438 = vshrl.u32 %v1437, 7
        %v1439 = vsub.s32 %v1436, %v1438
        %v1440 = vrot.slane %v1432, %v1439
        %v1442 = vunpack.c.l.s4 1966171168
        %v1443 = vunpack.c.0.s8 %v1442
        %v1444 = vlaneseq
        %v1445 = vshrl.u32 %v1444, 7
        %v1446 = vsub.s32 %v1443, %v1445
        %v1447 = vrot.slane %v1433, %v1446
        %v1448 = vcombine.low %v1440, %v1447
        %v1449 = vcombine.low %v852, %v867
        %v1450 = vcombine.low %v874, %v875
        %v1451 = vcombine.low %v876, %v890
        %v1452 = vcombine.low %v905, %v912
        %v1454 = vunpack.c.l.s4 1966171168
        %v1455 = vunpack.c.0.s8 %v1454
        %v1456 = vlaneseq
        %v1457 = vshrl.u32 %v1456, 7
        %v1458 = vsub.s32 %v1455, %v1457
        %v1459 = vrot.slane %v1449, %v1458
        %v1461 = vunpack.c.l.s4 1966171168
        %v1462 = vunpack.c.0.s8 %v1461
        %v1463 = vlaneseq
        %v1464 = vshrl.u32 %v1463, 7
        %v1465 = vsub.s32 %v1462, %v1464
        %v1466 = vrot.slane %v1450, %v1465
        %v1468 = vunpack.c.l.s4 1966171168
        %v1469 = vunpack.c.0.s8 %v1468
        %v1470 = vlaneseq
        %v1471 = vshrl.u32 %v1470, 7
        %v1472 = vsub.s32 %v1469, %v1471
        %v1473 = vrot.slane %v1451, %v1472
        %v1475 = vunpack.c.l.s4 1966171168
        %v1476 = vunpack.c.0.s8 %v1475
        %v1477 = vlaneseq
        %v1478 = vshrl.u32 %v1477, 7
        %v1479 = vsub.s32 %v1476, %v1478
        %v1480 = vrot.slane %v1452, %v1479
        %v1481 = vcombine.low %v1459, %v1466
        %v1482 = vcombine.low %v1473, %v1480
        %v1484 = vunpack.c.l.s4 1966171168
        %v1485 = vunpack.c.0.s8 %v1484
        %v1486 = vlaneseq
        %v1487 = vshrl.u32 %v1486, 7
        %v1488 = vsub.s32 %v1485, %v1487
        %v1489 = vrot.slane %v1481, %v1488
        %v1491 = vunpack.c.l.s4 1966171168
        %v1492 = vunpack.c.0.s8 %v1491
        %v1493 = vlaneseq
        %v1494 = vshrl.u32 %v1493, 7
        %v1495 = vsub.s32 %v1492, %v1494
        %v1496 = vrot.slane %v1482, %v1495
        %v1497 = vcombine.low %v1489, %v1496
        %v1498 = vcombine.low %v913, %v914
        %v1499 = vcombine.low %v929, %v936
        %v1500 = vcombine.low %v937, %v938
        %v1501 = vcombine.low %v952, %v967
        %v1503 = vunpack.c.l.s4 1966171168
        %v1504 = vunpack.c.0.s8 %v1503
        %v1505 = vlaneseq
        %v1506 = vshrl.u32 %v1505, 7
        %v1507 = vsub.s32 %v1504, %v1506
        %v1508 = vrot.slane %v1498, %v1507
        %v1510 = vunpack.c.l.s4 1966171168
        %v1511 = vunpack.c.0.s8 %v1510
        %v1512 = vlaneseq
        %v1513 = vshrl.u32 %v1512, 7
        %v1514 = vsub.s32 %v1511, %v1513
        %v1515 = vrot.slane %v1499, %v1514
        %v1517 = vunpack.c.l.s4 1966171168
        %v1518 = vunpack.c.0.s8 %v1517
        %v1519 = vlaneseq
        %v1520 = vshrl.u32 %v1519, 7
        %v1521 = vsub.s32 %v1518, %v1520
        %v1522 = vrot.slane %v1500, %v1521
        %v1524 = vunpack.c.l.s4 1966171168
        %v1525 = vunpack.c.0.s8 %v1524
        %v1526 = vlaneseq
        %v1527 = vshrl.u32 %v1526, 7
        %v1528 = vsub.s32 %v1525, %v1527
        %v1529 = vrot.slane %v1501, %v1528
        %v1530 = vcombine.low %v1508, %v1515
        %v1531 = vcombine.low %v1522, %v1529
        %v1533 = vunpack.c.l.s4 1966171168
        %v1534 = vunpack.c.0.s8 %v1533
        %v1535 = vlaneseq
        %v1536 = vshrl.u32 %v1535, 7
        %v1537 = vsub.s32 %v1534, %v1536
        %v1538 = vrot.slane %v1530, %v1537
        %v1540 = vunpack.c.l.s4 1966171168
        %v1541 = vunpack.c.0.s8 %v1540
        %v1542 = vlaneseq
        %v1543 = vshrl.u32 %v1542, 7
        %v1544 = vsub.s32 %v1541, %v1543
        %v1545 = vrot.slane %v1531, %v1544
        %v1546 = vcombine.low %v1538, %v1545
        %v1547 = vcombine.low %v974, %v975
        %v1548 = vcombine.low %v976, %v991
        %v1549 = vcombine.low %v998, %v999
        %v1550 = vcombine.low %v1000, %v1014
        %v1552 = vunpack.c.l.s4 1966171168
        %v1553 = vunpack.c.0.s8 %v1552
        %v1554 = vlaneseq
        %v1555 = vshrl.u32 %v1554, 7
        %v1556 = vsub.s32 %v1553, %v1555
        %v1557 = vrot.slane %v1547, %v1556
        %v1559 = vunpack.c.l.s4 1966171168
        %v1560 = vunpack.c.0.s8 %v1559
        %v1561 = vlaneseq
        %v1562 = vshrl.u32 %v1561, 7
        %v1563 = vsub.s32 %v1560, %v1562
        %v1564 = vrot.slane %v1548, %v1563
        %v1566 = vunpack.c.l.s4 1966171168
        %v1567 = vunpack.c.0.s8 %v1566
        %v1568 = vlaneseq
        %v1569 = vshrl.u32 %v1568, 7
        %v1570 = vsub.s32 %v1567, %v1569
        %v1571 = vrot.slane %v1549, %v1570
        %v1573 = vunpack.c.l.s4 1966171168
        %v1574 = vunpack.c.0.s8 %v1573
        %v1575 = vlaneseq
        %v1576 = vshrl.u32 %v1575, 7
        %v1577 = vsub.s32 %v1574, %v1576
        %v1578 = vrot.slane %v1550, %v1577
        %v1579 = vcombine.low %v1557, %v1564
        %v1580 = vcombine.low %v1571, %v1578
        %v1582 = vunpack.c.l.s4 1966171168
        %v1583 = vunpack.c.0.s8 %v1582
        %v1584 = vlaneseq
        %v1585 = vshrl.u32 %v1584, 7
        %v1586 = vsub.s32 %v1583, %v1585
        %v1587 = vrot.slane %v1579, %v1586
        %v1589 = vunpack.c.l.s4 1966171168
        %v1590 = vunpack.c.0.s8 %v1589
        %v1591 = vlaneseq
        %v1592 = vshrl.u32 %v1591, 7
        %v1593 = vsub.s32 %v1590, %v1592
        %v1594 = vrot.slane %v1580, %v1593
        %v1595 = vcombine.low %v1587, %v1594
        %v1596 = vcombine.low %v1029, %v1036
        %v1597 = vcombine.low %v1037, %v1038
        %v1598 = vcombine.low %v1053, %v1060
        %v1599 = vcombine.low %v1061, %v1062
        %v1601 = vunpack.c.l.s4 1966171168
        %v1602 = vunpack.c.0.s8 %v1601
        %v1603 = vlaneseq
        %v1604 = vshrl.u32 %v1603, 7
        %v1605 = vsub.s32 %v1602, %v1604
        %v1606 = vrot.slane %v1596, %v1605
        %v1608 = vunpack.c.l.s4 1966171168
        %v1609 = vunpack.c.0.s8 %v1608
        %v1610 = vlaneseq
        %v1611 = vshrl.u32 %v1610, 7
        %v1612 = vsub.s32 %v1609, %v1611
        %v1613 = vrot.slane %v1597, %v1612
        %v1615 = vunpack.c.l.s4 1966171168
        %v1616 = vunpack.c.0.s8 %v1615
        %v1617 = vlaneseq
        %v1618 = vshrl.u32 %v1617, 7
        %v1619 = vsub.s32 %v1616, %v1618
        %v1620 = vrot.slane %v1598, %v1619
        %v1622 = vunpack.c.l.s4 1966171168
        %v1623 = vunpack.c.0.s8 %v1622
        %v1624 = vlaneseq
        %v1625 = vshrl.u32 %v1624, 7
        %v1626 = vsub.s32 %v1623, %v1625
        %v1627 = vrot.slane %v1599, %v1626
        %v1628 = vcombine.low %v1606, %v1613
        %v1629 = vcombine.low %v1620, %v1627
        %v1631 = vunpack.c.l.s4 1966171168
        %v1632 = vunpack.c.0.s8 %v1631
        %v1633 = vlaneseq
        %v1634 = vshrl.u32 %v1633, 7
        %v1635 = vsub.s32 %v1632, %v1634
        %v1636 = vrot.slane %v1628, %v1635
        %v1638 = vunpack.c.l.s4 1966171168
        %v1639 = vunpack.c.0.s8 %v1638
        %v1640 = vlaneseq
        %v1641 = vshrl.u32 %v1640, 7
        %v1642 = vsub.s32 %v1639, %v1641
        %v1643 = vrot.slane %v1629, %v1642
        %v1644 = vcombine.low %v1636, %v1643
        %v1645 = vcombine.low %v1076, %v1091
        %v1646 = vcombine.low %v1098, %v1099
        %v1647 = vcombine.low %v1100, %v1115
        %v1648 = vcombine.low %v1122, %v1123
        %v1650 = vunpack.c.l.s4 1966171168
        %v1651 = vunpack.c.0.s8 %v1650
        %v1652 = vlaneseq
        %v1653 = vshrl.u32 %v1652, 7
        %v1654 = vsub.s32 %v1651, %v1653
        %v1655 = vrot.slane %v1645, %v1654
        %v1657 = vunpack.c.l.s4 1966171168
        %v1658 = vunpack.c.0.s8 %v1657
        %v1659 = vlaneseq
        %v1660 = vshrl.u32 %v1659, 7
        %v1661 = vsub.s32 %v1658, %v1660
        %v1662 = vrot.slane %v1646, %v1661
        %v1664 = vunpack.c.l.s4 1966171168
        %v1665 = vunpack.c.0.s8 %v1664
        %v1666 = vlaneseq
        %v1667 = vshrl.u32 %v1666, 7
        %v1668 = vsub.s32 %v1665, %v1667
        %v1669 = vrot.slane %v1647, %v1668
        %v1671 = vunpack.c.l.s4 1966171168
        %v1672 = vunpack.c.0.s8 %v1671
        %v1673 = vlaneseq
        %v1674 = vshrl.u32 %v1673, 7
        %v1675 = vsub.s32 %v1672, %v1674
        %v1676 = vrot.slane %v1648, %v1675
        %v1677 = vcombine.low %v1655, %v1662
        %v1678 = vcombine.low %v1669, %v1676
        %v1680 = vunpack.c.l.s4 1966171168
        %v1681 = vunpack.c.0.s8 %v1680
        %v1682 = vlaneseq
        %v1683 = vshrl.u32 %v1682, 7
        %v1684 = vsub.s32 %v1681, %v1683
        %v1685 = vrot.slane %v1677, %v1684
        %v1687 = vunpack.c.l.s4 1966171168
        %v1688 = vunpack.c.0.s8 %v1687
        %v1689 = vlaneseq
        %v1690 = vshrl.u32 %v1689, 7
        %v1691 = vsub.s32 %v1688, %v1690
        %v1692 = vrot.slane %v1678, %v1691
        %v1693 = vcombine.low %v1685, %v1692
        %v1694 = vcombine.low %v1124, %v1138
        %v1696 = vunpack.c.l.s4 1966171168
        %v1697 = vunpack.c.0.s8 %v1696
        %v1698 = vlaneseq
        %v1699 = vshrl.u32 %v1698, 7
        %v1700 = vsub.s32 %v1697, %v1699
        %v1701 = vrot.slane %v1694, %v1700
        %v1703 = vunpack.c.l.s4 1966171168
        %v1704 = vunpack.c.0.s8 %v1703
        %v1705 = vlaneseq
        %v1706 = vshrl.u32 %v1705, 7
        %v1707 = vsub.s32 %v1704, %v1706
        %v1708 = vrot.slane %v1701, %v1707
        %v1737 = vunpack.c.l.b16 %v1139
        %v1738 = vunpack.c.l.b16 %v1140
        %v1739 = vunpack.c.l.b16 %v1141
        %v1740 = vunpack.c.l.b16 %v1142
        %v1741 = vunpack.c.l.b16 %v1143
        %v1742 = vunpack.c.l.b16 %v1144
        %v1743 = vunpack.c.l.b16 %v1145
        %v1744 = vunpack.c.l.b16 %v1146
        %v1745 = vunpack.c.l.b16 %v1147
        %v1746 = vunpack.c.l.b16 %v1148
        %v1747 = vunpack.c.l.b16 %v1149
        %v1748 = vunpack.c.l.b16 %v1150
        %v1749 = vunpack.c.l.b16 %v1151
        %v1750 = vunpack.c.l.b16 %v1152
        %v1751 = vunpack.c.l.b16 %v1153
        %v1752 = vunpack.c.l.b16 %v1154
        %v1753 = vpack.c.b16 %v1738, %v1737
        %v1754 = vpack.c.b16 %v1740, %v1739
        %v1755 = vpack.c.b16 %v1742, %v1741
        %v1756 = vpack.c.b16 %v1744, %v1743
        %v1757 = vpack.c.b16 %v1746, %v1745
        %v1758 = vpack.c.b16 %v1748, %v1747
        %v1759 = vpack.c.b16 %v1750, %v1749
        %v1760 = vpack.c.b16 %v1752, %v1751
        %1769 = vmatprep.subr.bf16.mxu0 0
        %1770 = vmatpush1.bf16.msra.mxu0 %v1753
        %1771 = vmatprep.subr.bf16.mxu0 0
        %1772 = vmatpush1.bf16.msra.mxu0 %v1754
        %1773 = vmatprep.subr.bf16.mxu0 0
        %1774 = vmatpush1.bf16.msra.mxu0 %v1755
        %1775 = vmatprep.subr.bf16.mxu0 0
        %1776 = vmatpush1.bf16.msra.mxu0 %v1756
        %1777 = vmatprep.subr.bf16.mxu0 0
        %1778 = vmatpush1.bf16.msra.mxu0 %v1757
        %1779 = vmatprep.subr.bf16.mxu0 0
        %1780 = vmatpush1.bf16.msra.mxu0 %v1758
        %1781 = vmatprep.subr.bf16.mxu0 0
        %1782 = vmatpush1.bf16.msra.mxu0 %v1759
        %1783 = vmatprep.subr.bf16.mxu0 0
        %1784 = vmatpush1.bf16.msra.mxu0 %v1760
        %1785 = vmatprep.subr.bf16.mxu0 0
        %1786 = vmatpush1.bf16.msra.mxu0 0
        %1787 = vmatprep.subr.bf16.mxu0 0
        %1788 = vmatpush1.bf16.msra.mxu0 0
        %1789 = vmatprep.subr.bf16.mxu0 0
        %1790 = vmatpush1.bf16.msra.mxu0 0
        %1791 = vmatprep.subr.bf16.mxu0 0
        %1792 = vmatpush1.bf16.msra.mxu0 0
        %1793 = vmatprep.subr.bf16.mxu0 0
        %1794 = vmatpush1.bf16.msra.mxu0 0
        %1795 = vmatprep.subr.bf16.mxu0 0
        %1796 = vmatpush1.bf16.msra.mxu0 0
        %1797 = vmatprep.subr.bf16.mxu0 0
        %1798 = vmatpush1.bf16.msra.mxu0 0
        %1799 = vmatprep.subr.bf16.mxu0 0
        %1800 = vmatpush1.bf16.msra.mxu0 0
        %1801 = vmatprep.mubr.bf16.mxu0 0
        %1802 = vmatmul.mubr.bf16.gmra.mrb[0].mxu0 %v1203
        %v1803 = vpop.f32.mrb[0].mxu0
        %v1804 = vadd.f32 0.0, %v1803
        %v1805 = vpop.f32.mrb[0].mxu0
        %v1806 = vpop.f32.mrb[0].mxu0
        %v1807 = vadd.f32 0.0, %v1806
        %v1808 = vpop.f32.mrb[0].mxu0
        %1809 = vmatprep.mubr.bf16.mxu0 0
        %1810 = vmatmul.mubr.bf16.gmra.mrb[0].mxu0 %v1252
        %v1811 = vpop.f32.mrb[0].mxu0
        %v1812 = vadd.f32 0.0, %v1811
        %v1813 = vpop.f32.mrb[0].mxu0
        %v1814 = vpop.f32.mrb[0].mxu0
        %v1815 = vadd.f32 0.0, %v1814
        %v1816 = vpop.f32.mrb[0].mxu0
        %1817 = vmatprep.mubr.bf16.mxu0 0
        %1818 = vmatmul.mubr.bf16.gmra.mrb[0].mxu0 %v1301
        %v1819 = vpop.f32.mrb[0].mxu0
        %v1820 = vadd.f32 0.0, %v1819
        %v1821 = vpop.f32.mrb[0].mxu0
        %v1822 = vpop.f32.mrb[0].mxu0
        %v1823 = vadd.f32 0.0, %v1822
        %v1824 = vpop.f32.mrb[0].mxu0
        %1825 = vmatprep.mubr.bf16.mxu0 0
        %1826 = vmatmul.mubr.bf16.gmra.mrb[0].mxu0 %v1350
        %v1827 = vpop.f32.mrb[0].mxu0
        %v1828 = vadd.f32 0.0, %v1827
        %v1829 = vpop.f32.mrb[0].mxu0
        %v1830 = vpop.f32.mrb[0].mxu0
        %v1831 = vadd.f32 0.0, %v1830
        %v1832 = vpop.f32.mrb[0].mxu0
        %1833 = vmatprep.mubr.bf16.mxu0 0
        %1834 = vmatmul.mubr.bf16.gmra.mrb[0].mxu0 %v1399
        %v1835 = vpop.f32.mrb[0].mxu0
        %v1836 = vadd.f32 0.0, %v1835
        %v1837 = vpop.f32.mrb[0].mxu0
        %v1838 = vpop.f32.mrb[0].mxu0
        %v1839 = vadd.f32 0.0, %v1838
        %v1840 = vpop.f32.mrb[0].mxu0
        %1841 = vmatprep.mubr.bf16.mxu0 0
        %1842 = vmatmul.mubr.bf16.gmra.mrb[0].mxu0 %v1448
        %v1843 = vpop.f32.mrb[0].mxu0
        %v1844 = vadd.f32 0.0, %v1843
        %v1845 = vpop.f32.mrb[0].mxu0
        %v1846 = vpop.f32.mrb[0].mxu0
        %v1847 = vadd.f32 0.0, %v1846
        %v1848 = vpop.f32.mrb[0].mxu0
        %1849 = vmatprep.mubr.bf16.mxu0 0
        %1850 = vmatmul.mubr.bf16.gmra.mrb[0].mxu0 %v1497
        %v1851 = vpop.f32.mrb[0].mxu0
        %v1852 = vadd.f32 0.0, %v1851
        %v1853 = vpop.f32.mrb[0].mxu0
        %v1854 = vpop.f32.mrb[0].mxu0
        %v1855 = vadd.f32 0.0, %v1854
        %v1856 = vpop.f32.mrb[0].mxu0
        %1857 = vmatprep.mubr.bf16.mxu0 0
        %1858 = vmatmul.mubr.bf16.gmra.mrb[0].mxu0 %v1546
        %v1859 = vpop.f32.mrb[0].mxu0
        %v1860 = vadd.f32 0.0, %v1859
        %v1861 = vpop.f32.mrb[0].mxu0
        %v1862 = vpop.f32.mrb[0].mxu0
        %v1863 = vadd.f32 0.0, %v1862
        %v1864 = vpop.f32.mrb[0].mxu0
        %1865 = vmatprep.mubr.bf16.mxu0 0
        %1866 = vmatmul.mubr.bf16.gmra.mrb[0].mxu0 %v1595
        %v1867 = vpop.f32.mrb[0].mxu0
        %v1868 = vadd.f32 0.0, %v1867
        %v1869 = vpop.f32.mrb[0].mxu0
        %v1870 = vpop.f32.mrb[0].mxu0
        %v1871 = vadd.f32 0.0, %v1870
        %v1872 = vpop.f32.mrb[0].mxu0
        %1873 = vmatprep.mubr.bf16.mxu0 0
        %1874 = vmatmul.mubr.bf16.gmra.mrb[0].mxu0 %v1644
        %v1875 = vpop.f32.mrb[0].mxu0
        %v1876 = vadd.f32 0.0, %v1875
        %v1877 = vpop.f32.mrb[0].mxu0
        %v1878 = vpop.f32.mrb[0].mxu0
        %v1879 = vadd.f32 0.0, %v1878
        %v1880 = vpop.f32.mrb[0].mxu0
        %1881 = vmatprep.mubr.bf16.mxu0 0
        %1882 = vmatmul.mubr.bf16.gmra.mrb[0].mxu0 %v1693
        %v1883 = vpop.f32.mrb[0].mxu0
        %v1884 = vadd.f32 0.0, %v1883
        %v1885 = vpop.f32.mrb[0].mxu0
        %v1886 = vpop.f32.mrb[0].mxu0
        %v1887 = vadd.f32 0.0, %v1886
        %v1888 = vpop.f32.mrb[0].mxu0
        %1889 = vmatprep.mubr.bf16.mxu0 0
        %1890 = vmatmul.mubr.bf16.gmra.mrb[0].mxu0 %v1708
        %v1891 = vpop.f32.mrb[0].mxu0
        %v1892 = vadd.f32 0.0, %v1891
        %v1893 = vpop.f32.mrb[0].mxu0
        %v1894 = vpop.f32.mrb[0].mxu0
        %v1895 = vpop.f32.mrb[0].mxu0
        %1896 = vdwg.mxu0
        %v1897 = vld [vmem:[%s2] sm:$0x1]
        %v1899 = vlaneseq
        %v1900 = vshrl.u32 %v1899, 7
        %v1901 = vsub.s32 0, %v1900
        %v1902 = vrot.slane %v1897, %v1901
        %v1904 = vmul.f32 %v1804, %v1902
        %v1905 = vmul.f32 %v1807, %v1902
        %v1906 = vmul.f32 %v1812, %v1902
        %v1907 = vmul.f32 %v1815, %v1902
        %v1908 = vmul.f32 %v1820, %v1902
        %v1909 = vmul.f32 %v1823, %v1902
        %v1910 = vmul.f32 %v1828, %v1902
        %v1911 = vmul.f32 %v1831, %v1902
        %v1912 = vmul.f32 %v1836, %v1902
        %v1913 = vmul.f32 %v1839, %v1902
        %v1914 = vmul.f32 %v1844, %v1902
        %v1915 = vmul.f32 %v1847, %v1902
        %v1916 = vmul.f32 %v1852, %v1902
        %v1917 = vmul.f32 %v1855, %v1902
        %v1918 = vmul.f32 %v1860, %v1902
        %v1919 = vmul.f32 %v1863, %v1902
        %v1920 = vmul.f32 %v1868, %v1902
        %v1921 = vmul.f32 %v1871, %v1902
        %v1922 = vmul.f32 %v1876, %v1902
        %v1923 = vmul.f32 %v1879, %v1902
        %v1924 = vmul.f32 %v1884, %v1902
        %v1925 = vmul.f32 %v1887, %v1902
        %v1926 = vmul.f32 %v1892, %v1902
        %v1927 = vld [vmem:[%s3] sm:$0x1]
        %v1929 = vlaneseq
        %v1930 = vshrl.u32 %v1929, 7
        %v1931 = vsub.s32 0, %v1930
        %v1932 = vrot.slane %v1927, %v1931
        %v1934 = vadd.f32 %v1904, %v1932
        %v1935 = vadd.f32 %v1905, %v1932
        %v1936 = vadd.f32 %v1906, %v1932
        %v1937 = vadd.f32 %v1907, %v1932
        %v1938 = vadd.f32 %v1908, %v1932
        %v1939 = vadd.f32 %v1909, %v1932
        %v1940 = vadd.f32 %v1910, %v1932
        %v1941 = vadd.f32 %v1911, %v1932
        %v1942 = vadd.f32 %v1912, %v1932
        %v1943 = vadd.f32 %v1913, %v1932
        %v1944 = vadd.f32 %v1914, %v1932
        %v1945 = vadd.f32 %v1915, %v1932
        %v1946 = vadd.f32 %v1916, %v1932
        %v1947 = vadd.f32 %v1917, %v1932
        %v1948 = vadd.f32 %v1918, %v1932
        %v1949 = vadd.f32 %v1919, %v1932
        %v1950 = vadd.f32 %v1920, %v1932
        %v1951 = vadd.f32 %v1921, %v1932
        %v1952 = vadd.f32 %v1922, %v1932
        %v1953 = vadd.f32 %v1923, %v1932
        %v1954 = vadd.f32 %v1924, %v1932
        %v1955 = vadd.f32 %v1925, %v1932
        %v1956 = vadd.f32 %v1926, %v1932
        %v1957 = vmax.f32 %v1934, 0.0
        %v1958 = vmax.f32 %v1935, 0.0
        %v1959 = vmax.f32 %v1936, 0.0
        %v1960 = vmax.f32 %v1937, 0.0
        %v1961 = vmax.f32 %v1938, 0.0
        %v1962 = vmax.f32 %v1939, 0.0
        %v1963 = vmax.f32 %v1940, 0.0
        %v1964 = vmax.f32 %v1941, 0.0
        %v1965 = vmax.f32 %v1942, 0.0
        %v1966 = vmax.f32 %v1943, 0.0
        %v1967 = vmax.f32 %v1944, 0.0
        %v1968 = vmax.f32 %v1945, 0.0
        %v1969 = vmax.f32 %v1946, 0.0
        %v1970 = vmax.f32 %v1947, 0.0
        %v1971 = vmax.f32 %v1948, 0.0
        %v1972 = vmax.f32 %v1949, 0.0
        %v1973 = vmax.f32 %v1950, 0.0
        %v1974 = vmax.f32 %v1951, 0.0
        %v1975 = vmax.f32 %v1952, 0.0
        %v1976 = vmax.f32 %v1953, 0.0
        %v1977 = vmax.f32 %v1954, 0.0
        %v1978 = vmax.f32 %v1955, 0.0
        %v1979 = vmax.f32 %v1956, 0.0
        %v2003 = vcombine.high %v1957, %v1957
        %v2005 = vunpack.c.l.s4 1983009808
        %v2006 = vunpack.c.0.s8 %v2005
        %v2007 = vlaneseq
        %v2008 = vshrl.u32 %v2007, 7
        %v2009 = vsub.s32 %v2006, %v2008
        %v2010 = vrot.slane %v1957, %v2009
        %v2012 = vunpack.c.l.s4 1983009808
        %v2013 = vunpack.c.0.s8 %v2012
        %v2014 = vlaneseq
        %v2015 = vshrl.u32 %v2014, 7
        %v2016 = vsub.s32 %v2013, %v2015
        %v2017 = vrot.slane %v2003, %v2016
        %v2018 = vcombine.high %v2010, %v2010
        %v2019 = vcombine.high %v2017, %v2017
        %v2020 = vcombine.high %v1958, %v1958
        %v2022 = vunpack.c.l.s4 1983009808
        %v2023 = vunpack.c.0.s8 %v2022
        %v2024 = vlaneseq
        %v2025 = vshrl.u32 %v2024, 7
        %v2026 = vsub.s32 %v2023, %v2025
        %v2027 = vrot.slane %v1958, %v2026
        %v2029 = vunpack.c.l.s4 1983009808
        %v2030 = vunpack.c.0.s8 %v2029
        %v2031 = vlaneseq
        %v2032 = vshrl.u32 %v2031, 7
        %v2033 = vsub.s32 %v2030, %v2032
        %v2034 = vrot.slane %v2020, %v2033
        %v2035 = vcombine.high %v2027, %v2027
        %v2036 = vcombine.high %v2034, %v2034
        %v2037 = vcombine.high %v1959, %v1959
        %v2039 = vunpack.c.l.s4 1983009808
        %v2040 = vunpack.c.0.s8 %v2039
        %v2041 = vlaneseq
        %v2042 = vshrl.u32 %v2041, 7
        %v2043 = vsub.s32 %v2040, %v2042
        %v2044 = vrot.slane %v1959, %v2043
        %v2046 = vunpack.c.l.s4 1983009808
        %v2047 = vunpack.c.0.s8 %v2046
        %v2048 = vlaneseq
        %v2049 = vshrl.u32 %v2048, 7
        %v2050 = vsub.s32 %v2047, %v2049
        %v2051 = vrot.slane %v2037, %v2050
        %v2052 = vcombine.high %v2044, %v2044
        %v2053 = vcombine.high %v2051, %v2051
        %v2054 = vcombine.high %v1960, %v1960
        %v2056 = vunpack.c.l.s4 1983009808
        %v2057 = vunpack.c.0.s8 %v2056
        %v2058 = vlaneseq
        %v2059 = vshrl.u32 %v2058, 7
        %v2060 = vsub.s32 %v2057, %v2059
        %v2061 = vrot.slane %v1960, %v2060
        %v2063 = vunpack.c.l.s4 1983009808
        %v2064 = vunpack.c.0.s8 %v2063
        %v2065 = vlaneseq
        %v2066 = vshrl.u32 %v2065, 7
        %v2067 = vsub.s32 %v2064, %v2066
        %v2068 = vrot.slane %v2054, %v2067
        %v2069 = vcombine.high %v2061, %v2061
        %v2070 = vcombine.high %v2068, %v2068
        %v2071 = vcombine.high %v1961, %v1961
        %v2073 = vunpack.c.l.s4 1983009808
        %v2074 = vunpack.c.0.s8 %v2073
        %v2075 = vlaneseq
        %v2076 = vshrl.u32 %v2075, 7
        %v2077 = vsub.s32 %v2074, %v2076
        %v2078 = vrot.slane %v1961, %v2077
        %v2080 = vunpack.c.l.s4 1983009808
        %v2081 = vunpack.c.0.s8 %v2080
        %v2082 = vlaneseq
        %v2083 = vshrl.u32 %v2082, 7
        %v2084 = vsub.s32 %v2081, %v2083
        %v2085 = vrot.slane %v2071, %v2084
        %v2086 = vcombine.high %v2078, %v2078
        %v2087 = vcombine.high %v2085, %v2085
        %v2088 = vcombine.high %v1962, %v1962
        %v2090 = vunpack.c.l.s4 1983009808
        %v2091 = vunpack.c.0.s8 %v2090
        %v2092 = vlaneseq
        %v2093 = vshrl.u32 %v2092, 7
        %v2094 = vsub.s32 %v2091, %v2093
        %v2095 = vrot.slane %v1962, %v2094
        %v2097 = vunpack.c.l.s4 1983009808
        %v2098 = vunpack.c.0.s8 %v2097
        %v2099 = vlaneseq
        %v2100 = vshrl.u32 %v2099, 7
        %v2101 = vsub.s32 %v2098, %v2100
        %v2102 = vrot.slane %v2088, %v2101
        %v2103 = vcombine.high %v2095, %v2095
        %v2104 = vcombine.high %v2102, %v2102
        %v2105 = vcombine.high %v1963, %v1963
        %v2107 = vunpack.c.l.s4 1983009808
        %v2108 = vunpack.c.0.s8 %v2107
        %v2109 = vlaneseq
        %v2110 = vshrl.u32 %v2109, 7
        %v2111 = vsub.s32 %v2108, %v2110
        %v2112 = vrot.slane %v1963, %v2111
        %v2114 = vunpack.c.l.s4 1983009808
        %v2115 = vunpack.c.0.s8 %v2114
        %v2116 = vlaneseq
        %v2117 = vshrl.u32 %v2116, 7
        %v2118 = vsub.s32 %v2115, %v2117
        %v2119 = vrot.slane %v2105, %v2118
        %v2120 = vcombine.high %v2112, %v2112
        %v2121 = vcombine.high %v2119, %v2119
        %v2122 = vcombine.high %v1964, %v1964
        %v2124 = vunpack.c.l.s4 1983009808
        %v2125 = vunpack.c.0.s8 %v2124
        %v2126 = vlaneseq
        %v2127 = vshrl.u32 %v2126, 7
        %v2128 = vsub.s32 %v2125, %v2127
        %v2129 = vrot.slane %v1964, %v2128
        %v2131 = vunpack.c.l.s4 1983009808
        %v2132 = vunpack.c.0.s8 %v2131
        %v2133 = vlaneseq
        %v2134 = vshrl.u32 %v2133, 7
        %v2135 = vsub.s32 %v2132, %v2134
        %v2136 = vrot.slane %v2122, %v2135
        %v2137 = vcombine.high %v2129, %v2129
        %v2138 = vcombine.high %v2136, %v2136
        %v2139 = vcombine.high %v1965, %v1965
        %v2141 = vunpack.c.l.s4 1983009808
        %v2142 = vunpack.c.0.s8 %v2141
        %v2143 = vlaneseq
        %v2144 = vshrl.u32 %v2143, 7
        %v2145 = vsub.s32 %v2142, %v2144
        %v2146 = vrot.slane %v1965, %v2145
        %v2148 = vunpack.c.l.s4 1983009808
        %v2149 = vunpack.c.0.s8 %v2148
        %v2150 = vlaneseq
        %v2151 = vshrl.u32 %v2150, 7
        %v2152 = vsub.s32 %v2149, %v2151
        %v2153 = vrot.slane %v2139, %v2152
        %v2154 = vcombine.high %v2146, %v2146
        %v2155 = vcombine.high %v2153, %v2153
        %v2156 = vcombine.high %v1966, %v1966
        %v2158 = vunpack.c.l.s4 1983009808
        %v2159 = vunpack.c.0.s8 %v2158
        %v2160 = vlaneseq
        %v2161 = vshrl.u32 %v2160, 7
        %v2162 = vsub.s32 %v2159, %v2161
        %v2163 = vrot.slane %v1966, %v2162
        %v2165 = vunpack.c.l.s4 1983009808
        %v2166 = vunpack.c.0.s8 %v2165
        %v2167 = vlaneseq
        %v2168 = vshrl.u32 %v2167, 7
        %v2169 = vsub.s32 %v2166, %v2168
        %v2170 = vrot.slane %v2156, %v2169
        %v2171 = vcombine.high %v2163, %v2163
        %v2172 = vcombine.high %v2170, %v2170
        %v2173 = vcombine.high %v1967, %v1967
        %v2175 = vunpack.c.l.s4 1983009808
        %v2176 = vunpack.c.0.s8 %v2175
        %v2177 = vlaneseq
        %v2178 = vshrl.u32 %v2177, 7
        %v2179 = vsub.s32 %v2176, %v2178
        %v2180 = vrot.slane %v1967, %v2179
        %v2182 = vunpack.c.l.s4 1983009808
        %v2183 = vunpack.c.0.s8 %v2182
        %v2184 = vlaneseq
        %v2185 = vshrl.u32 %v2184, 7
        %v2186 = vsub.s32 %v2183, %v2185
        %v2187 = vrot.slane %v2173, %v2186
        %v2188 = vcombine.high %v2180, %v2180
        %v2189 = vcombine.high %v2187, %v2187
        %v2190 = vcombine.high %v1968, %v1968
        %v2192 = vunpack.c.l.s4 1983009808
        %v2193 = vunpack.c.0.s8 %v2192
        %v2194 = vlaneseq
        %v2195 = vshrl.u32 %v2194, 7
        %v2196 = vsub.s32 %v2193, %v2195
        %v2197 = vrot.slane %v1968, %v2196
        %v2199 = vunpack.c.l.s4 1983009808
        %v2200 = vunpack.c.0.s8 %v2199
        %v2201 = vlaneseq
        %v2202 = vshrl.u32 %v2201, 7
        %v2203 = vsub.s32 %v2200, %v2202
        %v2204 = vrot.slane %v2190, %v2203
        %v2205 = vcombine.high %v2197, %v2197
        %v2206 = vcombine.high %v2204, %v2204
        %v2207 = vcombine.high %v1969, %v1969
        %v2209 = vunpack.c.l.s4 1983009808
        %v2210 = vunpack.c.0.s8 %v2209
        %v2211 = vlaneseq
        %v2212 = vshrl.u32 %v2211, 7
        %v2213 = vsub.s32 %v2210, %v2212
        %v2214 = vrot.slane %v1969, %v2213
        %v2216 = vunpack.c.l.s4 1983009808
        %v2217 = vunpack.c.0.s8 %v2216
        %v2218 = vlaneseq
        %v2219 = vshrl.u32 %v2218, 7
        %v2220 = vsub.s32 %v2217, %v2219
        %v2221 = vrot.slane %v2207, %v2220
        %v2222 = vcombine.high %v2214, %v2214
        %v2223 = vcombine.high %v2221, %v2221
        %v2224 = vcombine.high %v1970, %v1970
        %v2226 = vunpack.c.l.s4 1983009808
        %v2227 = vunpack.c.0.s8 %v2226
        %v2228 = vlaneseq
        %v2229 = vshrl.u32 %v2228, 7
        %v2230 = vsub.s32 %v2227, %v2229
        %v2231 = vrot.slane %v1970, %v2230
        %v2233 = vunpack.c.l.s4 1983009808
        %v2234 = vunpack.c.0.s8 %v2233
        %v2235 = vlaneseq
        %v2236 = vshrl.u32 %v2235, 7
        %v2237 = vsub.s32 %v2234, %v2236
        %v2238 = vrot.slane %v2224, %v2237
        %v2239 = vcombine.high %v2231, %v2231
        %v2240 = vcombine.high %v2238, %v2238
        %v2241 = vcombine.high %v1971, %v1971
        %v2243 = vunpack.c.l.s4 1983009808
        %v2244 = vunpack.c.0.s8 %v2243
        %v2245 = vlaneseq
        %v2246 = vshrl.u32 %v2245, 7
        %v2247 = vsub.s32 %v2244, %v2246
        %v2248 = vrot.slane %v1971, %v2247
        %v2250 = vunpack.c.l.s4 1983009808
        %v2251 = vunpack.c.0.s8 %v2250
        %v2252 = vlaneseq
        %v2253 = vshrl.u32 %v2252, 7
        %v2254 = vsub.s32 %v2251, %v2253
        %v2255 = vrot.slane %v2241, %v2254
        %v2256 = vcombine.high %v2248, %v2248
        %v2257 = vcombine.high %v2255, %v2255
        %v2258 = vcombine.high %v1972, %v1972
        %v2260 = vunpack.c.l.s4 1983009808
        %v2261 = vunpack.c.0.s8 %v2260
        %v2262 = vlaneseq
        %v2263 = vshrl.u32 %v2262, 7
        %v2264 = vsub.s32 %v2261, %v2263
        %v2265 = vrot.slane %v1972, %v2264
        %v2267 = vunpack.c.l.s4 1983009808
        %v2268 = vunpack.c.0.s8 %v2267
        %v2269 = vlaneseq
        %v2270 = vshrl.u32 %v2269, 7
        %v2271 = vsub.s32 %v2268, %v2270
        %v2272 = vrot.slane %v2258, %v2271
        %v2273 = vcombine.high %v2265, %v2265
        %v2274 = vcombine.high %v2272, %v2272
        %v2275 = vcombine.high %v1973, %v1973
        %v2277 = vunpack.c.l.s4 1983009808
        %v2278 = vunpack.c.0.s8 %v2277
        %v2279 = vlaneseq
        %v2280 = vshrl.u32 %v2279, 7
        %v2281 = vsub.s32 %v2278, %v2280
        %v2282 = vrot.slane %v1973, %v2281
        %v2284 = vunpack.c.l.s4 1983009808
        %v2285 = vunpack.c.0.s8 %v2284
        %v2286 = vlaneseq
        %v2287 = vshrl.u32 %v2286, 7
        %v2288 = vsub.s32 %v2285, %v2287
        %v2289 = vrot.slane %v2275, %v2288
        %v2290 = vcombine.high %v2282, %v2282
        %v2291 = vcombine.high %v2289, %v2289
        %v2292 = vcombine.high %v1974, %v1974
        %v2294 = vunpack.c.l.s4 1983009808
        %v2295 = vunpack.c.0.s8 %v2294
        %v2296 = vlaneseq
        %v2297 = vshrl.u32 %v2296, 7
        %v2298 = vsub.s32 %v2295, %v2297
        %v2299 = vrot.slane %v1974, %v2298
        %v2301 = vunpack.c.l.s4 1983009808
        %v2302 = vunpack.c.0.s8 %v2301
        %v2303 = vlaneseq
        %v2304 = vshrl.u32 %v2303, 7
        %v2305 = vsub.s32 %v2302, %v2304
        %v2306 = vrot.slane %v2292, %v2305
        %v2307 = vcombine.high %v2299, %v2299
        %v2308 = vcombine.high %v2306, %v2306
        %v2309 = vcombine.high %v1975, %v1975
        %v2311 = vunpack.c.l.s4 1983009808
        %v2312 = vunpack.c.0.s8 %v2311
        %v2313 = vlaneseq
        %v2314 = vshrl.u32 %v2313, 7
        %v2315 = vsub.s32 %v2312, %v2314
        %v2316 = vrot.slane %v1975, %v2315
        %v2318 = vunpack.c.l.s4 1983009808
        %v2319 = vunpack.c.0.s8 %v2318
        %v2320 = vlaneseq
        %v2321 = vshrl.u32 %v2320, 7
        %v2322 = vsub.s32 %v2319, %v2321
        %v2323 = vrot.slane %v2309, %v2322
        %v2324 = vcombine.high %v2316, %v2316
        %v2325 = vcombine.high %v2323, %v2323
        %v2326 = vcombine.high %v1976, %v1976
        %v2328 = vunpack.c.l.s4 1983009808
        %v2329 = vunpack.c.0.s8 %v2328
        %v2330 = vlaneseq
        %v2331 = vshrl.u32 %v2330, 7
        %v2332 = vsub.s32 %v2329, %v2331
        %v2333 = vrot.slane %v1976, %v2332
        %v2335 = vunpack.c.l.s4 1983009808
        %v2336 = vunpack.c.0.s8 %v2335
        %v2337 = vlaneseq
        %v2338 = vshrl.u32 %v2337, 7
        %v2339 = vsub.s32 %v2336, %v2338
        %v2340 = vrot.slane %v2326, %v2339
        %v2341 = vcombine.high %v2333, %v2333
        %v2342 = vcombine.high %v2340, %v2340
        %v2343 = vcombine.high %v1977, %v1977
        %v2345 = vunpack.c.l.s4 1983009808
        %v2346 = vunpack.c.0.s8 %v2345
        %v2347 = vlaneseq
        %v2348 = vshrl.u32 %v2347, 7
        %v2349 = vsub.s32 %v2346, %v2348
        %v2350 = vrot.slane %v1977, %v2349
        %v2352 = vunpack.c.l.s4 1983009808
        %v2353 = vunpack.c.0.s8 %v2352
        %v2354 = vlaneseq
        %v2355 = vshrl.u32 %v2354, 7
        %v2356 = vsub.s32 %v2353, %v2355
        %v2357 = vrot.slane %v2343, %v2356
        %v2358 = vcombine.high %v2350, %v2350
        %v2359 = vcombine.high %v2357, %v2357
        %v2360 = vcombine.high %v1978, %v1978
        %v2362 = vunpack.c.l.s4 1983009808
        %v2363 = vunpack.c.0.s8 %v2362
        %v2364 = vlaneseq
        %v2365 = vshrl.u32 %v2364, 7
        %v2366 = vsub.s32 %v2363, %v2365
        %v2367 = vrot.slane %v1978, %v2366
        %v2369 = vunpack.c.l.s4 1983009808
        %v2370 = vunpack.c.0.s8 %v2369
        %v2371 = vlaneseq
        %v2372 = vshrl.u32 %v2371, 7
        %v2373 = vsub.s32 %v2370, %v2372
        %v2374 = vrot.slane %v2360, %v2373
        %v2375 = vcombine.high %v2367, %v2367
        %v2376 = vcombine.high %v2374, %v2374
        %v2378 = vunpack.c.l.s4 1983009808
        %v2379 = vunpack.c.0.s8 %v2378
        %v2380 = vlaneseq
        %v2381 = vshrl.u32 %v2380, 7
        %v2382 = vsub.s32 %v2379, %v2381
        %v2383 = vrot.slane %v1979, %v2382
        %v2384 = vcombine.high %v2383, %v2383
        %v2385 = vstv %s455
        %v2386 = vadd.s32 %v2385, 1
        %v2387 = vadd.s32 %v2385, 2
        %v2388 = vadd.s32 %v2385, 3
        %v2389 = vadd.s32 %v2385, 4
        %v2390 = vadd.s32 %v2385, 5
        %v2391 = vadd.s32 %v2385, 6
        %v2392 = vadd.s32 %v2385, 7
        %v2393 = vadd.s32 %v2385, 8
        %v2394 = vadd.s32 %v2385, 9
        %v2395 = vlaneseq
        %v2396 = vshrl.u32 %v2395, 7
        %v2397 = vadd.s32 %v2396, 8
        %v2398 = vadd.s32 %v2396, 16
        %vm2399 = vcmp.ge.s32.totalorder %v2385, 1
        %vm2400 = vcmp.ge.s32.totalorder %v2386, 1
        %vm2401 = vcmp.ge.s32.totalorder %v2387, 1
        %vm2402 = vcmp.ge.s32.totalorder %v2388, 1
        %vm2403 = vcmp.ge.s32.totalorder %v2389, 1
        %vm2404 = vcmp.ge.s32.totalorder %v2390, 1
        %vm2405 = vcmp.ge.s32.totalorder %v2391, 1
        %vm2406 = vcmp.ge.s32.totalorder %v2392, 1
        %vm2407 = vcmp.ge.s32.totalorder %v2393, 1
        %vm2408 = vcmp.ge.s32.totalorder %v2394, 1
        %vm2409 = vcmp.lt.s32.totalorder %v2385, 17
        %vm2410 = vcmp.lt.s32.totalorder %v2386, 17
        %vm2411 = vcmp.lt.s32.totalorder %v2387, 17
        %vm2412 = vcmp.lt.s32.totalorder %v2388, 17
        %vm2413 = vcmp.lt.s32.totalorder %v2389, 17
        %vm2414 = vcmp.lt.s32.totalorder %v2390, 17
        %vm2415 = vcmp.lt.s32.totalorder %v2391, 17
        %vm2416 = vcmp.lt.s32.totalorder %v2392, 17
        %vm2417 = vcmp.lt.s32.totalorder %v2393, 17
        %vm2418 = vcmp.lt.s32.totalorder %v2394, 17
        %vm2419 = vmand %vm2399, %vm2409
        %vm2420 = vmand %vm2400, %vm2410
        %vm2421 = vmand %vm2401, %vm2411
        %vm2422 = vmand %vm2402, %vm2412
        %vm2423 = vmand %vm2403, %vm2413
        %vm2424 = vmand %vm2404, %vm2414
        %vm2425 = vmand %vm2405, %vm2415
        %vm2426 = vmand %vm2406, %vm2416
        %vm2427 = vmand %vm2407, %vm2417
        %vm2428 = vmand %vm2408, %vm2418
        %vm2429 = vcmp.ge.s32.totalorder %v2396, 1
        %vm2430 = vcmp.ge.s32.totalorder %v2397, 1
        %vm2431 = vcmp.ge.s32.totalorder %v2398, 1
        %vm2432 = vmand %vm2419, %vm2429
        %vm2433 = vmand %vm2419, %vm2430
        %vm2434 = vmand %vm2419, %vm2431
        %vm2435 = vmand %vm2420, %vm2429
        %vm2436 = vmand %vm2420, %vm2430
        %vm2437 = vmand %vm2420, %vm2431
        %vm2438 = vmand %vm2421, %vm2429
        %vm2439 = vmand %vm2421, %vm2430
        %vm2440 = vmand %vm2421, %vm2431
        %vm2441 = vmand %vm2422, %vm2429
        %vm2442 = vmand %vm2422, %vm2430
        %vm2443 = vmand %vm2422, %vm2431
        %vm2444 = vmand %vm2423, %vm2429
        %vm2445 = vmand %vm2423, %vm2430
        %vm2446 = vmand %vm2423, %vm2431
        %vm2447 = vmand %vm2424, %vm2429
        %vm2448 = vmand %vm2424, %vm2430
        %vm2449 = vmand %vm2424, %vm2431
        %vm2450 = vmand %vm2425, %vm2429
        %vm2451 = vmand %vm2425, %vm2430
        %vm2452 = vmand %vm2425, %vm2431
        %vm2453 = vmand %vm2426, %vm2429
        %vm2454 = vmand %vm2426, %vm2430
        %vm2455 = vmand %vm2426, %vm2431
        %vm2456 = vmand %vm2427, %vm2429
        %vm2457 = vmand %vm2427, %vm2430
        %vm2458 = vmand %vm2427, %vm2431
        %vm2459 = vmand %vm2428, %vm2429
        %vm2460 = vmand %vm2428, %vm2430
        %vm2461 = vmand %vm2428, %vm2431
        %vm2462 = vcmp.lt.s32.totalorder %v2396, 17
        %vm2463 = vcmp.lt.s32.totalorder %v2397, 17
        %vm2464 = vcmp.lt.s32.totalorder %v2398, 17
        %vm2465 = vmand %vm2432, %vm2462
        %vm2466 = vmand %vm2433, %vm2463
        %vm2467 = vmand %vm2434, %vm2464
        %vm2468 = vmand %vm2435, %vm2462
        %vm2469 = vmand %vm2436, %vm2463
        %vm2470 = vmand %vm2437, %vm2464
        %vm2471 = vmand %vm2438, %vm2462
        %vm2472 = vmand %vm2439, %vm2463
        %vm2473 = vmand %vm2440, %vm2464
        %vm2474 = vmand %vm2441, %vm2462
        %vm2475 = vmand %vm2442, %vm2463
        %vm2476 = vmand %vm2443, %vm2464
        %vm2477 = vmand %vm2444, %vm2462
        %vm2478 = vmand %vm2445, %vm2463
        %vm2479 = vmand %vm2446, %vm2464
        %vm2480 = vmand %vm2447, %vm2462
        %vm2481 = vmand %vm2448, %vm2463
        %vm2482 = vmand %vm2449, %vm2464
        %vm2483 = vmand %vm2450, %vm2462
        %vm2484 = vmand %vm2451, %vm2463
        %vm2485 = vmand %vm2452, %vm2464
        %vm2486 = vmand %vm2453, %vm2462
        %vm2487 = vmand %vm2454, %vm2463
        %vm2488 = vmand %vm2455, %vm2464
        %vm2489 = vmand %vm2456, %vm2462
        %vm2490 = vmand %vm2457, %vm2463
        %vm2491 = vmand %vm2458, %vm2464
        %vm2492 = vmand %vm2459, %vm2462
        %vm2493 = vmand %vm2460, %vm2463
        %vm2494 = vmand %vm2461, %vm2464
        %v2495 = vcombine.low %v2010, %v2018
        %v2496 = vcombine.low %v2017, %v2019
        %v2498 = vunpack.c.l.s4 1983009808
        %v2499 = vunpack.c.0.s8 %v2498
        %v2500 = vlaneseq
        %v2501 = vshrl.u32 %v2500, 7
        %v2502 = vsub.s32 %v2499, %v2501
        %v2503 = vrot.slane %v2495, %v2502
        %v2505 = vunpack.c.l.s4 1983009808
        %v2506 = vunpack.c.0.s8 %v2505
        %v2507 = vlaneseq
        %v2508 = vshrl.u32 %v2507, 7
        %v2509 = vsub.s32 %v2506, %v2508
        %v2510 = vrot.slane %v2496, %v2509
        %v2511 = vcombine.low %v2503, %v2510
        %v2512 = vcombine.low %v2027, %v2035
        %v2513 = vcombine.low %v2034, %v2036
        %v2515 = vunpack.c.l.s4 1983009808
        %v2516 = vunpack.c.0.s8 %v2515
        %v2517 = vlaneseq
        %v2518 = vshrl.u32 %v2517, 7
        %v2519 = vsub.s32 %v2516, %v2518
        %v2520 = vrot.slane %v2512, %v2519
        %v2522 = vunpack.c.l.s4 1983009808
        %v2523 = vunpack.c.0.s8 %v2522
        %v2524 = vlaneseq
        %v2525 = vshrl.u32 %v2524, 7
        %v2526 = vsub.s32 %v2523, %v2525
        %v2527 = vrot.slane %v2513, %v2526
        %v2528 = vcombine.low %v2520, %v2527
        %v2530 = vunpack.c.l.s4 1983009808
        %v2531 = vunpack.c.0.s8 %v2530
        %v2532 = vlaneseq
        %v2533 = vshrl.u32 %v2532, 7
        %v2534 = vsub.s32 %v2531, %v2533
        %v2535 = vrot.slane %v2044, %v2534
        %v2536 = vcombine.low %v2052, %v2051
        %v2537 = vcombine.low %v2053, %v2061
        %v2539 = vunpack.c.l.s4 1983009808
        %v2540 = vunpack.c.0.s8 %v2539
        %v2541 = vlaneseq
        %v2542 = vshrl.u32 %v2541, 7
        %v2543 = vsub.s32 %v2540, %v2542
        %v2544 = vrot.slane %v2536, %v2543
        %v2546 = vunpack.c.l.s4 1983009808
        %v2547 = vunpack.c.0.s8 %v2546
        %v2548 = vlaneseq
        %v2549 = vshrl.u32 %v2548, 7
        %v2550 = vsub.s32 %v2547, %v2549
        %v2551 = vrot.slane %v2537, %v2550
        %v2552 = vcombine.low %v2544, %v2551
        %v2553 = vcombine.low %v2069, %v2068
        %v2554 = vcombine.low %v2070, %v2078
        %v2556 = vunpack.c.l.s4 1983009808
        %v2557 = vunpack.c.0.s8 %v2556
        %v2558 = vlaneseq
        %v2559 = vshrl.u32 %v2558, 7
        %v2560 = vsub.s32 %v2557, %v2559
        %v2561 = vrot.slane %v2553, %v2560
        %v2563 = vunpack.c.l.s4 1983009808
        %v2564 = vunpack.c.0.s8 %v2563
        %v2565 = vlaneseq
        %v2566 = vshrl.u32 %v2565, 7
        %v2567 = vsub.s32 %v2564, %v2566
        %v2568 = vrot.slane %v2554, %v2567
        %v2569 = vcombine.low %v2561, %v2568
        %v2571 = vunpack.c.l.s4 1983009808
        %v2572 = vunpack.c.0.s8 %v2571
        %v2573 = vlaneseq
        %v2574 = vshrl.u32 %v2573, 7
        %v2575 = vsub.s32 %v2572, %v2574
        %v2576 = vrot.slane %v2086, %v2575
        %v2577 = vcombine.low %v2085, %v2087
        %v2578 = vcombine.low %v2095, %v2103
        %v2580 = vunpack.c.l.s4 1983009808
        %v2581 = vunpack.c.0.s8 %v2580
        %v2582 = vlaneseq
        %v2583 = vshrl.u32 %v2582, 7
        %v2584 = vsub.s32 %v2581, %v2583
        %v2585 = vrot.slane %v2577, %v2584
        %v2587 = vunpack.c.l.s4 1983009808
        %v2588 = vunpack.c.0.s8 %v2587
        %v2589 = vlaneseq
        %v2590 = vshrl.u32 %v2589, 7
        %v2591 = vsub.s32 %v2588, %v2590
        %v2592 = vrot.slane %v2578, %v2591
        %v2593 = vcombine.low %v2585, %v2592
        %v2594 = vcombine.low %v2102, %v2104
        %v2595 = vcombine.low %v2112, %v2120
        %v2597 = vunpack.c.l.s4 1983009808
        %v2598 = vunpack.c.0.s8 %v2597
        %v2599 = vlaneseq
        %v2600 = vshrl.u32 %v2599, 7
        %v2601 = vsub.s32 %v2598, %v2600
        %v2602 = vrot.slane %v2594, %v2601
        %v2604 = vunpack.c.l.s4 1983009808
        %v2605 = vunpack.c.0.s8 %v2604
        %v2606 = vlaneseq
        %v2607 = vshrl.u32 %v2606, 7
        %v2608 = vsub.s32 %v2605, %v2607
        %v2609 = vrot.slane %v2595, %v2608
        %v2610 = vcombine.low %v2602, %v2609
        %v2612 = vunpack.c.l.s4 1983009808
        %v2613 = vunpack.c.0.s8 %v2612
        %v2614 = vlaneseq
        %v2615 = vshrl.u32 %v2614, 7
        %v2616 = vsub.s32 %v2613, %v2615
        %v2617 = vrot.slane %v2119, %v2616
        %v2618 = vcombine.low %v2121, %v2129
        %v2619 = vcombine.low %v2137, %v2136
        %v2621 = vunpack.c.l.s4 1983009808
        %v2622 = vunpack.c.0.s8 %v2621
        %v2623 = vlaneseq
        %v2624 = vshrl.u32 %v2623, 7
        %v2625 = vsub.s32 %v2622, %v2624
        %v2626 = vrot.slane %v2618, %v2625
        %v2628 = vunpack.c.l.s4 1983009808
        %v2629 = vunpack.c.0.s8 %v2628
        %v2630 = vlaneseq
        %v2631 = vshrl.u32 %v2630, 7
        %v2632 = vsub.s32 %v2629, %v2631
        %v2633 = vrot.slane %v2619, %v2632
        %v2634 = vcombine.low %v2626, %v2633
        %v2635 = vcombine.low %v2138, %v2146
        %v2636 = vcombine.low %v2154, %v2153
        %v2638 = vunpack.c.l.s4 1983009808
        %v2639 = vunpack.c.0.s8 %v2638
        %v2640 = vlaneseq
        %v2641 = vshrl.u32 %v2640, 7
        %v2642 = vsub.s32 %v2639, %v2641
        %v2643 = vrot.slane %v2635, %v2642
        %v2645 = vunpack.c.l.s4 1983009808
        %v2646 = vunpack.c.0.s8 %v2645
        %v2647 = vlaneseq
        %v2648 = vshrl.u32 %v2647, 7
        %v2649 = vsub.s32 %v2646, %v2648
        %v2650 = vrot.slane %v2636, %v2649
        %v2651 = vcombine.low %v2643, %v2650
        %v2653 = vunpack.c.l.s4 1983009808
        %v2654 = vunpack.c.0.s8 %v2653
        %v2655 = vlaneseq
        %v2656 = vshrl.u32 %v2655, 7
        %v2657 = vsub.s32 %v2654, %v2656
        %v2658 = vrot.slane %v2155, %v2657
        %v2659 = vcombine.low %v2163, %v2171
        %v2660 = vcombine.low %v2170, %v2172
        %v2662 = vunpack.c.l.s4 1983009808
        %v2663 = vunpack.c.0.s8 %v2662
        %v2664 = vlaneseq
        %v2665 = vshrl.u32 %v2664, 7
        %v2666 = vsub.s32 %v2663, %v2665
        %v2667 = vrot.slane %v2659, %v2666
        %v2669 = vunpack.c.l.s4 1983009808
        %v2670 = vunpack.c.0.s8 %v2669
        %v2671 = vlaneseq
        %v2672 = vshrl.u32 %v2671, 7
        %v2673 = vsub.s32 %v2670, %v2672
        %v2674 = vrot.slane %v2660, %v2673
        %v2675 = vcombine.low %v2667, %v2674
        %v2676 = vcombine.low %v2180, %v2188
        %v2677 = vcombine.low %v2187, %v2189
        %v2679 = vunpack.c.l.s4 1983009808
        %v2680 = vunpack.c.0.s8 %v2679
        %v2681 = vlaneseq
        %v2682 = vshrl.u32 %v2681, 7
        %v2683 = vsub.s32 %v2680, %v2682
        %v2684 = vrot.slane %v2676, %v2683
        %v2686 = vunpack.c.l.s4 1983009808
        %v2687 = vunpack.c.0.s8 %v2686
        %v2688 = vlaneseq
        %v2689 = vshrl.u32 %v2688, 7
        %v2690 = vsub.s32 %v2687, %v2689
        %v2691 = vrot.slane %v2677, %v2690
        %v2692 = vcombine.low %v2684, %v2691
        %v2694 = vunpack.c.l.s4 1983009808
        %v2695 = vunpack.c.0.s8 %v2694
        %v2696 = vlaneseq
        %v2697 = vshrl.u32 %v2696, 7
        %v2698 = vsub.s32 %v2695, %v2697
        %v2699 = vrot.slane %v2197, %v2698
        %v2700 = vcombine.low %v2205, %v2204
        %v2701 = vcombine.low %v2206, %v2214
        %v2703 = vunpack.c.l.s4 1983009808
        %v2704 = vunpack.c.0.s8 %v2703
        %v2705 = vlaneseq
        %v2706 = vshrl.u32 %v2705, 7
        %v2707 = vsub.s32 %v2704, %v2706
        %v2708 = vrot.slane %v2700, %v2707
        %v2710 = vunpack.c.l.s4 1983009808
        %v2711 = vunpack.c.0.s8 %v2710
        %v2712 = vlaneseq
        %v2713 = vshrl.u32 %v2712, 7
        %v2714 = vsub.s32 %v2711, %v2713
        %v2715 = vrot.slane %v2701, %v2714
        %v2716 = vcombine.low %v2708, %v2715
        %v2717 = vcombine.low %v2222, %v2221
        %v2718 = vcombine.low %v2223, %v2231
        %v2720 = vunpack.c.l.s4 1983009808
        %v2721 = vunpack.c.0.s8 %v2720
        %v2722 = vlaneseq
        %v2723 = vshrl.u32 %v2722, 7
        %v2724 = vsub.s32 %v2721, %v2723
        %v2725 = vrot.slane %v2717, %v2724
        %v2727 = vunpack.c.l.s4 1983009808
        %v2728 = vunpack.c.0.s8 %v2727
        %v2729 = vlaneseq
        %v2730 = vshrl.u32 %v2729, 7
        %v2731 = vsub.s32 %v2728, %v2730
        %v2732 = vrot.slane %v2718, %v2731
        %v2733 = vcombine.low %v2725, %v2732
        %v2735 = vunpack.c.l.s4 1983009808
        %v2736 = vunpack.c.0.s8 %v2735
        %v2737 = vlaneseq
        %v2738 = vshrl.u32 %v2737, 7
        %v2739 = vsub.s32 %v2736, %v2738
        %v2740 = vrot.slane %v2239, %v2739
        %v2741 = vcombine.low %v2238, %v2240
        %v2742 = vcombine.low %v2248, %v2256
        %v2744 = vunpack.c.l.s4 1983009808
        %v2745 = vunpack.c.0.s8 %v2744
        %v2746 = vlaneseq
        %v2747 = vshrl.u32 %v2746, 7
        %v2748 = vsub.s32 %v2745, %v2747
        %v2749 = vrot.slane %v2741, %v2748
        %v2751 = vunpack.c.l.s4 1983009808
        %v2752 = vunpack.c.0.s8 %v2751
        %v2753 = vlaneseq
        %v2754 = vshrl.u32 %v2753, 7
        %v2755 = vsub.s32 %v2752, %v2754
        %v2756 = vrot.slane %v2742, %v2755
        %v2757 = vcombine.low %v2749, %v2756
        %v2758 = vcombine.low %v2255, %v2257
        %v2759 = vcombine.low %v2265, %v2273
        %v2761 = vunpack.c.l.s4 1983009808
        %v2762 = vunpack.c.0.s8 %v2761
        %v2763 = vlaneseq
        %v2764 = vshrl.u32 %v2763, 7
        %v2765 = vsub.s32 %v2762, %v2764
        %v2766 = vrot.slane %v2758, %v2765
        %v2768 = vunpack.c.l.s4 1983009808
        %v2769 = vunpack.c.0.s8 %v2768
        %v2770 = vlaneseq
        %v2771 = vshrl.u32 %v2770, 7
        %v2772 = vsub.s32 %v2769, %v2771
        %v2773 = vrot.slane %v2759, %v2772
        %v2774 = vcombine.low %v2766, %v2773
        %v2776 = vunpack.c.l.s4 1983009808
        %v2777 = vunpack.c.0.s8 %v2776
        %v2778 = vlaneseq
        %v2779 = vshrl.u32 %v2778, 7
        %v2780 = vsub.s32 %v2777, %v2779
        %v2781 = vrot.slane %v2272, %v2780
        %v2782 = vcombine.low %v2274, %v2282
        %v2783 = vcombine.low %v2290, %v2289
        %v2785 = vunpack.c.l.s4 1983009808
        %v2786 = vunpack.c.0.s8 %v2785
        %v2787 = vlaneseq
        %v2788 = vshrl.u32 %v2787, 7
        %v2789 = vsub.s32 %v2786, %v2788
        %v2790 = vrot.slane %v2782, %v2789
        %v2792 = vunpack.c.l.s4 1983009808
        %v2793 = vunpack.c.0.s8 %v2792
        %v2794 = vlaneseq
        %v2795 = vshrl.u32 %v2794, 7
        %v2796 = vsub.s32 %v2793, %v2795
        %v2797 = vrot.slane %v2783, %v2796
        %v2798 = vcombine.low %v2790, %v2797
        %v2799 = vcombine.low %v2291, %v2299
        %v2800 = vcombine.low %v2307, %v2306
        %v2802 = vunpack.c.l.s4 1983009808
        %v2803 = vunpack.c.0.s8 %v2802
        %v2804 = vlaneseq
        %v2805 = vshrl.u32 %v2804, 7
        %v2806 = vsub.s32 %v2803, %v2805
        %v2807 = vrot.slane %v2799, %v2806
        %v2809 = vunpack.c.l.s4 1983009808
        %v2810 = vunpack.c.0.s8 %v2809
        %v2811 = vlaneseq
        %v2812 = vshrl.u32 %v2811, 7
        %v2813 = vsub.s32 %v2810, %v2812
        %v2814 = vrot.slane %v2800, %v2813
        %v2815 = vcombine.low %v2807, %v2814
        %v2817 = vunpack.c.l.s4 1983009808
        %v2818 = vunpack.c.0.s8 %v2817
        %v2819 = vlaneseq
        %v2820 = vshrl.u32 %v2819, 7
        %v2821 = vsub.s32 %v2818, %v2820
        %v2822 = vrot.slane %v2308, %v2821
        %v2823 = vcombine.low %v2316, %v2324
        %v2824 = vcombine.low %v2323, %v2325
        %v2826 = vunpack.c.l.s4 1983009808
        %v2827 = vunpack.c.0.s8 %v2826
        %v2828 = vlaneseq
        %v2829 = vshrl.u32 %v2828, 7
        %v2830 = vsub.s32 %v2827, %v2829
        %v2831 = vrot.slane %v2823, %v2830
        %v2833 = vunpack.c.l.s4 1983009808
        %v2834 = vunpack.c.0.s8 %v2833
        %v2835 = vlaneseq
        %v2836 = vshrl.u32 %v2835, 7
        %v2837 = vsub.s32 %v2834, %v2836
        %v2838 = vrot.slane %v2824, %v2837
        %v2839 = vcombine.low %v2831, %v2838
        %v2840 = vcombine.low %v2333, %v2341
        %v2841 = vcombine.low %v2340, %v2342
        %v2843 = vunpack.c.l.s4 1983009808
        %v2844 = vunpack.c.0.s8 %v2843
        %v2845 = vlaneseq
        %v2846 = vshrl.u32 %v2845, 7
        %v2847 = vsub.s32 %v2844, %v2846
        %v2848 = vrot.slane %v2840, %v2847
        %v2850 = vunpack.c.l.s4 1983009808
        %v2851 = vunpack.c.0.s8 %v2850
        %v2852 = vlaneseq
        %v2853 = vshrl.u32 %v2852, 7
        %v2854 = vsub.s32 %v2851, %v2853
        %v2855 = vrot.slane %v2841, %v2854
        %v2856 = vcombine.low %v2848, %v2855
        %v2858 = vunpack.c.l.s4 1983009808
        %v2859 = vunpack.c.0.s8 %v2858
        %v2860 = vlaneseq
        %v2861 = vshrl.u32 %v2860, 7
        %v2862 = vsub.s32 %v2859, %v2861
        %v2863 = vrot.slane %v2350, %v2862
        %v2864 = vcombine.low %v2358, %v2357
        %v2865 = vcombine.low %v2359, %v2367
        %v2867 = vunpack.c.l.s4 1983009808
        %v2868 = vunpack.c.0.s8 %v2867
        %v2869 = vlaneseq
        %v2870 = vshrl.u32 %v2869, 7
        %v2871 = vsub.s32 %v2868, %v2870
        %v2872 = vrot.slane %v2864, %v2871
        %v2874 = vunpack.c.l.s4 1983009808
        %v2875 = vunpack.c.0.s8 %v2874
        %v2876 = vlaneseq
        %v2877 = vshrl.u32 %v2876, 7
        %v2878 = vsub.s32 %v2875, %v2877
        %v2879 = vrot.slane %v2865, %v2878
        %v2880 = vcombine.low %v2872, %v2879
        %v2881 = vcombine.low %v2375, %v2374
        %v2882 = vcombine.low %v2376, %v2383
        %v2884 = vunpack.c.l.s4 1983009808
        %v2885 = vunpack.c.0.s8 %v2884
        %v2886 = vlaneseq
        %v2887 = vshrl.u32 %v2886, 7
        %v2888 = vsub.s32 %v2885, %v2887
        %v2889 = vrot.slane %v2881, %v2888
        %v2891 = vunpack.c.l.s4 1983009808
        %v2892 = vunpack.c.0.s8 %v2891
        %v2893 = vlaneseq
        %v2894 = vshrl.u32 %v2893, 7
        %v2895 = vsub.s32 %v2892, %v2894
        %v2896 = vrot.slane %v2882, %v2895
        %v2897 = vcombine.low %v2889, %v2896
        %v2899 = vunpack.c.l.s4 1983009808
        %v2900 = vunpack.c.0.s8 %v2899
        %v2901 = vlaneseq
        %v2902 = vshrl.u32 %v2901, 7
        %v2903 = vsub.s32 %v2900, %v2902
        %v2904 = vrot.slane %v2384, %v2903
        %v2935 = vsel %vm2465, %v2511, 0.0
        %v2936 = vsel %vm2466, %v2528, 0.0
        %v2937 = vsel %vm2467, %v2535, 0.0
        %v2938 = vsel %vm2468, %v2552, 0.0
        %v2939 = vsel %vm2469, %v2569, 0.0
        %v2940 = vsel %vm2470, %v2576, 0.0
        %v2941 = vsel %vm2471, %v2593, 0.0
        %v2942 = vsel %vm2472, %v2610, 0.0
        %v2943 = vsel %vm2473, %v2617, 0.0
        %v2944 = vsel %vm2474, %v2634, 0.0
        %v2945 = vsel %vm2475, %v2651, 0.0
        %v2946 = vsel %vm2476, %v2658, 0.0
        %v2947 = vsel %vm2477, %v2675, 0.0
        %v2948 = vsel %vm2478, %v2692, 0.0
        %v2949 = vsel %vm2479, %v2699, 0.0
        %v2950 = vsel %vm2480, %v2716, 0.0
        %v2951 = vsel %vm2481, %v2733, 0.0
        %v2952 = vsel %vm2482, %v2740, 0.0
        %v2953 = vsel %vm2483, %v2757, 0.0
        %v2954 = vsel %vm2484, %v2774, 0.0
        %v2955 = vsel %vm2485, %v2781, 0.0
        %v2956 = vsel %vm2486, %v2798, 0.0
        %v2957 = vsel %vm2487, %v2815, 0.0
        %v2958 = vsel %vm2488, %v2822, 0.0
        %v2959 = vsel %vm2489, %v2839, 0.0
        %v2960 = vsel %vm2490, %v2856, 0.0
        %v2961 = vsel %vm2491, %v2863, 0.0
        %v2962 = vsel %vm2492, %v2880, 0.0
        %v2963 = vsel %vm2493, %v2897, 0.0
        %v2964 = vsel %vm2494, %v2904, 0.0
        %v2965 = vpack.c.bf16 %v2936, %v2935
        %v2966 = vpack.c.bf16 %v2937, %v2937
        %v2967 = vpack.c.bf16 %v2939, %v2938
        %v2968 = vpack.c.bf16 %v2940, %v2940
        %v2969 = vpack.c.bf16 %v2942, %v2941
        %v2970 = vpack.c.bf16 %v2943, %v2943
        %v2971 = vpack.c.bf16 %v2945, %v2944
        %v2972 = vpack.c.bf16 %v2946, %v2946
        %v2973 = vpack.c.bf16 %v2948, %v2947
        %v2974 = vpack.c.bf16 %v2949, %v2949
        %v2975 = vpack.c.bf16 %v2951, %v2950
        %v2976 = vpack.c.bf16 %v2952, %v2952
        %v2977 = vpack.c.bf16 %v2954, %v2953
        %v2978 = vpack.c.bf16 %v2955, %v2955
        %v2979 = vpack.c.bf16 %v2957, %v2956
        %v2980 = vpack.c.bf16 %v2958, %v2958
        %v2981 = vpack.c.bf16 %v2960, %v2959
        %v2982 = vpack.c.bf16 %v2961, %v2961
        %v2983 = vpack.c.bf16 %v2963, %v2962
        %v2984 = vpack.c.bf16 %v2964, %v2964
        %vm2985 = vsmask.f32 7424
        %v2987 = vshrl.u32 %v2965, 16
        %v2989 = vshll.u32 %v2965, 16
        %v2991 = vrot.slane %v2989, 1
        %v2992 = vor.u32 %v2987, %v2991
        %v2994 = vshll.u32 %v2966, 16
        %v2996 = vrot.slane %v2994, 1
        %v2997 = vsel %vm2985, %v2992, %v2996
        %v2999 = vshrl.u32 %v2967, 16
        %v3001 = vshll.u32 %v2967, 16
        %v3003 = vrot.slane %v3001, 1
        %v3004 = vor.u32 %v2999, %v3003
        %v3006 = vshll.u32 %v2968, 16
        %v3008 = vrot.slane %v3006, 1
        %v3009 = vsel %vm2985, %v3004, %v3008
        %v3011 = vshrl.u32 %v2969, 16
        %v3013 = vshll.u32 %v2969, 16
        %v3015 = vrot.slane %v3013, 1
        %v3016 = vor.u32 %v3011, %v3015
        %v3018 = vshll.u32 %v2970, 16
        %v3020 = vrot.slane %v3018, 1
        %v3021 = vsel %vm2985, %v3016, %v3020
        %v3023 = vshrl.u32 %v2971, 16
        %v3025 = vshll.u32 %v2971, 16
        %v3027 = vrot.slane %v3025, 1
        %v3028 = vor.u32 %v3023, %v3027
        %v3030 = vshll.u32 %v2972, 16
        %v3032 = vrot.slane %v3030, 1
        %v3033 = vsel %vm2985, %v3028, %v3032
        %v3035 = vshrl.u32 %v2973, 16
        %v3037 = vshll.u32 %v2973, 16
        %v3039 = vrot.slane %v3037, 1
        %v3040 = vor.u32 %v3035, %v3039
        %v3042 = vshll.u32 %v2974, 16
        %v3044 = vrot.slane %v3042, 1
        %v3045 = vsel %vm2985, %v3040, %v3044
        %v3047 = vshrl.u32 %v2975, 16
        %v3049 = vshll.u32 %v2975, 16
        %v3051 = vrot.slane %v3049, 1
        %v3052 = vor.u32 %v3047, %v3051
        %v3054 = vshll.u32 %v2976, 16
        %v3056 = vrot.slane %v3054, 1
        %v3057 = vsel %vm2985, %v3052, %v3056
        %v3059 = vshrl.u32 %v2977, 16
        %v3061 = vshll.u32 %v2977, 16
        %v3063 = vrot.slane %v3061, 1
        %v3064 = vor.u32 %v3059, %v3063
        %v3066 = vshll.u32 %v2978, 16
        %v3068 = vrot.slane %v3066, 1
        %v3069 = vsel %vm2985, %v3064, %v3068
        %v3071 = vshrl.u32 %v2979, 16
        %v3073 = vshll.u32 %v2979, 16
        %v3075 = vrot.slane %v3073, 1
        %v3076 = vor.u32 %v3071, %v3075
        %v3078 = vshll.u32 %v2980, 16
        %v3080 = vrot.slane %v3078, 1
        %v3081 = vsel %vm2985, %v3076, %v3080
        %vm3106 = vcmask 1046528
        %v3107 = vrot.slane %v2965, 1
        %v3108 = vrot.slane %v2966, 1
        %v3109 = vsel %vm3106, %v3107, %v3108
        %v3110 = vrot.slane %v2967, 1
        %v3111 = vrot.slane %v2968, 1
        %v3112 = vsel %vm3106, %v3110, %v3111
        %v3113 = vrot.slane %v2969, 1
        %v3114 = vrot.slane %v2970, 1
        %v3115 = vsel %vm3106, %v3113, %v3114
        %v3116 = vrot.slane %v2971, 1
        %v3117 = vrot.slane %v2972, 1
        %v3118 = vsel %vm3106, %v3116, %v3117
        %v3119 = vrot.slane %v2973, 1
        %v3120 = vrot.slane %v2974, 1
        %v3121 = vsel %vm3106, %v3119, %v3120
        %v3122 = vrot.slane %v2975, 1
        %v3123 = vrot.slane %v2976, 1
        %v3124 = vsel %vm3106, %v3122, %v3123
        %v3125 = vrot.slane %v2977, 1
        %v3126 = vrot.slane %v2978, 1
        %v3127 = vsel %vm3106, %v3125, %v3126
        %v3128 = vrot.slane %v2979, 1
        %v3129 = vrot.slane %v2980, 1
        %v3130 = vsel %vm3106, %v3128, %v3129
        %v3139 = vld [vmem:[%s4] sm:$0xf]
        %v3140 = vld [vmem:[%s4 + $0x4] sm:$0xf]
        %v3141 = vld [vmem:[%s4 + $0x8] sm:$0xf]
        %v3142 = vld [vmem:[%s4 + $0xc] sm:$0xf]
        %v3143 = vld [vmem:[%s4 + $0x10] sm:$0xf]
        %v3144 = vld [vmem:[%s4 + $0x14] sm:$0xf]
        %v3145 = vld [vmem:[%s4 + $0x18] sm:$0xf]
        %v3146 = vld [vmem:[%s4 + $0x1c] sm:$0xf]
        %v3147 = vld [vmem:[%s4 + $0x20] sm:$0xf]
        %v3148 = vld [vmem:[%s4 + $0x24] sm:$0xf]
        %v3149 = vld [vmem:[%s4 + $0x28] sm:$0xf]
        %v3150 = vld [vmem:[%s4 + $0x2c] sm:$0xf]
        %v3151 = vld [vmem:[%s4 + $0x30] sm:$0xf]
        %v3152 = vld [vmem:[%s4 + $0x34] sm:$0xf]
        %v3153 = vld [vmem:[%s4 + $0x38] sm:$0xf]
        %v3154 = vld [vmem:[%s4 + $0x3c] sm:$0xf]
        %v3155 = vld [vmem:[%s4 + $0x40] sm:$0xf]
        %v3156 = vld [vmem:[%s4 + $0x44] sm:$0xf]
        %v3157 = vld [vmem:[%s4 + $0x48] sm:$0xf]
        %v3158 = vld [vmem:[%s4 + $0x4c] sm:$0xf]
        %v3159 = vld [vmem:[%s4 + $0x50] sm:$0xf]
        %v3160 = vld [vmem:[%s4 + $0x54] sm:$0xf]
        %v3161 = vld [vmem:[%s4 + $0x58] sm:$0xf]
        %v3162 = vld [vmem:[%s4 + $0x5c] sm:$0xf]
        %v3163 = vld [vmem:[%s4 + $0x60] sm:$0xf]
        %v3164 = vld [vmem:[%s4 + $0x64] sm:$0xf]
        %v3165 = vld [vmem:[%s4 + $0x68] sm:$0xf]
        %v3166 = vld [vmem:[%s4 + $0x6c] sm:$0xf]
        %v3167 = vld [vmem:[%s4 + $0x70] sm:$0xf]
        %v3168 = vld [vmem:[%s4 + $0x74] sm:$0xf]
        %v3169 = vld [vmem:[%s4 + $0x78] sm:$0xf]
        %v3170 = vld [vmem:[%s4 + $0x7c] sm:$0xf]
        %v3171 = vld [vmem:[%s4 + $0x80] sm:$0xf]
        %v3172 = vld [vmem:[%s4 + $0x84] sm:$0xf]
        %v3173 = vld [vmem:[%s4 + $0x88] sm:$0xf]
        %v3174 = vld [vmem:[%s4 + $0x8c] sm:$0xf]
        %v3175 = vld [vmem:[%s4 + $0x90] sm:$0xf]
        %v3176 = vld [vmem:[%s4 + $0x94] sm:$0xf]
        %v3177 = vld [vmem:[%s4 + $0x98] sm:$0xf]
        %v3178 = vld [vmem:[%s4 + $0x9c] sm:$0xf]
        %v3179 = vld [vmem:[%s4 + $0xa0] sm:$0xf]
        %v3180 = vld [vmem:[%s4 + $0xa4] sm:$0xf]
        %v3181 = vld [vmem:[%s4 + $0xa8] sm:$0xf]
        %v3182 = vld [vmem:[%s4 + $0xac] sm:$0xf]
        %v3183 = vld [vmem:[%s4 + $0xb0] sm:$0xf]
        %v3184 = vld [vmem:[%s4 + $0xb4] sm:$0xf]
        %v3185 = vld [vmem:[%s4 + $0xb8] sm:$0xf]
        %v3186 = vld [vmem:[%s4 + $0xbc] sm:$0xf]
        %v3188 = vshrl.u32 %v2981, 16
        %v3190 = vshll.u32 %v2981, 16
        %v3192 = vrot.slane %v3190, 1
        %v3193 = vor.u32 %v3188, %v3192
        %v3195 = vshll.u32 %v2982, 16
        %v3197 = vrot.slane %v3195, 1
        %v3198 = vsel %vm2985, %v3193, %v3197
        %v3202 = vrot.slane %v2981, 1
        %v3203 = vrot.slane %v2982, 1
        %v3204 = vsel %vm3106, %v3202, %v3203
        %v3206 = vld [vmem:[%s4 + $0xc0] sm:$0xf]
        %v3207 = vld [vmem:[%s4 + $0xc4] sm:$0xf]
        %v3208 = vld [vmem:[%s4 + $0xc8] sm:$0xf]
        %v3209 = vld [vmem:[%s4 + $0xcc] sm:$0xf]
        %v3210 = vld [vmem:[%s4 + $0xd0] sm:$0xf]
        %v3211 = vld [vmem:[%s4 + $0xd4] sm:$0xf]
        %v3212 = vld [vmem:[%s4 + $0xd8] sm:$0xf]
        %v3213 = vld [vmem:[%s4 + $0xdc] sm:$0xf]
        %v3214 = vld [vmem:[%s4 + $0xe0] sm:$0xf]
        %v3215 = vld [vmem:[%s4 + $0xe4] sm:$0xf]
        %v3216 = vld [vmem:[%s4 + $0xe8] sm:$0xf]
        %v3217 = vld [vmem:[%s4 + $0xec] sm:$0xf]
        %v3218 = vld [vmem:[%s4 + $0xf0] sm:$0xf]
        %v3219 = vld [vmem:[%s4 + $0xf4] sm:$0xf]
        %v3220 = vld [vmem:[%s4 + $0xf8] sm:$0xf]
        %v3221 = vld [vmem:[%s4 + $0xfc] sm:$0xf]
        %v3222 = vld [vmem:[%s4 + $0x100] sm:$0xf]
        %v3223 = vld [vmem:[%s4 + $0x104] sm:$0xf]
        %v3224 = vld [vmem:[%s4 + $0x108] sm:$0xf]
        %v3225 = vld [vmem:[%s4 + $0x10c] sm:$0xf]
        %v3226 = vld [vmem:[%s4 + $0x110] sm:$0xf]
        %v3227 = vld [vmem:[%s4 + $0x114] sm:$0xf]
        %v3228 = vld [vmem:[%s4 + $0x118] sm:$0xf]
        %v3229 = vld [vmem:[%s4 + $0x11c] sm:$0xf]
        %v3230 = vld [vmem:[%s4 + $0x120] sm:$0xf]
        %v3231 = vld [vmem:[%s4 + $0x124] sm:$0xf]
        %v3232 = vld [vmem:[%s4 + $0x128] sm:$0xf]
        %v3233 = vld [vmem:[%s4 + $0x12c] sm:$0xf]
        %v3234 = vld [vmem:[%s4 + $0x130] sm:$0xf]
        %v3235 = vld [vmem:[%s4 + $0x134] sm:$0xf]
        %v3236 = vld [vmem:[%s4 + $0x138] sm:$0xf]
        %v3237 = vld [vmem:[%s4 + $0x13c] sm:$0xf]
        %v3238 = vld [vmem:[%s4 + $0x140] sm:$0xf]
        %v3239 = vld [vmem:[%s4 + $0x144] sm:$0xf]
        %v3240 = vld [vmem:[%s4 + $0x148] sm:$0xf]
        %v3241 = vld [vmem:[%s4 + $0x14c] sm:$0xf]
        %v3242 = vld [vmem:[%s4 + $0x150] sm:$0xf]
        %v3243 = vld [vmem:[%s4 + $0x154] sm:$0xf]
        %v3244 = vld [vmem:[%s4 + $0x158] sm:$0xf]
        %v3245 = vld [vmem:[%s4 + $0x15c] sm:$0xf]
        %v3246 = vld [vmem:[%s4 + $0x160] sm:$0xf]
        %v3247 = vld [vmem:[%s4 + $0x164] sm:$0xf]
        %v3248 = vld [vmem:[%s4 + $0x168] sm:$0xf]
        %v3249 = vld [vmem:[%s4 + $0x16c] sm:$0xf]
        %v3250 = vld [vmem:[%s4 + $0x170] sm:$0xf]
        %v3251 = vld [vmem:[%s4 + $0x174] sm:$0xf]
        %v3252 = vld [vmem:[%s4 + $0x178] sm:$0xf]
        %v3253 = vld [vmem:[%s4 + $0x17c] sm:$0xf]
        %v3302 = vunpack.c.l.b16 %v3206
        %v3303 = vunpack.c.l.b16 %v3207
        %v3304 = vunpack.c.l.b16 %v3208
        %v3305 = vunpack.c.l.b16 %v3209
        %v3306 = vunpack.c.l.b16 %v3210
        %v3307 = vunpack.c.l.b16 %v3211
        %v3308 = vunpack.c.l.b16 %v3212
        %v3309 = vunpack.c.l.b16 %v3213
        %v3310 = vunpack.c.l.b16 %v3214
        %v3311 = vunpack.c.l.b16 %v3215
        %v3312 = vunpack.c.l.b16 %v3216
        %v3313 = vunpack.c.l.b16 %v3217
        %v3314 = vunpack.c.l.b16 %v3218
        %v3315 = vunpack.c.l.b16 %v3219
        %v3316 = vunpack.c.l.b16 %v3220
        %v3317 = vunpack.c.l.b16 %v3221
        %v3318 = vunpack.c.l.b16 %v3222
        %v3319 = vunpack.c.l.b16 %v3223
        %v3320 = vunpack.c.l.b16 %v3224
        %v3321 = vunpack.c.l.b16 %v3225
        %v3322 = vunpack.c.l.b16 %v3226
        %v3323 = vunpack.c.l.b16 %v3227
        %v3324 = vunpack.c.l.b16 %v3228
        %v3325 = vunpack.c.l.b16 %v3229
        %v3326 = vunpack.c.l.b16 %v3230
        %v3327 = vunpack.c.l.b16 %v3231
        %v3328 = vunpack.c.l.b16 %v3232
        %v3329 = vunpack.c.l.b16 %v3233
        %v3330 = vunpack.c.l.b16 %v3234
        %v3331 = vunpack.c.l.b16 %v3235
        %v3332 = vunpack.c.l.b16 %v3236
        %v3333 = vunpack.c.l.b16 %v3237
        %v3334 = vunpack.c.l.b16 %v3238
        %v3335 = vunpack.c.l.b16 %v3239
        %v3336 = vunpack.c.l.b16 %v3240
        %v3337 = vunpack.c.l.b16 %v3241
        %v3338 = vunpack.c.l.b16 %v3242
        %v3339 = vunpack.c.l.b16 %v3243
        %v3340 = vunpack.c.l.b16 %v3244
        %v3341 = vunpack.c.l.b16 %v3245
        %v3342 = vunpack.c.l.b16 %v3246
        %v3343 = vunpack.c.l.b16 %v3247
        %v3344 = vunpack.c.l.b16 %v3248
        %v3345 = vunpack.c.l.b16 %v3249
        %v3346 = vunpack.c.l.b16 %v3250
        %v3347 = vunpack.c.l.b16 %v3251
        %v3348 = vunpack.c.l.b16 %v3252
        %v3349 = vunpack.c.l.b16 %v3253
        %v3350 = vpack.c.b16 %v3303, %v3302
        %v3351 = vpack.c.b16 %v3305, %v3304
        %v3352 = vpack.c.b16 %v3307, %v3306
        %v3353 = vpack.c.b16 %v3309, %v3308
        %v3354 = vpack.c.b16 %v3311, %v3310
        %v3355 = vpack.c.b16 %v3313, %v3312
        %v3356 = vpack.c.b16 %v3315, %v3314
        %v3357 = vpack.c.b16 %v3317, %v3316
        %v3358 = vpack.c.b16 %v3319, %v3318
        %v3359 = vpack.c.b16 %v3321, %v3320
        %v3360 = vpack.c.b16 %v3323, %v3322
        %v3361 = vpack.c.b16 %v3325, %v3324
        %v3362 = vpack.c.b16 %v3327, %v3326
        %v3363 = vpack.c.b16 %v3329, %v3328
        %v3364 = vpack.c.b16 %v3331, %v3330
        %v3365 = vpack.c.b16 %v3333, %v3332
        %v3366 = vpack.c.b16 %v3335, %v3334
        %v3367 = vpack.c.b16 %v3337, %v3336
        %v3368 = vpack.c.b16 %v3339, %v3338
        %v3369 = vpack.c.b16 %v3341, %v3340
        %v3370 = vpack.c.b16 %v3343, %v3342
        %v3371 = vpack.c.b16 %v3345, %v3344
        %v3372 = vpack.c.b16 %v3347, %v3346
        %v3373 = vpack.c.b16 %v3349, %v3348
        %3398 = vmatprep.subr.bf16.mxu0 0
        %3399 = vmatpush1.bf16.msra.mxu0 %v3350
        %3400 = vmatprep.subr.bf16.mxu0 0
        %3401 = vmatpush1.bf16.msra.mxu0 %v3351
        %3402 = vmatprep.subr.bf16.mxu0 0
        %3403 = vmatpush1.bf16.msra.mxu0 %v3352
        %3404 = vmatprep.subr.bf16.mxu0 0
        %3405 = vmatpush1.bf16.msra.mxu0 %v3353
        %3406 = vmatprep.subr.bf16.mxu0 0
        %3407 = vmatpush1.bf16.msra.mxu0 %v3354
        %3408 = vmatprep.subr.bf16.mxu0 0
        %3409 = vmatpush1.bf16.msra.mxu0 %v3355
        %3410 = vmatprep.subr.bf16.mxu0 0
        %3411 = vmatpush1.bf16.msra.mxu0 %v3356
        %3412 = vmatprep.subr.bf16.mxu0 0
        %3413 = vmatpush1.bf16.msra.mxu0 %v3357
        %3414 = vmatprep.subr.bf16.mxu0 0
        %3415 = vmatpush1.bf16.msra.mxu0 %v3358
        %3416 = vmatprep.subr.bf16.mxu0 0
        %3417 = vmatpush1.bf16.msra.mxu0 %v3359
        %3418 = vmatprep.subr.bf16.mxu0 0
        %3419 = vmatpush1.bf16.msra.mxu0 %v3360
        %3420 = vmatprep.subr.bf16.mxu0 0
        %3421 = vmatpush1.bf16.msra.mxu0 %v3361
        %3422 = vmatprep.subr.bf16.mxu0 0
        %3423 = vmatpush1.bf16.msra.mxu0 %v3362
        %3424 = vmatprep.subr.bf16.mxu0 0
        %3425 = vmatpush1.bf16.msra.mxu0 %v3363
        %3426 = vmatprep.subr.bf16.mxu0 0
        %3427 = vmatpush1.bf16.msra.mxu0 %v3364
        %3428 = vmatprep.subr.bf16.mxu0 0
        %3429 = vmatpush1.bf16.msra.mxu0 %v3365
        %3430 = vmatprep.mubr.bf16.mxu0 %v3009
        %3431 = vmatmul.mubr.bf16.gmra.mrb[0].mxu0 %v2967
        %v3432 = vpop.f32.mrb[0].mxu0
        %v3433 = vadd.f32 0.0, %v3432
        %v3434 = vpop.f32.mrb[0].mxu0
        %v3435 = vpop.f32.mrb[0].mxu0
        %v3436 = vadd.f32 0.0, %v3435
        %v3437 = vpop.f32.mrb[0].mxu0
        %3438 = vmatprep.mubr.bf16.mxu0 %v3021
        %3439 = vmatmul.mubr.bf16.gmra.mrb[0].mxu0 %v2969
        %v3440 = vpop.f32.mrb[0].mxu0
        %v3441 = vadd.f32 0.0, %v3440
        %v3442 = vpop.f32.mrb[0].mxu0
        %v3443 = vpop.f32.mrb[0].mxu0
        %v3444 = vadd.f32 0.0, %v3443
        %v3445 = vpop.f32.mrb[0].mxu0
        %3446 = vmatprep.mubr.bf16.mxu0 %v3033
        %3447 = vmatmul.mubr.bf16.gmra.mrb[0].mxu0 %v2971
        %v3448 = vpop.f32.mrb[0].mxu0
        %v3449 = vadd.f32 0.0, %v3448
        %v3450 = vpop.f32.mrb[0].mxu0
        %v3451 = vpop.f32.mrb[0].mxu0
        %v3452 = vadd.f32 0.0, %v3451
        %v3453 = vpop.f32.mrb[0].mxu0
        %3454 = vmatprep.mubr.bf16.mxu0 %v3045
        %3455 = vmatmul.mubr.bf16.gmra.mrb[0].mxu0 %v2973
        %v3456 = vpop.f32.mrb[0].mxu0
        %v3457 = vadd.f32 0.0, %v3456
        %v3458 = vpop.f32.mrb[0].mxu0
        %v3459 = vpop.f32.mrb[0].mxu0
        %v3460 = vadd.f32 0.0, %v3459
        %v3461 = vpop.f32.mrb[0].mxu0
        %3462 = vmatprep.mubr.bf16.mxu0 %v3057
        %3463 = vmatmul.mubr.bf16.gmra.mrb[0].mxu0 %v2975
        %v3464 = vpop.f32.mrb[0].mxu0
        %v3465 = vadd.f32 0.0, %v3464
        %v3466 = vpop.f32.mrb[0].mxu0
        %v3467 = vpop.f32.mrb[0].mxu0
        %v3468 = vadd.f32 0.0, %v3467
        %v3469 = vpop.f32.mrb[0].mxu0
        %3470 = vmatprep.mubr.bf16.mxu0 %v3069
        %3471 = vmatmul.mubr.bf16.gmra.mrb[0].mxu0 %v2977
        %v3472 = vpop.f32.mrb[0].mxu0
        %v3473 = vadd.f32 0.0, %v3472
        %v3474 = vpop.f32.mrb[0].mxu0
        %v3475 = vpop.f32.mrb[0].mxu0
        %v3476 = vadd.f32 0.0, %v3475
        %v3477 = vpop.f32.mrb[0].mxu0
        %3478 = vmatprep.mubr.bf16.mxu0 %v3081
        %3479 = vmatmul.mubr.bf16.gmra.mrb[0].mxu0 %v2979
        %v3480 = vpop.f32.mrb[0].mxu0
        %v3481 = vadd.f32 0.0, %v3480
        %v3482 = vpop.f32.mrb[0].mxu0
        %v3483 = vpop.f32.mrb[0].mxu0
        %v3484 = vadd.f32 0.0, %v3483
        %v3485 = vpop.f32.mrb[0].mxu0
        %3486 = vmatprep.mubr.bf16.mxu0 %v3198
        %3487 = vmatmul.mubr.bf16.gmra.mrb[0].mxu0 %v2981
        %v3488 = vpop.f32.mrb[0].mxu0
        %v3489 = vadd.f32 0.0, %v3488
        %v3490 = vpop.f32.mrb[0].mxu0
        %v3491 = vpop.f32.mrb[0].mxu0
        %v3492 = vadd.f32 0.0, %v3491
        %v3493 = vpop.f32.mrb[0].mxu0
        %3494 = vdwg.mxu0
        %3495 = vmatprep.subr.bf16.mxu0 0
        %3496 = vmatpush1.bf16.msra.mxu0 %v3366
        %3497 = vmatprep.subr.bf16.mxu0 0
        %3498 = vmatpush1.bf16.msra.mxu0 %v3367
        %3499 = vmatprep.subr.bf16.mxu0 0
        %3500 = vmatpush1.bf16.msra.mxu0 %v3368
        %3501 = vmatprep.subr.bf16.mxu0 0
        %3502 = vmatpush1.bf16.msra.mxu0 %v3369
        %3503 = vmatprep.subr.bf16.mxu0 0
        %3504 = vmatpush1.bf16.msra.mxu0 %v3370
        %3505 = vmatprep.subr.bf16.mxu0 0
        %3506 = vmatpush1.bf16.msra.mxu0 %v3371
        %3507 = vmatprep.subr.bf16.mxu0 0
        %3508 = vmatpush1.bf16.msra.mxu0 %v3372
        %3509 = vmatprep.subr.bf16.mxu0 0
        %3510 = vmatpush1.bf16.msra.mxu0 %v3373
        %3511 = vmatprep.subr.bf16.mxu0 0
        %3512 = vmatpush1.bf16.msra.mxu0 0
        %3513 = vmatprep.subr.bf16.mxu0 0
        %3514 = vmatpush1.bf16.msra.mxu0 0
        %3515 = vmatprep.subr.bf16.mxu0 0
        %3516 = vmatpush1.bf16.msra.mxu0 0
        %3517 = vmatprep.subr.bf16.mxu0 0
        %3518 = vmatpush1.bf16.msra.mxu0 0
        %3519 = vmatprep.subr.bf16.mxu0 0
        %3520 = vmatpush1.bf16.msra.mxu0 0
        %3521 = vmatprep.subr.bf16.mxu0 0
        %3522 = vmatpush1.bf16.msra.mxu0 0
        %3523 = vmatprep.subr.bf16.mxu0 0
        %3524 = vmatpush1.bf16.msra.mxu0 0
        %3525 = vmatprep.subr.bf16.mxu0 0
        %3526 = vmatpush1.bf16.msra.mxu0 0
        %3527 = vmatprep.mubr.bf16.mxu0 0
        %3528 = vmatmul.mubr.bf16.gmra.mrb[0].mxu0 %v3112
        %v3529 = vpop.f32.mrb[0].mxu0
        %v3530 = vadd.f32 %v3433, %v3529
        %v3531 = vpop.f32.mrb[0].mxu0
        %v3532 = vpop.f32.mrb[0].mxu0
        %v3533 = vadd.f32 %v3436, %v3532
        %v3534 = vpop.f32.mrb[0].mxu0
        %3535 = vmatprep.mubr.bf16.mxu0 0
        %3536 = vmatmul.mubr.bf16.gmra.mrb[0].mxu0 %v3115
        %v3537 = vpop.f32.mrb[0].mxu0
        %v3538 = vadd.f32 %v3441, %v3537
        %v3539 = vpop.f32.mrb[0].mxu0
        %v3540 = vpop.f32.mrb[0].mxu0
        %v3541 = vadd.f32 %v3444, %v3540
        %v3542 = vpop.f32.mrb[0].mxu0
        %3543 = vmatprep.mubr.bf16.mxu0 0
        %3544 = vmatmul.mubr.bf16.gmra.mrb[0].mxu0 %v3118
        %v3545 = vpop.f32.mrb[0].mxu0
        %v3546 = vadd.f32 %v3449, %v3545
        %v3547 = vpop.f32.mrb[0].mxu0
        %v3548 = vpop.f32.mrb[0].mxu0
        %v3549 = vadd.f32 %v3452, %v3548
        %v3550 = vpop.f32.mrb[0].mxu0
        %3551 = vmatprep.mubr.bf16.mxu0 0
        %3552 = vmatmul.mubr.bf16.gmra.mrb[0].mxu0 %v3121
        %v3553 = vpop.f32.mrb[0].mxu0
        %v3554 = vadd.f32 %v3457, %v3553
        %v3555 = vpop.f32.mrb[0].mxu0
        %v3556 = vpop.f32.mrb[0].mxu0
        %v3557 = vadd.f32 %v3460, %v3556
        %v3558 = vpop.f32.mrb[0].mxu0
        %3559 = vmatprep.mubr.bf16.mxu0 0
        %3560 = vmatmul.mubr.bf16.gmra.mrb[0].mxu0 %v3124
        %v3561 = vpop.f32.mrb[0].mxu0
        %v3562 = vadd.f32 %v3465, %v3561
        %v3563 = vpop.f32.mrb[0].mxu0
        %v3564 = vpop.f32.mrb[0].mxu0
        %v3565 = vadd.f32 %v3468, %v3564
        %v3566 = vpop.f32.mrb[0].mxu0
        %3567 = vmatprep.mubr.bf16.mxu0 0
        %3568 = vmatmul.mubr.bf16.gmra.mrb[0].mxu0 %v3127
        %v3569 = vpop.f32.mrb[0].mxu0
        %v3570 = vadd.f32 %v3473, %v3569
        %v3571 = vpop.f32.mrb[0].mxu0
        %v3572 = vpop.f32.mrb[0].mxu0
        %v3573 = vadd.f32 %v3476, %v3572
        %v3574 = vpop.f32.mrb[0].mxu0
        %3575 = vmatprep.mubr.bf16.mxu0 0
        %3576 = vmatmul.mubr.bf16.gmra.mrb[0].mxu0 %v3130
        %v3577 = vpop.f32.mrb[0].mxu0
        %v3578 = vadd.f32 %v3481, %v3577
        %v3579 = vpop.f32.mrb[0].mxu0
        %v3580 = vpop.f32.mrb[0].mxu0
        %v3581 = vadd.f32 %v3484, %v3580
        %v3582 = vpop.f32.mrb[0].mxu0
        %3583 = vmatprep.mubr.bf16.mxu0 0
        %3584 = vmatmul.mubr.bf16.gmra.mrb[0].mxu0 %v3204
        %v3585 = vpop.f32.mrb[0].mxu0
        %v3586 = vadd.f32 %v3489, %v3585
        %v3587 = vpop.f32.mrb[0].mxu0
        %v3588 = vpop.f32.mrb[0].mxu0
        %v3589 = vadd.f32 %v3492, %v3588
        %v3590 = vpop.f32.mrb[0].mxu0
        %3591 = vdwg.mxu0
        %v3640 = vunpack.c.l.b16 %v3139
        %v3641 = vunpack.c.l.b16 %v3140
        %v3642 = vunpack.c.l.b16 %v3141
        %v3643 = vunpack.c.l.b16 %v3142
        %v3644 = vunpack.c.l.b16 %v3143
        %v3645 = vunpack.c.l.b16 %v3144
        %v3646 = vunpack.c.l.b16 %v3145
        %v3647 = vunpack.c.l.b16 %v3146
        %v3648 = vunpack.c.l.b16 %v3147
        %v3649 = vunpack.c.l.b16 %v3148
        %v3650 = vunpack.c.l.b16 %v3149
        %v3651 = vunpack.c.l.b16 %v3150
        %v3652 = vunpack.c.l.b16 %v3151
        %v3653 = vunpack.c.l.b16 %v3152
        %v3654 = vunpack.c.l.b16 %v3153
        %v3655 = vunpack.c.l.b16 %v3154
        %v3656 = vunpack.c.l.b16 %v3155
        %v3657 = vunpack.c.l.b16 %v3156
        %v3658 = vunpack.c.l.b16 %v3157
        %v3659 = vunpack.c.l.b16 %v3158
        %v3660 = vunpack.c.l.b16 %v3159
        %v3661 = vunpack.c.l.b16 %v3160
        %v3662 = vunpack.c.l.b16 %v3161
        %v3663 = vunpack.c.l.b16 %v3162
        %v3664 = vunpack.c.l.b16 %v3163
        %v3665 = vunpack.c.l.b16 %v3164
        %v3666 = vunpack.c.l.b16 %v3165
        %v3667 = vunpack.c.l.b16 %v3166
        %v3668 = vunpack.c.l.b16 %v3167
        %v3669 = vunpack.c.l.b16 %v3168
        %v3670 = vunpack.c.l.b16 %v3169
        %v3671 = vunpack.c.l.b16 %v3170
        %v3672 = vunpack.c.l.b16 %v3171
        %v3673 = vunpack.c.l.b16 %v3172
        %v3674 = vunpack.c.l.b16 %v3173
        %v3675 = vunpack.c.l.b16 %v3174
        %v3676 = vunpack.c.l.b16 %v3175
        %v3677 = vunpack.c.l.b16 %v3176
        %v3678 = vunpack.c.l.b16 %v3177
        %v3679 = vunpack.c.l.b16 %v3178
        %v3680 = vunpack.c.l.b16 %v3179
        %v3681 = vunpack.c.l.b16 %v3180
        %v3682 = vunpack.c.l.b16 %v3181
        %v3683 = vunpack.c.l.b16 %v3182
        %v3684 = vunpack.c.l.b16 %v3183
        %v3685 = vunpack.c.l.b16 %v3184
        %v3686 = vunpack.c.l.b16 %v3185
        %v3687 = vunpack.c.l.b16 %v3186
        %v3688 = vpack.c.b16 %v3641, %v3640
        %v3689 = vpack.c.b16 %v3643, %v3642
        %v3690 = vpack.c.b16 %v3645, %v3644
        %v3691 = vpack.c.b16 %v3647, %v3646
        %v3692 = vpack.c.b16 %v3649, %v3648
        %v3693 = vpack.c.b16 %v3651, %v3650
        %v3694 = vpack.c.b16 %v3653, %v3652
        %v3695 = vpack.c.b16 %v3655, %v3654
        %v3696 = vpack.c.b16 %v3657, %v3656
        %v3697 = vpack.c.b16 %v3659, %v3658
        %v3698 = vpack.c.b16 %v3661, %v3660
        %v3699 = vpack.c.b16 %v3663, %v3662
        %v3700 = vpack.c.b16 %v3665, %v3664
        %v3701 = vpack.c.b16 %v3667, %v3666
        %v3702 = vpack.c.b16 %v3669, %v3668
        %v3703 = vpack.c.b16 %v3671, %v3670
        %v3704 = vpack.c.b16 %v3673, %v3672
        %v3705 = vpack.c.b16 %v3675, %v3674
        %v3706 = vpack.c.b16 %v3677, %v3676
        %v3707 = vpack.c.b16 %v3679, %v3678
        %v3708 = vpack.c.b16 %v3681, %v3680
        %v3709 = vpack.c.b16 %v3683, %v3682
        %v3710 = vpack.c.b16 %v3685, %v3684
        %v3711 = vpack.c.b16 %v3687, %v3686
        %3736 = vmatprep.subr.bf16.mxu0 0
        %3737 = vmatpush1.bf16.msra.mxu0 %v3688
        %3738 = vmatprep.subr.bf16.mxu0 0
        %3739 = vmatpush1.bf16.msra.mxu0 %v3689
        %3740 = vmatprep.subr.bf16.mxu0 0
        %3741 = vmatpush1.bf16.msra.mxu0 %v3690
        %3742 = vmatprep.subr.bf16.mxu0 0
        %3743 = vmatpush1.bf16.msra.mxu0 %v3691
        %3744 = vmatprep.subr.bf16.mxu0 0
        %3745 = vmatpush1.bf16.msra.mxu0 %v3692
        %3746 = vmatprep.subr.bf16.mxu0 0
        %3747 = vmatpush1.bf16.msra.mxu0 %v3693
        %3748 = vmatprep.subr.bf16.mxu0 0
        %3749 = vmatpush1.bf16.msra.mxu0 %v3694
        %3750 = vmatprep.subr.bf16.mxu0 0
        %3751 = vmatpush1.bf16.msra.mxu0 %v3695
        %3752 = vmatprep.subr.bf16.mxu0 0
        %3753 = vmatpush1.bf16.msra.mxu0 %v3696
        %3754 = vmatprep.subr.bf16.mxu0 0
        %3755 = vmatpush1.bf16.msra.mxu0 %v3697
        %3756 = vmatprep.subr.bf16.mxu0 0
        %3757 = vmatpush1.bf16.msra.mxu0 %v3698
        %3758 = vmatprep.subr.bf16.mxu0 0
        %3759 = vmatpush1.bf16.msra.mxu0 %v3699
        %3760 = vmatprep.subr.bf16.mxu0 0
        %3761 = vmatpush1.bf16.msra.mxu0 %v3700
        %3762 = vmatprep.subr.bf16.mxu0 0
        %3763 = vmatpush1.bf16.msra.mxu0 %v3701
        %3764 = vmatprep.subr.bf16.mxu0 0
        %3765 = vmatpush1.bf16.msra.mxu0 %v3702
        %3766 = vmatprep.subr.bf16.mxu0 0
        %3767 = vmatpush1.bf16.msra.mxu0 %v3703
        %3768 = vmatprep.mubr.bf16.mxu0 %v2997
        %3769 = vmatmul.mubr.bf16.gmra.mrb[0].mxu0 %v2965
        %v3770 = vpop.f32.mrb[0].mxu0
        %v3771 = vadd.f32 %v3530, %v3770
        %v3772 = vpop.f32.mrb[0].mxu0
        %v3773 = vpop.f32.mrb[0].mxu0
        %v3774 = vadd.f32 %v3533, %v3773
        %v3775 = vpop.f32.mrb[0].mxu0
        %3776 = vmatprep.mubr.bf16.mxu0 %v3009
        %3777 = vmatmul.mubr.bf16.gmra.mrb[0].mxu0 %v2967
        %v3778 = vpop.f32.mrb[0].mxu0
        %v3779 = vadd.f32 %v3538, %v3778
        %v3780 = vpop.f32.mrb[0].mxu0
        %v3781 = vpop.f32.mrb[0].mxu0
        %v3782 = vadd.f32 %v3541, %v3781
        %v3783 = vpop.f32.mrb[0].mxu0
        %3784 = vmatprep.mubr.bf16.mxu0 %v3021
        %3785 = vmatmul.mubr.bf16.gmra.mrb[0].mxu0 %v2969
        %v3786 = vpop.f32.mrb[0].mxu0
        %v3787 = vadd.f32 %v3546, %v3786
        %v3788 = vpop.f32.mrb[0].mxu0
        %v3789 = vpop.f32.mrb[0].mxu0
        %v3790 = vadd.f32 %v3549, %v3789
        %v3791 = vpop.f32.mrb[0].mxu0
        %3792 = vmatprep.mubr.bf16.mxu0 %v3033
        %3793 = vmatmul.mubr.bf16.gmra.mrb[0].mxu0 %v2971
        %v3794 = vpop.f32.mrb[0].mxu0
        %v3795 = vadd.f32 %v3554, %v3794
        %v3796 = vpop.f32.mrb[0].mxu0
        %v3797 = vpop.f32.mrb[0].mxu0
        %v3798 = vadd.f32 %v3557, %v3797
        %v3799 = vpop.f32.mrb[0].mxu0
        %3800 = vmatprep.mubr.bf16.mxu0 %v3045
        %3801 = vmatmul.mubr.bf16.gmra.mrb[0].mxu0 %v2973
        %v3802 = vpop.f32.mrb[0].mxu0
        %v3803 = vadd.f32 %v3562, %v3802
        %v3804 = vpop.f32.mrb[0].mxu0
        %v3805 = vpop.f32.mrb[0].mxu0
        %v3806 = vadd.f32 %v3565, %v3805
        %v3807 = vpop.f32.mrb[0].mxu0
        %3808 = vmatprep.mubr.bf16.mxu0 %v3057
        %3809 = vmatmul.mubr.bf16.gmra.mrb[0].mxu0 %v2975
        %v3810 = vpop.f32.mrb[0].mxu0
        %v3811 = vadd.f32 %v3570, %v3810
        %v3812 = vpop.f32.mrb[0].mxu0
        %v3813 = vpop.f32.mrb[0].mxu0
        %v3814 = vadd.f32 %v3573, %v3813
        %v3815 = vpop.f32.mrb[0].mxu0
        %3816 = vmatprep.mubr.bf16.mxu0 %v3069
        %3817 = vmatmul.mubr.bf16.gmra.mrb[0].mxu0 %v2977
        %v3818 = vpop.f32.mrb[0].mxu0
        %v3819 = vadd.f32 %v3578, %v3818
        %v3820 = vpop.f32.mrb[0].mxu0
        %v3821 = vpop.f32.mrb[0].mxu0
        %v3822 = vadd.f32 %v3581, %v3821
        %v3823 = vpop.f32.mrb[0].mxu0
        %3824 = vmatprep.mubr.bf16.mxu0 %v3081
        %3825 = vmatmul.mubr.bf16.gmra.mrb[0].mxu0 %v2979
        %v3826 = vpop.f32.mrb[0].mxu0
        %v3827 = vadd.f32 %v3586, %v3826
        %v3828 = vpop.f32.mrb[0].mxu0
        %v3829 = vpop.f32.mrb[0].mxu0
        %v3830 = vadd.f32 %v3589, %v3829
        %v3831 = vpop.f32.mrb[0].mxu0
        %3832 = vdwg.mxu0
        %3833 = vmatprep.subr.bf16.mxu0 0
        %3834 = vmatpush1.bf16.msra.mxu0 %v3704
        %3835 = vmatprep.subr.bf16.mxu0 0
        %3836 = vmatpush1.bf16.msra.mxu0 %v3705
        %3837 = vmatprep.subr.bf16.mxu0 0
        %3838 = vmatpush1.bf16.msra.mxu0 %v3706
        %3839 = vmatprep.subr.bf16.mxu0 0
        %3840 = vmatpush1.bf16.msra.mxu0 %v3707
        %3841 = vmatprep.subr.bf16.mxu0 0
        %3842 = vmatpush1.bf16.msra.mxu0 %v3708
        %3843 = vmatprep.subr.bf16.mxu0 0
        %3844 = vmatpush1.bf16.msra.mxu0 %v3709
        %3845 = vmatprep.subr.bf16.mxu0 0
        %3846 = vmatpush1.bf16.msra.mxu0 %v3710
        %3847 = vmatprep.subr.bf16.mxu0 0
        %3848 = vmatpush1.bf16.msra.mxu0 %v3711
        %3849 = vmatprep.subr.bf16.mxu0 0
        %3850 = vmatpush1.bf16.msra.mxu0 0
        %3851 = vmatprep.subr.bf16.mxu0 0
        %3852 = vmatpush1.bf16.msra.mxu0 0
        %3853 = vmatprep.subr.bf16.mxu0 0
        %3854 = vmatpush1.bf16.msra.mxu0 0
        %3855 = vmatprep.subr.bf16.mxu0 0
        %3856 = vmatpush1.bf16.msra.mxu0 0
        %3857 = vmatprep.subr.bf16.mxu0 0
        %3858 = vmatpush1.bf16.msra.mxu0 0
        %3859 = vmatprep.subr.bf16.mxu0 0
        %3860 = vmatpush1.bf16.msra.mxu0 0
        %3861 = vmatprep.subr.bf16.mxu0 0
        %3862 = vmatpush1.bf16.msra.mxu0 0
        %3863 = vmatprep.subr.bf16.mxu0 0
        %3864 = vmatpush1.bf16.msra.mxu0 0
        %3865 = vmatprep.mubr.bf16.mxu0 0
        %3866 = vmatmul.mubr.bf16.gmra.mrb[0].mxu0 %v3109
        %v3867 = vpop.f32.mrb[0].mxu0
        %v3868 = vadd.f32 %v3771, %v3867
        %v3869 = vpop.f32.mrb[0].mxu0
        %v3870 = vpop.f32.mrb[0].mxu0
        %v3871 = vadd.f32 %v3774, %v3870
        %v3872 = vpop.f32.mrb[0].mxu0
        %3873 = vmatprep.mubr.bf16.mxu0 0
        %3874 = vmatmul.mubr.bf16.gmra.mrb[0].mxu0 %v3112
        %v3875 = vpop.f32.mrb[0].mxu0
        %v3876 = vadd.f32 %v3779, %v3875
        %v3877 = vpop.f32.mrb[0].mxu0
        %v3878 = vpop.f32.mrb[0].mxu0
        %v3879 = vadd.f32 %v3782, %v3878
        %v3880 = vpop.f32.mrb[0].mxu0
        %3881 = vmatprep.mubr.bf16.mxu0 0
        %3882 = vmatmul.mubr.bf16.gmra.mrb[0].mxu0 %v3115
        %v3883 = vpop.f32.mrb[0].mxu0
        %v3884 = vadd.f32 %v3787, %v3883
        %v3885 = vpop.f32.mrb[0].mxu0
        %v3886 = vpop.f32.mrb[0].mxu0
        %v3887 = vadd.f32 %v3790, %v3886
        %v3888 = vpop.f32.mrb[0].mxu0
        %3889 = vmatprep.mubr.bf16.mxu0 0
        %3890 = vmatmul.mubr.bf16.gmra.mrb[0].mxu0 %v3118
        %v3891 = vpop.f32.mrb[0].mxu0
        %v3892 = vadd.f32 %v3795, %v3891
        %v3893 = vpop.f32.mrb[0].mxu0
        %v3894 = vpop.f32.mrb[0].mxu0
        %v3895 = vadd.f32 %v3798, %v3894
        %v3896 = vpop.f32.mrb[0].mxu0
        %3897 = vmatprep.mubr.bf16.mxu0 0
        %3898 = vmatmul.mubr.bf16.gmra.mrb[0].mxu0 %v3121
        %v3899 = vpop.f32.mrb[0].mxu0
        %v3900 = vadd.f32 %v3803, %v3899
        %v3901 = vpop.f32.mrb[0].mxu0
        %v3902 = vpop.f32.mrb[0].mxu0
        %v3903 = vadd.f32 %v3806, %v3902
        %v3904 = vpop.f32.mrb[0].mxu0
        %3905 = vmatprep.mubr.bf16.mxu0 0
        %3906 = vmatmul.mubr.bf16.gmra.mrb[0].mxu0 %v3124
        %v3907 = vpop.f32.mrb[0].mxu0
        %v3908 = vadd.f32 %v3811, %v3907
        %v3909 = vpop.f32.mrb[0].mxu0
        %v3910 = vpop.f32.mrb[0].mxu0
        %v3911 = vadd.f32 %v3814, %v3910
        %v3912 = vpop.f32.mrb[0].mxu0
        %3913 = vmatprep.mubr.bf16.mxu0 0
        %3914 = vmatmul.mubr.bf16.gmra.mrb[0].mxu0 %v3127
        %v3915 = vpop.f32.mrb[0].mxu0
        %v3916 = vadd.f32 %v3819, %v3915
        %v3917 = vpop.f32.mrb[0].mxu0
        %v3918 = vpop.f32.mrb[0].mxu0
        %v3919 = vadd.f32 %v3822, %v3918
        %v3920 = vpop.f32.mrb[0].mxu0
        %3921 = vmatprep.mubr.bf16.mxu0 0
        %3922 = vmatmul.mubr.bf16.gmra.mrb[0].mxu0 %v3130
        %v3923 = vpop.f32.mrb[0].mxu0
        %v3924 = vadd.f32 %v3827, %v3923
        %v3925 = vpop.f32.mrb[0].mxu0
        %v3926 = vpop.f32.mrb[0].mxu0
        %v3927 = vadd.f32 %v3830, %v3926
        %v3928 = vpop.f32.mrb[0].mxu0
        %3929 = vdwg.mxu0
        %v3931 = vshrl.u32 %v2983, 16
        %v3933 = vshll.u32 %v2983, 16
        %v3935 = vrot.slane %v3933, 1
        %v3936 = vor.u32 %v3931, %v3935
        %v3938 = vshll.u32 %v2984, 16
        %v3940 = vrot.slane %v3938, 1
        %v3941 = vsel %vm2985, %v3936, %v3940
        %v3945 = vrot.slane %v2983, 1
        %v3946 = vrot.slane %v2984, 1
        %v3947 = vsel %vm3106, %v3945, %v3946
        %v3949 = vld [vmem:[%s4 + $0x180] sm:$0xf]
        %v3950 = vld [vmem:[%s4 + $0x184] sm:$0xf]
        %v3951 = vld [vmem:[%s4 + $0x188] sm:$0xf]
        %v3952 = vld [vmem:[%s4 + $0x18c] sm:$0xf]
        %v3953 = vld [vmem:[%s4 + $0x190] sm:$0xf]
        %v3954 = vld [vmem:[%s4 + $0x194] sm:$0xf]
        %v3955 = vld [vmem:[%s4 + $0x198] sm:$0xf]
        %v3956 = vld [vmem:[%s4 + $0x19c] sm:$0xf]
        %v3957 = vld [vmem:[%s4 + $0x1a0] sm:$0xf]
        %v3958 = vld [vmem:[%s4 + $0x1a4] sm:$0xf]
        %v3959 = vld [vmem:[%s4 + $0x1a8] sm:$0xf]
        %v3960 = vld [vmem:[%s4 + $0x1ac] sm:$0xf]
        %v3961 = vld [vmem:[%s4 + $0x1b0] sm:$0xf]
        %v3962 = vld [vmem:[%s4 + $0x1b4] sm:$0xf]
        %v3963 = vld [vmem:[%s4 + $0x1b8] sm:$0xf]
        %v3964 = vld [vmem:[%s4 + $0x1bc] sm:$0xf]
        %v3965 = vld [vmem:[%s4 + $0x1c0] sm:$0xf]
        %v3966 = vld [vmem:[%s4 + $0x1c4] sm:$0xf]
        %v3967 = vld [vmem:[%s4 + $0x1c8] sm:$0xf]
        %v3968 = vld [vmem:[%s4 + $0x1cc] sm:$0xf]
        %v3969 = vld [vmem:[%s4 + $0x1d0] sm:$0xf]
        %v3970 = vld [vmem:[%s4 + $0x1d4] sm:$0xf]
        %v3971 = vld [vmem:[%s4 + $0x1d8] sm:$0xf]
        %v3972 = vld [vmem:[%s4 + $0x1dc] sm:$0xf]
        %v3973 = vld [vmem:[%s4 + $0x1e0] sm:$0xf]
        %v3974 = vld [vmem:[%s4 + $0x1e4] sm:$0xf]
        %v3975 = vld [vmem:[%s4 + $0x1e8] sm:$0xf]
        %v3976 = vld [vmem:[%s4 + $0x1ec] sm:$0xf]
        %v3977 = vld [vmem:[%s4 + $0x1f0] sm:$0xf]
        %v3978 = vld [vmem:[%s4 + $0x1f4] sm:$0xf]
        %v3979 = vld [vmem:[%s4 + $0x1f8] sm:$0xf]
        %v3980 = vld [vmem:[%s4 + $0x1fc] sm:$0xf]
        %v3981 = vld [vmem:[%s4 + $0x200] sm:$0xf]
        %v3982 = vld [vmem:[%s4 + $0x204] sm:$0xf]
        %v3983 = vld [vmem:[%s4 + $0x208] sm:$0xf]
        %v3984 = vld [vmem:[%s4 + $0x20c] sm:$0xf]
        %v3985 = vld [vmem:[%s4 + $0x210] sm:$0xf]
        %v3986 = vld [vmem:[%s4 + $0x214] sm:$0xf]
        %v3987 = vld [vmem:[%s4 + $0x218] sm:$0xf]
        %v3988 = vld [vmem:[%s4 + $0x21c] sm:$0xf]
        %v3989 = vld [vmem:[%s4 + $0x220] sm:$0xf]
        %v3990 = vld [vmem:[%s4 + $0x224] sm:$0xf]
        %v3991 = vld [vmem:[%s4 + $0x228] sm:$0xf]
        %v3992 = vld [vmem:[%s4 + $0x22c] sm:$0xf]
        %v3993 = vld [vmem:[%s4 + $0x230] sm:$0xf]
        %v3994 = vld [vmem:[%s4 + $0x234] sm:$0xf]
        %v3995 = vld [vmem:[%s4 + $0x238] sm:$0xf]
        %v3996 = vld [vmem:[%s4 + $0x23c] sm:$0xf]
        %v4045 = vunpack.c.l.b16 %v3949
        %v4046 = vunpack.c.l.b16 %v3950
        %v4047 = vunpack.c.l.b16 %v3951
        %v4048 = vunpack.c.l.b16 %v3952
        %v4049 = vunpack.c.l.b16 %v3953
        %v4050 = vunpack.c.l.b16 %v3954
        %v4051 = vunpack.c.l.b16 %v3955
        %v4052 = vunpack.c.l.b16 %v3956
        %v4053 = vunpack.c.l.b16 %v3957
        %v4054 = vunpack.c.l.b16 %v3958
        %v4055 = vunpack.c.l.b16 %v3959
        %v4056 = vunpack.c.l.b16 %v3960
        %v4057 = vunpack.c.l.b16 %v3961
        %v4058 = vunpack.c.l.b16 %v3962
        %v4059 = vunpack.c.l.b16 %v3963
        %v4060 = vunpack.c.l.b16 %v3964
        %v4061 = vunpack.c.l.b16 %v3965
        %v4062 = vunpack.c.l.b16 %v3966
        %v4063 = vunpack.c.l.b16 %v3967
        %v4064 = vunpack.c.l.b16 %v3968
        %v4065 = vunpack.c.l.b16 %v3969
        %v4066 = vunpack.c.l.b16 %v3970
        %v4067 = vunpack.c.l.b16 %v3971
        %v4068 = vunpack.c.l.b16 %v3972
        %v4069 = vunpack.c.l.b16 %v3973
        %v4070 = vunpack.c.l.b16 %v3974
        %v4071 = vunpack.c.l.b16 %v3975
        %v4072 = vunpack.c.l.b16 %v3976
        %v4073 = vunpack.c.l.b16 %v3977
        %v4074 = vunpack.c.l.b16 %v3978
        %v4075 = vunpack.c.l.b16 %v3979
        %v4076 = vunpack.c.l.b16 %v3980
        %v4077 = vunpack.c.l.b16 %v3981
        %v4078 = vunpack.c.l.b16 %v3982
        %v4079 = vunpack.c.l.b16 %v3983
        %v4080 = vunpack.c.l.b16 %v3984
        %v4081 = vunpack.c.l.b16 %v3985
        %v4082 = vunpack.c.l.b16 %v3986
        %v4083 = vunpack.c.l.b16 %v3987
        %v4084 = vunpack.c.l.b16 %v3988
        %v4085 = vunpack.c.l.b16 %v3989
        %v4086 = vunpack.c.l.b16 %v3990
        %v4087 = vunpack.c.l.b16 %v3991
        %v4088 = vunpack.c.l.b16 %v3992
        %v4089 = vunpack.c.l.b16 %v3993
        %v4090 = vunpack.c.l.b16 %v3994
        %v4091 = vunpack.c.l.b16 %v3995
        %v4092 = vunpack.c.l.b16 %v3996
        %v4093 = vpack.c.b16 %v4046, %v4045
        %v4094 = vpack.c.b16 %v4048, %v4047
        %v4095 = vpack.c.b16 %v4050, %v4049
        %v4096 = vpack.c.b16 %v4052, %v4051
        %v4097 = vpack.c.b16 %v4054, %v4053
        %v4098 = vpack.c.b16 %v4056, %v4055
        %v4099 = vpack.c.b16 %v4058, %v4057
        %v4100 = vpack.c.b16 %v4060, %v4059
        %v4101 = vpack.c.b16 %v4062, %v4061
        %v4102 = vpack.c.b16 %v4064, %v4063
        %v4103 = vpack.c.b16 %v4066, %v4065
        %v4104 = vpack.c.b16 %v4068, %v4067
        %v4105 = vpack.c.b16 %v4070, %v4069
        %v4106 = vpack.c.b16 %v4072, %v4071
        %v4107 = vpack.c.b16 %v4074, %v4073
        %v4108 = vpack.c.b16 %v4076, %v4075
        %v4109 = vpack.c.b16 %v4078, %v4077
        %v4110 = vpack.c.b16 %v4080, %v4079
        %v4111 = vpack.c.b16 %v4082, %v4081
        %v4112 = vpack.c.b16 %v4084, %v4083
        %v4113 = vpack.c.b16 %v4086, %v4085
        %v4114 = vpack.c.b16 %v4088, %v4087
        %v4115 = vpack.c.b16 %v4090, %v4089
        %v4116 = vpack.c.b16 %v4092, %v4091
        %4141 = vmatprep.subr.bf16.mxu0 0
        %4142 = vmatpush1.bf16.msra.mxu0 %v4093
        %4143 = vmatprep.subr.bf16.mxu0 0
        %4144 = vmatpush1.bf16.msra.mxu0 %v4094
        %4145 = vmatprep.subr.bf16.mxu0 0
        %4146 = vmatpush1.bf16.msra.mxu0 %v4095
        %4147 = vmatprep.subr.bf16.mxu0 0
        %4148 = vmatpush1.bf16.msra.mxu0 %v4096
        %4149 = vmatprep.subr.bf16.mxu0 0
        %4150 = vmatpush1.bf16.msra.mxu0 %v4097
        %4151 = vmatprep.subr.bf16.mxu0 0
        %4152 = vmatpush1.bf16.msra.mxu0 %v4098
        %4153 = vmatprep.subr.bf16.mxu0 0
        %4154 = vmatpush1.bf16.msra.mxu0 %v4099
        %4155 = vmatprep.subr.bf16.mxu0 0
        %4156 = vmatpush1.bf16.msra.mxu0 %v4100
        %4157 = vmatprep.subr.bf16.mxu0 0
        %4158 = vmatpush1.bf16.msra.mxu0 %v4101
        %4159 = vmatprep.subr.bf16.mxu0 0
        %4160 = vmatpush1.bf16.msra.mxu0 %v4102
        %4161 = vmatprep.subr.bf16.mxu0 0
        %4162 = vmatpush1.bf16.msra.mxu0 %v4103
        %4163 = vmatprep.subr.bf16.mxu0 0
        %4164 = vmatpush1.bf16.msra.mxu0 %v4104
        %4165 = vmatprep.subr.bf16.mxu0 0
        %4166 = vmatpush1.bf16.msra.mxu0 %v4105
        %4167 = vmatprep.subr.bf16.mxu0 0
        %4168 = vmatpush1.bf16.msra.mxu0 %v4106
        %4169 = vmatprep.subr.bf16.mxu0 0
        %4170 = vmatpush1.bf16.msra.mxu0 %v4107
        %4171 = vmatprep.subr.bf16.mxu0 0
        %4172 = vmatpush1.bf16.msra.mxu0 %v4108
        %4173 = vmatprep.mubr.bf16.mxu0 %v3021
        %4174 = vmatmul.mubr.bf16.gmra.mrb[0].mxu0 %v2969
        %v4175 = vpop.f32.mrb[0].mxu0
        %v4176 = vadd.f32 0.0, %v4175
        %v4177 = vpop.f32.mrb[0].mxu0
        %v4178 = vpop.f32.mrb[0].mxu0
        %v4179 = vadd.f32 0.0, %v4178
        %v4180 = vpop.f32.mrb[0].mxu0
        %4181 = vmatprep.mubr.bf16.mxu0 %v3033
        %4182 = vmatmul.mubr.bf16.gmra.mrb[0].mxu0 %v2971
        %v4183 = vpop.f32.mrb[0].mxu0
        %v4184 = vadd.f32 0.0, %v4183
        %v4185 = vpop.f32.mrb[0].mxu0
        %v4186 = vpop.f32.mrb[0].mxu0
        %v4187 = vadd.f32 0.0, %v4186
        %v4188 = vpop.f32.mrb[0].mxu0
        %4189 = vmatprep.mubr.bf16.mxu0 %v3045
        %4190 = vmatmul.mubr.bf16.gmra.mrb[0].mxu0 %v2973
        %v4191 = vpop.f32.mrb[0].mxu0
        %v4192 = vadd.f32 0.0, %v4191
        %v4193 = vpop.f32.mrb[0].mxu0
        %v4194 = vpop.f32.mrb[0].mxu0
        %v4195 = vadd.f32 0.0, %v4194
        %v4196 = vpop.f32.mrb[0].mxu0
        %4197 = vmatprep.mubr.bf16.mxu0 %v3057
        %4198 = vmatmul.mubr.bf16.gmra.mrb[0].mxu0 %v2975
        %v4199 = vpop.f32.mrb[0].mxu0
        %v4200 = vadd.f32 0.0, %v4199
        %v4201 = vpop.f32.mrb[0].mxu0
        %v4202 = vpop.f32.mrb[0].mxu0
        %v4203 = vadd.f32 0.0, %v4202
        %v4204 = vpop.f32.mrb[0].mxu0
        %4205 = vmatprep.mubr.bf16.mxu0 %v3069
        %4206 = vmatmul.mubr.bf16.gmra.mrb[0].mxu0 %v2977
        %v4207 = vpop.f32.mrb[0].mxu0
        %v4208 = vadd.f32 0.0, %v4207
        %v4209 = vpop.f32.mrb[0].mxu0
        %v4210 = vpop.f32.mrb[0].mxu0
        %v4211 = vadd.f32 0.0, %v4210
        %v4212 = vpop.f32.mrb[0].mxu0
        %4213 = vmatprep.mubr.bf16.mxu0 %v3081
        %4214 = vmatmul.mubr.bf16.gmra.mrb[0].mxu0 %v2979
        %v4215 = vpop.f32.mrb[0].mxu0
        %v4216 = vadd.f32 0.0, %v4215
        %v4217 = vpop.f32.mrb[0].mxu0
        %v4218 = vpop.f32.mrb[0].mxu0
        %v4219 = vadd.f32 0.0, %v4218
        %v4220 = vpop.f32.mrb[0].mxu0
        %4221 = vmatprep.mubr.bf16.mxu0 %v3198
        %4222 = vmatmul.mubr.bf16.gmra.mrb[0].mxu0 %v2981
        %v4223 = vpop.f32.mrb[0].mxu0
        %v4224 = vadd.f32 0.0, %v4223
        %v4225 = vpop.f32.mrb[0].mxu0
        %v4226 = vpop.f32.mrb[0].mxu0
        %v4227 = vadd.f32 0.0, %v4226
        %v4228 = vpop.f32.mrb[0].mxu0
        %4229 = vmatprep.mubr.bf16.mxu0 %v3941
        %4230 = vmatmul.mubr.bf16.gmra.mrb[0].mxu0 %v2983
        %v4231 = vpop.f32.mrb[0].mxu0
        %v4232 = vadd.f32 0.0, %v4231
        %v4233 = vpop.f32.mrb[0].mxu0
        %v4234 = vpop.f32.mrb[0].mxu0
        %v4235 = vadd.f32 0.0, %v4234
        %v4236 = vpop.f32.mrb[0].mxu0
        %4237 = vdwg.mxu0
        %4238 = vmatprep.subr.bf16.mxu0 0
        %4239 = vmatpush1.bf16.msra.mxu0 %v4109
        %4240 = vmatprep.subr.bf16.mxu0 0
        %4241 = vmatpush1.bf16.msra.mxu0 %v4110
        %4242 = vmatprep.subr.bf16.mxu0 0
        %4243 = vmatpush1.bf16.msra.mxu0 %v4111
        %4244 = vmatprep.subr.bf16.mxu0 0
        %4245 = vmatpush1.bf16.msra.mxu0 %v4112
        %4246 = vmatprep.subr.bf16.mxu0 0
        %4247 = vmatpush1.bf16.msra.mxu0 %v4113
        %4248 = vmatprep.subr.bf16.mxu0 0
        %4249 = vmatpush1.bf16.msra.mxu0 %v4114
        %4250 = vmatprep.subr.bf16.mxu0 0
        %4251 = vmatpush1.bf16.msra.mxu0 %v4115
        %4252 = vmatprep.subr.bf16.mxu0 0
        %4253 = vmatpush1.bf16.msra.mxu0 %v4116
        %4254 = vmatprep.subr.bf16.mxu0 0
        %4255 = vmatpush1.bf16.msra.mxu0 0
        %4256 = vmatprep.subr.bf16.mxu0 0
        %4257 = vmatpush1.bf16.msra.mxu0 0
        %4258 = vmatprep.subr.bf16.mxu0 0
        %4259 = vmatpush1.bf16.msra.mxu0 0
        %4260 = vmatprep.subr.bf16.mxu0 0
        %4261 = vmatpush1.bf16.msra.mxu0 0
        %4262 = vmatprep.subr.bf16.mxu0 0
        %4263 = vmatpush1.bf16.msra.mxu0 0
        %4264 = vmatprep.subr.bf16.mxu0 0
        %4265 = vmatpush1.bf16.msra.mxu0 0
        %4266 = vmatprep.subr.bf16.mxu0 0
        %4267 = vmatpush1.bf16.msra.mxu0 0
        %4268 = vmatprep.subr.bf16.mxu0 0
        %4269 = vmatpush1.bf16.msra.mxu0 0
        %4270 = vmatprep.mubr.bf16.mxu0 0
        %4271 = vmatmul.mubr.bf16.gmra.mrb[0].mxu0 %v3115
        %v4272 = vpop.f32.mrb[0].mxu0
        %v4273 = vadd.f32 %v4176, %v4272
        %v4274 = vpop.f32.mrb[0].mxu0
        %v4275 = vpop.f32.mrb[0].mxu0
        %v4276 = vadd.f32 %v4179, %v4275
        %v4277 = vpop.f32.mrb[0].mxu0
        %4278 = vmatprep.mubr.bf16.mxu0 0
        %4279 = vmatmul.mubr.bf16.gmra.mrb[0].mxu0 %v3118
        %v4280 = vpop.f32.mrb[0].mxu0
        %v4281 = vadd.f32 %v4184, %v4280
        %v4282 = vpop.f32.mrb[0].mxu0
        %v4283 = vpop.f32.mrb[0].mxu0
        %v4284 = vadd.f32 %v4187, %v4283
        %v4285 = vpop.f32.mrb[0].mxu0
        %4286 = vmatprep.mubr.bf16.mxu0 0
        %4287 = vmatmul.mubr.bf16.gmra.mrb[0].mxu0 %v3121
        %v4288 = vpop.f32.mrb[0].mxu0
        %v4289 = vadd.f32 %v4192, %v4288
        %v4290 = vpop.f32.mrb[0].mxu0
        %v4291 = vpop.f32.mrb[0].mxu0
        %v4292 = vadd.f32 %v4195, %v4291
        %v4293 = vpop.f32.mrb[0].mxu0
        %4294 = vmatprep.mubr.bf16.mxu0 0
        %4295 = vmatmul.mubr.bf16.gmra.mrb[0].mxu0 %v3124
        %v4296 = vpop.f32.mrb[0].mxu0
        %v4297 = vadd.f32 %v4200, %v4296
        %v4298 = vpop.f32.mrb[0].mxu0
        %v4299 = vpop.f32.mrb[0].mxu0
        %v4300 = vadd.f32 %v4203, %v4299
        %v4301 = vpop.f32.mrb[0].mxu0
        %4302 = vmatprep.mubr.bf16.mxu0 0
        %4303 = vmatmul.mubr.bf16.gmra.mrb[0].mxu0 %v3127
        %v4304 = vpop.f32.mrb[0].mxu0
        %v4305 = vadd.f32 %v4208, %v4304
        %v4306 = vpop.f32.mrb[0].mxu0
        %v4307 = vpop.f32.mrb[0].mxu0
        %v4308 = vadd.f32 %v4211, %v4307
        %v4309 = vpop.f32.mrb[0].mxu0
        %4310 = vmatprep.mubr.bf16.mxu0 0
        %4311 = vmatmul.mubr.bf16.gmra.mrb[0].mxu0 %v3130
        %v4312 = vpop.f32.mrb[0].mxu0
        %v4313 = vadd.f32 %v4216, %v4312
        %v4314 = vpop.f32.mrb[0].mxu0
        %v4315 = vpop.f32.mrb[0].mxu0
        %v4316 = vadd.f32 %v4219, %v4315
        %v4317 = vpop.f32.mrb[0].mxu0
        %4318 = vmatprep.mubr.bf16.mxu0 0
        %4319 = vmatmul.mubr.bf16.gmra.mrb[0].mxu0 %v3204
        %v4320 = vpop.f32.mrb[0].mxu0
        %v4321 = vadd.f32 %v4224, %v4320
        %v4322 = vpop.f32.mrb[0].mxu0
        %v4323 = vpop.f32.mrb[0].mxu0
        %v4324 = vadd.f32 %v4227, %v4323
        %v4325 = vpop.f32.mrb[0].mxu0
        %4326 = vmatprep.mubr.bf16.mxu0 0
        %4327 = vmatmul.mubr.bf16.gmra.mrb[0].mxu0 %v3947
        %v4328 = vpop.f32.mrb[0].mxu0
        %v4329 = vadd.f32 %v4232, %v4328
        %v4330 = vpop.f32.mrb[0].mxu0
        %v4331 = vpop.f32.mrb[0].mxu0
        %v4332 = vadd.f32 %v4235, %v4331
        %v4333 = vpop.f32.mrb[0].mxu0
        %4334 = vdwg.mxu0
        %v4335 = vadd.f32 %v3868, %v4273
        %v4336 = vadd.f32 %v3871, %v4276
        %v4337 = vadd.f32 %v3876, %v4281
        %v4338 = vadd.f32 %v3879, %v4284
        %v4339 = vadd.f32 %v3884, %v4289
        %v4340 = vadd.f32 %v3887, %v4292
        %v4341 = vadd.f32 %v3892, %v4297
        %v4342 = vadd.f32 %v3895, %v4300
        %v4343 = vadd.f32 %v3900, %v4305
        %v4344 = vadd.f32 %v3903, %v4308
        %v4345 = vadd.f32 %v3908, %v4313
        %v4346 = vadd.f32 %v3911, %v4316
        %v4347 = vadd.f32 %v3916, %v4321
        %v4348 = vadd.f32 %v3919, %v4324
        %v4349 = vadd.f32 %v3924, %v4329
        %v4350 = vadd.f32 %v3927, %v4332
        %v4351 = vld [vmem:[%s5] sm:$0x1]
        %v4353 = vlaneseq
        %v4354 = vshrl.u32 %v4353, 7
        %v4355 = vsub.s32 0, %v4354
        %v4356 = vrot.slane %v4351, %v4355
        %v4358 = vmul.f32 %v4335, %v4356
        %v4359 = vmul.f32 %v4336, %v4356
        %v4360 = vmul.f32 %v4337, %v4356
        %v4361 = vmul.f32 %v4338, %v4356
        %v4362 = vmul.f32 %v4339, %v4356
        %v4363 = vmul.f32 %v4340, %v4356
        %v4364 = vmul.f32 %v4341, %v4356
        %v4365 = vmul.f32 %v4342, %v4356
        %v4366 = vmul.f32 %v4343, %v4356
        %v4367 = vmul.f32 %v4344, %v4356
        %v4368 = vmul.f32 %v4345, %v4356
        %v4369 = vmul.f32 %v4346, %v4356
        %v4370 = vmul.f32 %v4347, %v4356
        %v4371 = vmul.f32 %v4348, %v4356
        %v4372 = vmul.f32 %v4349, %v4356
        %v4373 = vmul.f32 %v4350, %v4356
        %v4374 = vld [vmem:[%s6] sm:$0x1]
        %v4376 = vlaneseq
        %v4377 = vshrl.u32 %v4376, 7
        %v4378 = vsub.s32 0, %v4377
        %v4379 = vrot.slane %v4374, %v4378
        %v4381 = vadd.f32 %v4358, %v4379
        %v4382 = vadd.f32 %v4359, %v4379
        %v4383 = vadd.f32 %v4360, %v4379
        %v4384 = vadd.f32 %v4361, %v4379
        %v4385 = vadd.f32 %v4362, %v4379
        %v4386 = vadd.f32 %v4363, %v4379
        %v4387 = vadd.f32 %v4364, %v4379
        %v4388 = vadd.f32 %v4365, %v4379
        %v4389 = vadd.f32 %v4366, %v4379
        %v4390 = vadd.f32 %v4367, %v4379
        %v4391 = vadd.f32 %v4368, %v4379
        %v4392 = vadd.f32 %v4369, %v4379
        %v4393 = vadd.f32 %v4370, %v4379
        %v4394 = vadd.f32 %v4371, %v4379
        %v4395 = vadd.f32 %v4372, %v4379
        %v4396 = vadd.f32 %v4373, %v4379
        %v4397 = vmax.f32 %v4381, 0.0
        %v4398 = vmax.f32 %v4382, 0.0
        %v4399 = vmax.f32 %v4383, 0.0
        %v4400 = vmax.f32 %v4384, 0.0
        %v4401 = vmax.f32 %v4385, 0.0
        %v4402 = vmax.f32 %v4386, 0.0
        %v4403 = vmax.f32 %v4387, 0.0
        %v4404 = vmax.f32 %v4388, 0.0
        %v4405 = vmax.f32 %v4389, 0.0
        %v4406 = vmax.f32 %v4390, 0.0
        %v4407 = vmax.f32 %v4391, 0.0
        %v4408 = vmax.f32 %v4392, 0.0
        %v4409 = vmax.f32 %v4393, 0.0
        %v4410 = vmax.f32 %v4394, 0.0
        %v4411 = vmax.f32 %v4395, 0.0
        %v4412 = vmax.f32 %v4396, 0.0
        %v4413 = vpack.c.bf16 %v4398, %v4397
        %v4414 = vpack.c.bf16 %v4400, %v4399
        %v4415 = vpack.c.bf16 %v4402, %v4401
        %v4416 = vpack.c.bf16 %v4404, %v4403
        %v4417 = vpack.c.bf16 %v4406, %v4405
        %v4418 = vpack.c.bf16 %v4408, %v4407
        %v4419 = vpack.c.bf16 %v4410, %v4409
        %v4420 = vpack.c.bf16 %v4412, %v4411
        %v4421 = vld [vmem:[%s7] sm:$0xf]
        %v4422 = vld [vmem:[%s7 + $0x4] sm:$0xf]
        %v4423 = vld [vmem:[%s7 + $0x8] sm:$0xf]
        %v4424 = vld [vmem:[%s7 + $0xc] sm:$0xf]
        %v4425 = vld [vmem:[%s7 + $0x10] sm:$0xf]
        %v4426 = vld [vmem:[%s7 + $0x14] sm:$0xf]
        %v4427 = vld [vmem:[%s7 + $0x18] sm:$0xf]
        %v4428 = vld [vmem:[%s7 + $0x1c] sm:$0xf]
        %v4429 = vld [vmem:[%s7 + $0x20] sm:$0xf]
        %v4430 = vld [vmem:[%s7 + $0x24] sm:$0xf]
        %v4431 = vld [vmem:[%s7 + $0x28] sm:$0xf]
        %v4432 = vld [vmem:[%s7 + $0x2c] sm:$0xf]
        %v4433 = vld [vmem:[%s7 + $0x30] sm:$0xf]
        %v4434 = vld [vmem:[%s7 + $0x34] sm:$0xf]
        %v4435 = vld [vmem:[%s7 + $0x38] sm:$0xf]
        %v4436 = vld [vmem:[%s7 + $0x3c] sm:$0xf]
        %v4453 = vunpack.c.l.b16 %v4421
        %v4454 = vunpack.c.l.b16 %v4422
        %v4455 = vunpack.c.l.b16 %v4423
        %v4456 = vunpack.c.l.b16 %v4424
        %v4457 = vunpack.c.l.b16 %v4425
        %v4458 = vunpack.c.l.b16 %v4426
        %v4459 = vunpack.c.l.b16 %v4427
        %v4460 = vunpack.c.l.b16 %v4428
        %v4461 = vunpack.c.l.b16 %v4429
        %v4462 = vunpack.c.l.b16 %v4430
        %v4463 = vunpack.c.l.b16 %v4431
        %v4464 = vunpack.c.l.b16 %v4432
        %v4465 = vunpack.c.l.b16 %v4433
        %v4466 = vunpack.c.l.b16 %v4434
        %v4467 = vunpack.c.l.b16 %v4435
        %v4468 = vunpack.c.l.b16 %v4436
        %v4469 = vpack.c.b16 %v4454, %v4453
        %v4470 = vpack.c.b16 %v4456, %v4455
        %v4471 = vpack.c.b16 %v4458, %v4457
        %v4472 = vpack.c.b16 %v4460, %v4459
        %v4473 = vpack.c.b16 %v4462, %v4461
        %v4474 = vpack.c.b16 %v4464, %v4463
        %v4475 = vpack.c.b16 %v4466, %v4465
        %v4476 = vpack.c.b16 %v4468, %v4467
        %4485 = vmatprep.subr.bf16.mxu0 0
        %4486 = vmatpush1.bf16.msra.mxu0 %v4469
        %4487 = vmatprep.subr.bf16.mxu0 0
        %4488 = vmatpush1.bf16.msra.mxu0 %v4470
        %4489 = vmatprep.subr.bf16.mxu0 0
        %4490 = vmatpush1.bf16.msra.mxu0 %v4471
        %4491 = vmatprep.subr.bf16.mxu0 0
        %4492 = vmatpush1.bf16.msra.mxu0 %v4472
        %4493 = vmatprep.subr.bf16.mxu0 0
        %4494 = vmatpush1.bf16.msra.mxu0 %v4473
        %4495 = vmatprep.subr.bf16.mxu0 0
        %4496 = vmatpush1.bf16.msra.mxu0 %v4474
        %4497 = vmatprep.subr.bf16.mxu0 0
        %4498 = vmatpush1.bf16.msra.mxu0 %v4475
        %4499 = vmatprep.subr.bf16.mxu0 0
        %4500 = vmatpush1.bf16.msra.mxu0 %v4476
        %4501 = vmatprep.subr.bf16.mxu0 0
        %4502 = vmatpush1.bf16.msra.mxu0 0
        %4503 = vmatprep.subr.bf16.mxu0 0
        %4504 = vmatpush1.bf16.msra.mxu0 0
        %4505 = vmatprep.subr.bf16.mxu0 0
        %4506 = vmatpush1.bf16.msra.mxu0 0
        %4507 = vmatprep.subr.bf16.mxu0 0
        %4508 = vmatpush1.bf16.msra.mxu0 0
        %4509 = vmatprep.subr.bf16.mxu0 0
        %4510 = vmatpush1.bf16.msra.mxu0 0
        %4511 = vmatprep.subr.bf16.mxu0 0
        %4512 = vmatpush1.bf16.msra.mxu0 0
        %4513 = vmatprep.subr.bf16.mxu0 0
        %4514 = vmatpush1.bf16.msra.mxu0 0
        %4515 = vmatprep.subr.bf16.mxu0 0
        %4516 = vmatpush1.bf16.msra.mxu0 0
        %4517 = vmatprep.mubr.bf16.mxu0 0
        %4518 = vmatmul.mubr.bf16.gmra.mrb[0].mxu0 %v4413
        %v4519 = vpop.f32.mrb[0].mxu0
        %v4520 = vadd.f32 0.0, %v4519
        %v4521 = vpop.f32.mrb[0].mxu0
        %v4522 = vpop.f32.mrb[0].mxu0
        %v4523 = vadd.f32 0.0, %v4522
        %v4524 = vpop.f32.mrb[0].mxu0
        %4525 = vmatprep.mubr.bf16.mxu0 0
        %4526 = vmatmul.mubr.bf16.gmra.mrb[0].mxu0 %v4414
        %v4527 = vpop.f32.mrb[0].mxu0
        %v4528 = vadd.f32 0.0, %v4527
        %v4529 = vpop.f32.mrb[0].mxu0
        %v4530 = vpop.f32.mrb[0].mxu0
        %v4531 = vadd.f32 0.0, %v4530
        %v4532 = vpop.f32.mrb[0].mxu0
        %4533 = vmatprep.mubr.bf16.mxu0 0
        %4534 = vmatmul.mubr.bf16.gmra.mrb[0].mxu0 %v4415
        %v4535 = vpop.f32.mrb[0].mxu0
        %v4536 = vadd.f32 0.0, %v4535
        %v4537 = vpop.f32.mrb[0].mxu0
        %v4538 = vpop.f32.mrb[0].mxu0
        %v4539 = vadd.f32 0.0, %v4538
        %v4540 = vpop.f32.mrb[0].mxu0
        %4541 = vmatprep.mubr.bf16.mxu0 0
        %4542 = vmatmul.mubr.bf16.gmra.mrb[0].mxu0 %v4416
        %v4543 = vpop.f32.mrb[0].mxu0
        %v4544 = vadd.f32 0.0, %v4543
        %v4545 = vpop.f32.mrb[0].mxu0
        %v4546 = vpop.f32.mrb[0].mxu0
        %v4547 = vadd.f32 0.0, %v4546
        %v4548 = vpop.f32.mrb[0].mxu0
        %4549 = vmatprep.mubr.bf16.mxu0 0
        %4550 = vmatmul.mubr.bf16.gmra.mrb[0].mxu0 %v4417
        %v4551 = vpop.f32.mrb[0].mxu0
        %v4552 = vadd.f32 0.0, %v4551
        %v4553 = vpop.f32.mrb[0].mxu0
        %v4554 = vpop.f32.mrb[0].mxu0
        %v4555 = vadd.f32 0.0, %v4554
        %v4556 = vpop.f32.mrb[0].mxu0
        %4557 = vmatprep.mubr.bf16.mxu0 0
        %4558 = vmatmul.mubr.bf16.gmra.mrb[0].mxu0 %v4418
        %v4559 = vpop.f32.mrb[0].mxu0
        %v4560 = vadd.f32 0.0, %v4559
        %v4561 = vpop.f32.mrb[0].mxu0
        %v4562 = vpop.f32.mrb[0].mxu0
        %v4563 = vadd.f32 0.0, %v4562
        %v4564 = vpop.f32.mrb[0].mxu0
        %4565 = vmatprep.mubr.bf16.mxu0 0
        %4566 = vmatmul.mubr.bf16.gmra.mrb[0].mxu0 %v4419
        %v4567 = vpop.f32.mrb[0].mxu0
        %v4568 = vadd.f32 0.0, %v4567
        %v4569 = vpop.f32.mrb[0].mxu0
        %v4570 = vpop.f32.mrb[0].mxu0
        %v4571 = vadd.f32 0.0, %v4570
        %v4572 = vpop.f32.mrb[0].mxu0
        %4573 = vmatprep.mubr.bf16.mxu0 0
        %4574 = vmatmul.mubr.bf16.gmra.mrb[0].mxu0 %v4420
        %v4575 = vpop.f32.mrb[0].mxu0
        %v4576 = vadd.f32 0.0, %v4575
        %v4577 = vpop.f32.mrb[0].mxu0
        %v4578 = vpop.f32.mrb[0].mxu0
        %v4579 = vadd.f32 0.0, %v4578
        %v4580 = vpop.f32.mrb[0].mxu0
        %4581 = vdwg.mxu0
        %v4582 = vld [vmem:[%s8] sm:$0x1]
        %v4584 = vlaneseq
        %v4585 = vshrl.u32 %v4584, 7
        %v4586 = vsub.s32 0, %v4585
        %v4587 = vrot.slane %v4582, %v4586
        %v4589 = vmul.f32 %v4520, %v4587
        %v4590 = vmul.f32 %v4523, %v4587
        %v4591 = vmul.f32 %v4528, %v4587
        %v4592 = vmul.f32 %v4531, %v4587
        %v4593 = vmul.f32 %v4536, %v4587
        %v4594 = vmul.f32 %v4539, %v4587
        %v4595 = vmul.f32 %v4544, %v4587
        %v4596 = vmul.f32 %v4547, %v4587
        %v4597 = vmul.f32 %v4552, %v4587
        %v4598 = vmul.f32 %v4555, %v4587
        %v4599 = vmul.f32 %v4560, %v4587
        %v4600 = vmul.f32 %v4563, %v4587
        %v4601 = vmul.f32 %v4568, %v4587
        %v4602 = vmul.f32 %v4571, %v4587
        %v4603 = vmul.f32 %v4576, %v4587
        %v4604 = vmul.f32 %v4579, %v4587
        %v4605 = vld [vmem:[%s9] sm:$0x1]
        %v4607 = vlaneseq
        %v4608 = vshrl.u32 %v4607, 7
        %v4609 = vsub.s32 0, %v4608
        %v4610 = vrot.slane %v4605, %v4609
        %v4612 = vadd.f32 %v4589, %v4610
        %v4613 = vadd.f32 %v4590, %v4610
        %v4614 = vadd.f32 %v4591, %v4610
        %v4615 = vadd.f32 %v4592, %v4610
        %v4616 = vadd.f32 %v4593, %v4610
        %v4617 = vadd.f32 %v4594, %v4610
        %v4618 = vadd.f32 %v4595, %v4610
        %v4619 = vadd.f32 %v4596, %v4610
        %v4620 = vadd.f32 %v4597, %v4610
        %v4621 = vadd.f32 %v4598, %v4610
        %v4622 = vadd.f32 %v4599, %v4610
        %v4623 = vadd.f32 %v4600, %v4610
        %v4624 = vadd.f32 %v4601, %v4610
        %v4625 = vadd.f32 %v4602, %v4610
        %v4626 = vadd.f32 %v4603, %v4610
        %v4627 = vadd.f32 %v4604, %v4610
        %vm4628 = vsmask.f32 3328
        %vm4629 = vsmask.f32 7440
        %vm4630 = vmor %vm4628, %vm4629
        %v4632 = vshrl.u32 %v462, 16
        %v4634 = vrot.slane %v4632, 4
        %v4635 = vshll.u32 %v462, 16
        %v4637 = vrot.slane %v4635, 5
        %v4638 = vor.u32 %v4634, %v4637
        %v4639 = vrot.slane %v4638, 4
        %v4641 = vshll.u32 %v463, 16
        %v4643 = vrot.slane %v4641, 5
        %v4644 = vsel %vm4630, %v4639, %v4643
        %v4645 = vshrl.u32 %v463, 16
        %v4647 = vrot.slane %v4645, 4
        %v4648 = vor.u32 %v4647, %v4643
        %v4649 = vrot.slane %v4648, 4
        %v4651 = vshll.u32 %v464, 16
        %v4653 = vrot.slane %v4651, 5
        %v4654 = vsel %vm4630, %v4649, %v4653
        %v4656 = vshrl.u32 %v465, 16
        %v4658 = vrot.slane %v4656, 4
        %v4659 = vshll.u32 %v465, 16
        %v4661 = vrot.slane %v4659, 5
        %v4662 = vor.u32 %v4658, %v4661
        %v4663 = vrot.slane %v4662, 4
        %v4665 = vshll.u32 %v466, 16
        %v4667 = vrot.slane %v4665, 5
        %v4668 = vsel %vm4630, %v4663, %v4667
        %v4669 = vshrl.u32 %v466, 16
        %v4671 = vrot.slane %v4669, 4
        %v4672 = vor.u32 %v4671, %v4667
        %v4673 = vrot.slane %v4672, 4
        %v4675 = vshll.u32 %v467, 16
        %v4677 = vrot.slane %v4675, 5
        %v4678 = vsel %vm4630, %v4673, %v4677
        %v4680 = vshrl.u32 %v468, 16
        %v4682 = vrot.slane %v4680, 4
        %v4683 = vshll.u32 %v468, 16
        %v4685 = vrot.slane %v4683, 5
        %v4686 = vor.u32 %v4682, %v4685
        %v4687 = vrot.slane %v4686, 4
        %v4689 = vshll.u32 %v469, 16
        %v4691 = vrot.slane %v4689, 5
        %v4692 = vsel %vm4630, %v4687, %v4691
        %v4693 = vshrl.u32 %v469, 16
        %v4695 = vrot.slane %v4693, 4
        %v4696 = vor.u32 %v4695, %v4691
        %v4697 = vrot.slane %v4696, 4
        %v4699 = vshll.u32 %v470, 16
        %v4701 = vrot.slane %v4699, 5
        %v4702 = vsel %vm4630, %v4697, %v4701
        %v4704 = vshrl.u32 %v471, 16
        %v4706 = vrot.slane %v4704, 4
        %v4707 = vshll.u32 %v471, 16
        %v4709 = vrot.slane %v4707, 5
        %v4710 = vor.u32 %v4706, %v4709
        %v4711 = vrot.slane %v4710, 4
        %v4713 = vshll.u32 %v472, 16
        %v4715 = vrot.slane %v4713, 5
        %v4716 = vsel %vm4630, %v4711, %v4715
        %v4717 = vshrl.u32 %v472, 16
        %v4719 = vrot.slane %v4717, 4
        %v4720 = vor.u32 %v4719, %v4715
        %v4721 = vrot.slane %v4720, 4
        %v4723 = vshll.u32 %v473, 16
        %v4725 = vrot.slane %v4723, 5
        %v4726 = vsel %vm4630, %v4721, %v4725
        %v4728 = vshrl.u32 %v474, 16
        %v4730 = vrot.slane %v4728, 4
        %v4731 = vshll.u32 %v474, 16
        %v4733 = vrot.slane %v4731, 5
        %v4734 = vor.u32 %v4730, %v4733
        %v4735 = vrot.slane %v4734, 4
        %v4737 = vshll.u32 %v475, 16
        %v4739 = vrot.slane %v4737, 5
        %v4740 = vsel %vm4630, %v4735, %v4739
        %v4741 = vshrl.u32 %v475, 16
        %v4743 = vrot.slane %v4741, 4
        %v4744 = vor.u32 %v4743, %v4739
        %v4745 = vrot.slane %v4744, 4
        %v4747 = vshll.u32 %v476, 16
        %v4749 = vrot.slane %v4747, 5
        %v4750 = vsel %vm4630, %v4745, %v4749
        %v4752 = vshrl.u32 %v477, 16
        %v4754 = vrot.slane %v4752, 4
        %v4755 = vshll.u32 %v477, 16
        %v4757 = vrot.slane %v4755, 5
        %v4758 = vor.u32 %v4754, %v4757
        %v4759 = vrot.slane %v4758, 4
        %v4761 = vshll.u32 %v478, 16
        %v4763 = vrot.slane %v4761, 5
        %v4764 = vsel %vm4630, %v4759, %v4763
        %v4765 = vshrl.u32 %v478, 16
        %v4767 = vrot.slane %v4765, 4
        %v4768 = vor.u32 %v4767, %v4763
        %v4769 = vrot.slane %v4768, 4
        %v4771 = vshll.u32 %v479, 16
        %v4773 = vrot.slane %v4771, 5
        %v4774 = vsel %vm4630, %v4769, %v4773
        %v4776 = vshrl.u32 %v480, 16
        %v4778 = vrot.slane %v4776, 4
        %v4779 = vshll.u32 %v480, 16
        %v4781 = vrot.slane %v4779, 5
        %v4782 = vor.u32 %v4778, %v4781
        %v4783 = vrot.slane %v4782, 4
        %v4785 = vshll.u32 %v481, 16
        %v4787 = vrot.slane %v4785, 5
        %v4788 = vsel %vm4630, %v4783, %v4787
        %v4789 = vshrl.u32 %v481, 16
        %v4791 = vrot.slane %v4789, 4
        %v4792 = vor.u32 %v4791, %v4787
        %v4793 = vrot.slane %v4792, 4
        %v4795 = vshll.u32 %v482, 16
        %v4797 = vrot.slane %v4795, 5
        %v4798 = vsel %vm4630, %v4793, %v4797
        %v4800 = vshrl.u32 %v483, 16
        %v4802 = vrot.slane %v4800, 4
        %v4803 = vshll.u32 %v483, 16
        %v4805 = vrot.slane %v4803, 5
        %v4806 = vor.u32 %v4802, %v4805
        %v4807 = vrot.slane %v4806, 4
        %v4809 = vshll.u32 %v484, 16
        %v4811 = vrot.slane %v4809, 5
        %v4812 = vsel %vm4630, %v4807, %v4811
        %v4813 = vshrl.u32 %v484, 16
        %v4815 = vrot.slane %v4813, 4
        %v4816 = vor.u32 %v4815, %v4811
        %v4817 = vrot.slane %v4816, 4
        %v4819 = vshll.u32 %v485, 16
        %v4821 = vrot.slane %v4819, 5
        %v4822 = vsel %vm4630, %v4817, %v4821
        %v4823 = vld [vmem:[%s10] sm:$0xf]
        %v4824 = vld [vmem:[%s10 + $0x4] sm:$0xf]
        %v4825 = vld [vmem:[%s10 + $0x8] sm:$0xf]
        %v4826 = vld [vmem:[%s10 + $0xc] sm:$0xf]
        %v4827 = vld [vmem:[%s10 + $0x10] sm:$0xf]
        %v4828 = vld [vmem:[%s10 + $0x14] sm:$0xf]
        %v4829 = vld [vmem:[%s10 + $0x18] sm:$0xf]
        %v4830 = vld [vmem:[%s10 + $0x1c] sm:$0xf]
        %v4831 = vld [vmem:[%s10 + $0x20] sm:$0xf]
        %v4832 = vld [vmem:[%s10 + $0x24] sm:$0xf]
        %v4833 = vld [vmem:[%s10 + $0x28] sm:$0xf]
        %v4834 = vld [vmem:[%s10 + $0x2c] sm:$0xf]
        %v4835 = vld [vmem:[%s10 + $0x30] sm:$0xf]
        %v4836 = vld [vmem:[%s10 + $0x34] sm:$0xf]
        %v4837 = vld [vmem:[%s10 + $0x38] sm:$0xf]
        %v4838 = vld [vmem:[%s10 + $0x3c] sm:$0xf]
        %v4839 = vunpack.c.l.b16 %v4644
        %v4840 = vunpack.c.l.b16 %v4654
        %v4841 = vunpack.c.l.b16 %v4668
        %v4842 = vunpack.c.l.b16 %v4678
        %v4843 = vunpack.c.l.b16 %v4692
        %v4844 = vunpack.c.l.b16 %v4702
        %v4845 = vunpack.c.l.b16 %v4716
        %v4846 = vunpack.c.l.b16 %v4726
        %v4847 = vunpack.c.l.b16 %v4740
        %v4848 = vunpack.c.l.b16 %v4750
        %v4849 = vunpack.c.l.b16 %v4764
        %v4850 = vunpack.c.l.b16 %v4774
        %v4851 = vunpack.c.l.b16 %v4788
        %v4852 = vunpack.c.l.b16 %v4798
        %v4853 = vunpack.c.l.b16 %v4812
        %v4854 = vunpack.c.l.b16 %v4822
        %v4855 = vpack.c.b16 %v4840, %v4839
        %v4856 = vpack.c.b16 %v4842, %v4841
        %v4857 = vpack.c.b16 %v4844, %v4843
        %v4858 = vpack.c.b16 %v4846, %v4845
        %v4859 = vpack.c.b16 %v4848, %v4847
        %v4860 = vpack.c.b16 %v4850, %v4849
        %v4861 = vpack.c.b16 %v4852, %v4851
        %v4862 = vpack.c.b16 %v4854, %v4853
        %v4887 = vunpack.c.l.b16 %v4823
        %v4888 = vunpack.c.l.b16 %v4824
        %v4889 = vunpack.c.l.b16 %v4825
        %v4890 = vunpack.c.l.b16 %v4826
        %v4891 = vunpack.c.l.b16 %v4827
        %v4892 = vunpack.c.l.b16 %v4828
        %v4893 = vunpack.c.l.b16 %v4829
        %v4894 = vunpack.c.l.b16 %v4830
        %v4895 = vunpack.c.l.b16 %v4831
        %v4896 = vunpack.c.l.b16 %v4832
        %v4897 = vunpack.c.l.b16 %v4833
        %v4898 = vunpack.c.l.b16 %v4834
        %v4899 = vunpack.c.l.b16 %v4835
        %v4900 = vunpack.c.l.b16 %v4836
        %v4901 = vunpack.c.l.b16 %v4837
        %v4902 = vunpack.c.l.b16 %v4838
        %v4903 = vpack.c.b16 %v4888, %v4887
        %v4904 = vpack.c.b16 %v4890, %v4889
        %v4905 = vpack.c.b16 %v4892, %v4891
        %v4906 = vpack.c.b16 %v4894, %v4893
        %v4907 = vpack.c.b16 %v4896, %v4895
        %v4908 = vpack.c.b16 %v4898, %v4897
        %v4909 = vpack.c.b16 %v4900, %v4899
        %v4910 = vpack.c.b16 %v4902, %v4901
        %4919 = vmatprep.subr.bf16.mxu0 0
        %4920 = vmatpush1.bf16.msra.mxu0 %v4903
        %4921 = vmatprep.subr.bf16.mxu0 0
        %4922 = vmatpush1.bf16.msra.mxu0 %v4904
        %4923 = vmatprep.subr.bf16.mxu0 0
        %4924 = vmatpush1.bf16.msra.mxu0 %v4905
        %4925 = vmatprep.subr.bf16.mxu0 0
        %4926 = vmatpush1.bf16.msra.mxu0 %v4906
        %4927 = vmatprep.subr.bf16.mxu0 0
        %4928 = vmatpush1.bf16.msra.mxu0 %v4907
        %4929 = vmatprep.subr.bf16.mxu0 0
        %4930 = vmatpush1.bf16.msra.mxu0 %v4908
        %4931 = vmatprep.subr.bf16.mxu0 0
        %4932 = vmatpush1.bf16.msra.mxu0 %v4909
        %4933 = vmatprep.subr.bf16.mxu0 0
        %4934 = vmatpush1.bf16.msra.mxu0 %v4910
        %4935 = vmatprep.subr.bf16.mxu0 0
        %4936 = vmatpush1.bf16.msra.mxu0 0
        %4937 = vmatprep.subr.bf16.mxu0 0
        %4938 = vmatpush1.bf16.msra.mxu0 0
        %4939 = vmatprep.subr.bf16.mxu0 0
        %4940 = vmatpush1.bf16.msra.mxu0 0
        %4941 = vmatprep.subr.bf16.mxu0 0
        %4942 = vmatpush1.bf16.msra.mxu0 0
        %4943 = vmatprep.subr.bf16.mxu0 0
        %4944 = vmatpush1.bf16.msra.mxu0 0
        %4945 = vmatprep.subr.bf16.mxu0 0
        %4946 = vmatpush1.bf16.msra.mxu0 0
        %4947 = vmatprep.subr.bf16.mxu0 0
        %4948 = vmatpush1.bf16.msra.mxu0 0
        %4949 = vmatprep.subr.bf16.mxu0 0
        %4950 = vmatpush1.bf16.msra.mxu0 0
        %4951 = vmatprep.mubr.bf16.mxu0 0
        %4952 = vmatmul.mubr.bf16.gmra.mrb[0].mxu0 %v4855
        %v4953 = vpop.f32.mrb[0].mxu0
        %v4954 = vadd.f32 0.0, %v4953
        %v4955 = vpop.f32.mrb[0].mxu0
        %v4956 = vpop.f32.mrb[0].mxu0
        %v4957 = vadd.f32 0.0, %v4956
        %v4958 = vpop.f32.mrb[0].mxu0
        %4959 = vmatprep.mubr.bf16.mxu0 0
        %4960 = vmatmul.mubr.bf16.gmra.mrb[0].mxu0 %v4856
        %v4961 = vpop.f32.mrb[0].mxu0
        %v4962 = vadd.f32 0.0, %v4961
        %v4963 = vpop.f32.mrb[0].mxu0
        %v4964 = vpop.f32.mrb[0].mxu0
        %v4965 = vadd.f32 0.0, %v4964
        %v4966 = vpop.f32.mrb[0].mxu0
        %4967 = vmatprep.mubr.bf16.mxu0 0
        %4968 = vmatmul.mubr.bf16.gmra.mrb[0].mxu0 %v4857
        %v4969 = vpop.f32.mrb[0].mxu0
        %v4970 = vadd.f32 0.0, %v4969
        %v4971 = vpop.f32.mrb[0].mxu0
        %v4972 = vpop.f32.mrb[0].mxu0
        %v4973 = vadd.f32 0.0, %v4972
        %v4974 = vpop.f32.mrb[0].mxu0
        %4975 = vmatprep.mubr.bf16.mxu0 0
        %4976 = vmatmul.mubr.bf16.gmra.mrb[0].mxu0 %v4858
        %v4977 = vpop.f32.mrb[0].mxu0
        %v4978 = vadd.f32 0.0, %v4977
        %v4979 = vpop.f32.mrb[0].mxu0
        %v4980 = vpop.f32.mrb[0].mxu0
        %v4981 = vadd.f32 0.0, %v4980
        %v4982 = vpop.f32.mrb[0].mxu0
        %4983 = vmatprep.mubr.bf16.mxu0 0
        %4984 = vmatmul.mubr.bf16.gmra.mrb[0].mxu0 %v4859
        %v4985 = vpop.f32.mrb[0].mxu0
        %v4986 = vadd.f32 0.0, %v4985
        %v4987 = vpop.f32.mrb[0].mxu0
        %v4988 = vpop.f32.mrb[0].mxu0
        %v4989 = vadd.f32 0.0, %v4988
        %v4990 = vpop.f32.mrb[0].mxu0
        %4991 = vmatprep.mubr.bf16.mxu0 0
        %4992 = vmatmul.mubr.bf16.gmra.mrb[0].mxu0 %v4860
        %v4993 = vpop.f32.mrb[0].mxu0
        %v4994 = vadd.f32 0.0, %v4993
        %v4995 = vpop.f32.mrb[0].mxu0
        %v4996 = vpop.f32.mrb[0].mxu0
        %v4997 = vadd.f32 0.0, %v4996
        %v4998 = vpop.f32.mrb[0].mxu0
        %4999 = vmatprep.mubr.bf16.mxu0 0
        %5000 = vmatmul.mubr.bf16.gmra.mrb[0].mxu0 %v4861
        %v5001 = vpop.f32.mrb[0].mxu0
        %v5002 = vadd.f32 0.0, %v5001
        %v5003 = vpop.f32.mrb[0].mxu0
        %v5004 = vpop.f32.mrb[0].mxu0
        %v5005 = vadd.f32 0.0, %v5004
        %v5006 = vpop.f32.mrb[0].mxu0
        %5007 = vmatprep.mubr.bf16.mxu0 0
        %5008 = vmatmul.mubr.bf16.gmra.mrb[0].mxu0 %v4862
        %v5009 = vpop.f32.mrb[0].mxu0
        %v5010 = vadd.f32 0.0, %v5009
        %v5011 = vpop.f32.mrb[0].mxu0
        %v5012 = vpop.f32.mrb[0].mxu0
        %v5013 = vadd.f32 0.0, %v5012
        %v5014 = vpop.f32.mrb[0].mxu0
        %5015 = vdwg.mxu0
        %v5016 = vld [vmem:[%s11] sm:$0x1]
        %v5018 = vlaneseq
        %v5019 = vshrl.u32 %v5018, 7
        %v5020 = vsub.s32 0, %v5019
        %v5021 = vrot.slane %v5016, %v5020
        %v5023 = vmul.f32 %v4954, %v5021
        %v5024 = vmul.f32 %v4957, %v5021
        %v5025 = vmul.f32 %v4962, %v5021
        %v5026 = vmul.f32 %v4965, %v5021
        %v5027 = vmul.f32 %v4970, %v5021
        %v5028 = vmul.f32 %v4973, %v5021
        %v5029 = vmul.f32 %v4978, %v5021
        %v5030 = vmul.f32 %v4981, %v5021
        %v5031 = vmul.f32 %v4986, %v5021
        %v5032 = vmul.f32 %v4989, %v5021
        %v5033 = vmul.f32 %v4994, %v5021
        %v5034 = vmul.f32 %v4997, %v5021
        %v5035 = vmul.f32 %v5002, %v5021
        %v5036 = vmul.f32 %v5005, %v5021
        %v5037 = vmul.f32 %v5010, %v5021
        %v5038 = vmul.f32 %v5013, %v5021
        %v5039 = vld [vmem:[%s12] sm:$0x1]
        %v5041 = vlaneseq
        %v5042 = vshrl.u32 %v5041, 7
        %v5043 = vsub.s32 0, %v5042
        %v5044 = vrot.slane %v5039, %v5043
        %v5046 = vadd.f32 %v5023, %v5044
        %v5047 = vadd.f32 %v5024, %v5044
        %v5048 = vadd.f32 %v5025, %v5044
        %v5049 = vadd.f32 %v5026, %v5044
        %v5050 = vadd.f32 %v5027, %v5044
        %v5051 = vadd.f32 %v5028, %v5044
        %v5052 = vadd.f32 %v5029, %v5044
        %v5053 = vadd.f32 %v5030, %v5044
        %v5054 = vadd.f32 %v5031, %v5044
        %v5055 = vadd.f32 %v5032, %v5044
        %v5056 = vadd.f32 %v5033, %v5044
        %v5057 = vadd.f32 %v5034, %v5044
        %v5058 = vadd.f32 %v5035, %v5044
        %v5059 = vadd.f32 %v5036, %v5044
        %v5060 = vadd.f32 %v5037, %v5044
        %v5061 = vadd.f32 %v5038, %v5044
        %v5062 = vadd.f32 %v5046, %v4612
        %v5063 = vadd.f32 %v5047, %v4613
        %v5064 = vadd.f32 %v5048, %v4614
        %v5065 = vadd.f32 %v5049, %v4615
        %v5066 = vadd.f32 %v5050, %v4616
        %v5067 = vadd.f32 %v5051, %v4617
        %v5068 = vadd.f32 %v5052, %v4618
        %v5069 = vadd.f32 %v5053, %v4619
        %v5070 = vadd.f32 %v5054, %v4620
        %v5071 = vadd.f32 %v5055, %v4621
        %v5072 = vadd.f32 %v5056, %v4622
        %v5073 = vadd.f32 %v5057, %v4623
        %v5074 = vadd.f32 %v5058, %v4624
        %v5075 = vadd.f32 %v5059, %v4625
        %v5076 = vadd.f32 %v5060, %v4626
        %v5077 = vadd.f32 %v5061, %v4627
        %v5078 = vmax.f32 %v5062, 0.0
        %v5079 = vmax.f32 %v5063, 0.0
        %v5080 = vmax.f32 %v5064, 0.0
        %v5081 = vmax.f32 %v5065, 0.0
        %v5082 = vmax.f32 %v5066, 0.0
        %v5083 = vmax.f32 %v5067, 0.0
        %v5084 = vmax.f32 %v5068, 0.0
        %v5085 = vmax.f32 %v5069, 0.0
        %v5086 = vmax.f32 %v5070, 0.0
        %v5087 = vmax.f32 %v5071, 0.0
        %v5088 = vmax.f32 %v5072, 0.0
        %v5089 = vmax.f32 %v5073, 0.0
        %v5090 = vmax.f32 %v5074, 0.0
        %v5091 = vmax.f32 %v5075, 0.0
        %v5092 = vmax.f32 %v5076, 0.0
        %v5093 = vmax.f32 %v5077, 0.0
        %5094 = vst [vmem:[%s447] sm:$0xff] %v5078
        %5095 = vst [vmem:[%s447 + $0x8] sm:$0xff] %v5079
        %5096 = vst [vmem:[%s447 + $0x10] sm:$0xff] %v5080
        %5097 = vst [vmem:[%s447 + $0x18] sm:$0xff] %v5081
        %5098 = vst [vmem:[%s447 + $0x20] sm:$0xff] %v5082
        %5099 = vst [vmem:[%s447 + $0x28] sm:$0xff] %v5083
        %5100 = vst [vmem:[%s447 + $0x30] sm:$0xff] %v5084
        %5101 = vst [vmem:[%s447 + $0x38] sm:$0xff] %v5085
        %5102 = vst [vmem:[%s447 + $0x40] sm:$0xff] %v5086
        %5103 = vst [vmem:[%s447 + $0x48] sm:$0xff] %v5087
        %5104 = vst [vmem:[%s447 + $0x50] sm:$0xff] %v5088
        %5105 = vst [vmem:[%s447 + $0x58] sm:$0xff] %v5089
        %5106 = vst [vmem:[%s447 + $0x60] sm:$0xff] %v5090
        %5107 = vst [vmem:[%s447 + $0x68] sm:$0xff] %v5091
        %5108 = vst [vmem:[%s447 + $0x70] sm:$0xff] %v5092
        %5109 = vst [vmem:[%s447 + $0x78] sm:$0xff] %v5093
        %s5110 = sand.u32 %s327, 1
        %s5111 = scalar_lea.sflag [#allocation3], %s5110
        %s5112 = sand.u32 %s327, 1
        %s5113 = smul.addr %s5112, 128
        %s5114 = scalar_lea.vmem [#allocation2], %s5113
        // Predicated region
        $region73: #{tpu_custom_call.1} parent=71 // pred_check
          %p5115 = pneg %p337
        $region74: #{tpu_custom_call.1} parent=71 // pred_check_branch
          %5117 = sbr.rel (%p5115) target = $region76
        $region75: #{tpu_custom_call.1} parent=71 // pred_region
          %s5118 = smul.u32 8, %s32
          %s5120 = ssub.s32 2048, 2048
          %5121 = vsyncadd %s5111, %s5120
          %s5122 = smul.addr %s5118, 2
          %s5123 = smul.addr %s31, 32
          %s5124 = sadd.s32 %s5122, %s5123
          %s5125 = smul.addr %s5124, 128
          %s5126 = scalar_lea.hbm %s13, %s5125
          %s5127 = sshll.u32 %s5114, 4
          %s5128 = int_to_ptr.vmem [resolvable:$true] %s5127
          %5133 = dma.vmem_to_hbm [thread:$0]  %s5128, 2048, %s5126, %s5111, 128, 128, 8
        $region76: #{tpu_custom_call.1} parent=71 // pred_fallthru
          _
      $region72: #{tpu_custom_call.1} parent=5 // pred_fallthru
        _
      %p5134 = scmp.le.s32.totalorder 2, %s22
      // Predicated region
      $region77: #{tpu_custom_call.1} parent=5 // pred_check
        %p5135 = pneg %p5134
      $region78: #{tpu_custom_call.1} parent=5 // pred_check_branch
        %5137 = sbr.rel (%p5135) target = $region80
      $region79: #{tpu_custom_call.1} parent=5 // pred_region
        %s5138 = ssub.s32 %s22, 2
        // Predicated region
        $region81: #{tpu_custom_call.1} parent=79 // pred_check
          %p5139 = pneg %p343
        $region82: #{tpu_custom_call.1} parent=79 // pred_check_branch
          %5141 = sbr.rel (%p5139) target = $region84
        $region83: #{tpu_custom_call.1} parent=79 // pred_region
          %s5142 = sand.u32 %s328, 1
          %s5143 = scalar_lea.sflag [#allocation3], %s5142
          %s5144 = sand.u32 %s328, 1
          %s5145 = smul.addr %s5144, 128
          %s5146 = scalar_lea.vmem [#allocation2], %s5145
          %5147 = dma.done %s5143, 2048
        $region84: #{tpu_custom_call.1} parent=79 // pred_fallthru
          _
      $region80: #{tpu_custom_call.1} parent=5 // pred_fallthru
        _
    $region6: #{tpu_custom_call.1} parent=1 // loop_footer
      %s26 = sadd.s32 1, %s22
    $region7: #{tpu_custom_call.1} parent=1 // loop_footer_branch
      %21 = sbr.rel target = $region3
    $region8: #{tpu_custom_call.1} parent=1 // loop_exit
      _
    %5148 = vsyncpa [#allocation3], 1
    %s5149 = scalar_lea.sflag [#allocation3], 1
    %5150 = vsyncpa %s5149, 1

</llo_original>
